<compile_context>
chip_gen: v7x
topology: tpu7x:2x2x1
jax: 0.10.0
libtpu: 0.0.40
codegen_flags: <defaults>
</compile_context>

<pallas_src>
import functools

import jax
import jax.numpy as jnp
from jax import lax
from jax.experimental import pallas as pl
from jax.experimental.pallas import tpu as pltpu


def _onehot_bf16(idx, T, V):
    # One-hot operand for the MXU in bf16.  bool -> f32 -> bf16 keeps to casts
    # that lower on every TPU generation; the transient f32 (T, V) is small.
    cols = lax.broadcasted_iota(jnp.int32, (T, V), 1)
    return (cols == idx).astype(jnp.float32).astype(jnp.bfloat16)


def _gather_kernel_bf16(idx_ref, table_ref, out_ref):
    # idx_ref:   (T, 1) int32 flattened lookup indices
    # table_ref: (V, D) bf16 table, VMEM-resident across the whole grid
    # out_ref:   (T, D) dense output tile
    T = out_ref.shape[0]
    V = table_ref.shape[0]
    one_hot = _onehot_bf16(idx_ref[...], T, V)
    acc = jnp.dot(one_hot, table_ref[...], preferred_element_type=jnp.float32)
    out_ref[...] = acc.astype(out_ref.dtype)


def _gather_kernel_hilo(idx_ref, hi_ref, lo_ref, out_ref):
    # f32 table split as bf16 hi + lo parts: two single-pass bf16 MXU matmuls
    # summed in f32.  Each output element is a single 1.0*x product with f32
    # accumulation, so the only error is the bf16(lo) rounding (~2^-16 rel).
    T = out_ref.shape[0]
    V = hi_ref.shape[0]
    one_hot = _onehot_bf16(idx_ref[...], T, V)
    hi = jnp.dot(one_hot, hi_ref[...], preferred_element_type=jnp.float32)
    lo = jnp.dot(one_hot, lo_ref[...], preferred_element_type=jnp.float32)
    out_ref[...] = (hi + lo).astype(out_ref.dtype)


def _pallas_gather(idx_padded, tables, *, kernel, n_tiles, tile, V, D,
                   out_dtype, vmem_limit, cost, single_buffer_table):
    tbl_kwargs = dict(pipeline_mode=pl.Buffered(1)) if single_buffer_table else {}
    in_specs = [pl.BlockSpec((tile, 1), lambda i: (i, 0))]
    in_specs += [
        # Constant block index -> fetched once, resident across the grid.
        pl.BlockSpec((V, D), lambda i: (0, 0), **tbl_kwargs) for _ in tables
    ]
    return pl.pallas_call(
        kernel,
        out_shape=jax.ShapeDtypeStruct((n_tiles * tile, D), out_dtype),
        grid_spec=pltpu.PrefetchScalarGridSpec(
            num_scalar_prefetch=0,
            grid=(n_tiles,),
            in_specs=in_specs,
            out_specs=pl.BlockSpec((tile, D), lambda i: (i, 0)),
        ),
        compiler_params=pltpu.CompilerParams(
            dimension_semantics=("parallel",),
            vmem_limit_bytes=vmem_limit,
        ),
        cost_estimate=cost,
    )(idx_padded, *tables)


def item_encoder_forward(table, item, *, tile=512, out_dtype=None,
                         min_rows_for_pallas=512, max_onehot_vocab=2048):
    """ItemEncoder.forward(item_embs_mu, item) == item_embs_mu.weight[item].

    `table` is the nn.Embedding weight (V, D); `item` is any int index array.
    Set out_dtype=jnp.bfloat16 if downstream consumers run in bf16 (halves the
    output writeback stream).
    """
    V, D = table.shape
    out_dtype = table.dtype if out_dtype is None else jnp.dtype(out_dtype)

    # OOB safety: clip instead of raising (divergence from torch.nn.Embedding).
    idx_flat = jnp.clip(item.reshape(-1).astype(jnp.int32), 0, V - 1)
    N = int(idx_flat.shape[0])

    # MXU operands: single bf16 matmul for bf16 tables, or f32 = bf16(hi)+bf16(lo).
    # (In a real model the hi/lo split is a pure function of the weights -
    # precompute it once per table instead of per call.)
    if table.dtype == jnp.bfloat16:
        tables = (table,)
        kernel = _gather_kernel_bf16
    else:
        t32 = table.astype(jnp.float32)
        hi = t32.astype(jnp.bfloat16)
        lo = (t32 - hi.astype(jnp.float32)).astype(jnp.bfloat16)
        tables = (hi, lo)
        kernel = _gather_kernel_hilo

    # Tile selection: big tiles amortize the ~0.35us/grid-step overhead and fill
    # the MXU M dim (multiple of 256 on v6e/v7x); cap tile*V so the one-hot
    # intermediate stays small (v5e has a single vector-store slot).
    tile = max(256, (int(tile) // 256) * 256)
    tile = min(tile, max(256, ((4 << 20) // max(2 * V, 1)) // 256 * 256))
    if N < tile:
        tile = max(8, -(-N // 8) * 8)          # keep sublane (8) alignment
    n_tiles = pl.cdiv(N, tile)
    n_pad = n_tiles * tile

    # Generation-aware VMEM budget (v7x: 64 MiB per TensorCore, and with the
    # "parallel" grid axis each core keeps its own resident table copy).
    out_itemsize = jnp.dtype(out_dtype).itemsize
    table_bytes = sum(int(t.size) * t.dtype.itemsize for t in tables)
    working_bytes = (
        2 * tile * D * out_itemsize      # double-buffered output blocks
        + 2 * tile * 128 * 4             # (tile, 1) idx blocks lane-pad to (tile, 128)
        + tile * V * 8                   # one-hot / matmul staging (f32 + bf16)
    )
    try:
        vmem_cap = int(pltpu.get_tpu_info().vmem_capacity_bytes)
    except Exception:
        vmem_cap = 64 << 20              # conservative: v7x per-core VMEM
    fits_vmem = table_bytes + working_bytes <= int(0.7 * vmem_cap)

    if N < min_rows_for_pallas or V > max_onehot_vocab or not fits_vmem:
        # Tiny lookups: pallas_call launch + the serial table prefetch dominate.
        # Huge vocab / table: one-hot matmul goes compute-bound (x V FLOP
        # amplification) or the table cannot stay VMEM-resident.
        # TODO(synk): replace this XLA-gather fallback with a Pallas HBM
        # row-DMA (memory_space=pl.ANY, manual double-buffering) path.
        return jnp.take(table, idx_flat, axis=0).astype(out_dtype).reshape(
            item.shape + (D,))

    # Pad indices to whole tiles; padded rows gather row 0 and are sliced away.
    idx_padded = jnp.zeros((n_pad, 1), jnp.int32).at[:N, 0].set(idx_flat)

    cost = pl.CostEstimate(
        flops=2 * n_pad * V * D * len(tables),
        transcendentals=0,
        bytes_accessed=table_bytes + n_pad * 4 + n_pad * D * out_itemsize,
    )
    # Size the scoped VMEM limit to the real footprint (allow for the
    # double-buffered-table fallback), clamped to the physical capacity.
    vmem_limit = min(
        max(int(1.5 * (2 * table_bytes + working_bytes)) + (2 << 20), 32 << 20),
        vmem_cap,
    )

    call = functools.partial(
        _pallas_gather, idx_padded, tables, kernel=kernel, n_tiles=n_tiles,
        tile=tile, V=V, D=D, out_dtype=out_dtype, vmem_limit=vmem_limit,
        cost=cost)
    try:
        # The table block index never changes, so a second pipeline buffer is
        # pure waste: request single-buffering.
        out = call(single_buffer_table=True)
    except Exception:
        # pl.Buffered(1) not supported on this jax/libtpu: use default buffering.
        out = call(single_buffer_table=False)

    return out[:N].reshape(item.shape + (D,))


if __name__ == "__main__":
    key = jax.random.PRNGKey(0)
    k_tab, k_idx = jax.random.split(key)

    # Small-but-representative shapes: vocab=512, hidden=128, item=(4, 256)
    # -> 1024 lookups = 2 grid tiles of 512 rows through the Pallas path.
    V, D = 512, 128
    B, S = 4, 256
    table = jax.random.normal(k_tab, (V, D), dtype=jnp.float32)   # nn.Embedding weight
    item = jax.random.randint(k_idx, (B, S), 0, V, dtype=jnp.int32)

    out = jax.block_until_ready(item_encoder_forward(table, item))
    ref = table[item]                    # plain JAX lookup == nn.Embedding forward
    assert out.shape == (B, S, D), out.shape
    assert out.dtype == table.dtype, out.dtype
    # bf16 hi+lo split reconstructs the f32 rows to ~2^-16 relative error.
    err = jnp.max(jnp.abs(out - ref))
    assert jnp.allclose(out, ref, rtol=1e-4, atol=1e-5), float(err)

    # Tiny lookups take the XLA-gather fast path (no pallas_call launch) and
    # must match exactly.
    small = jax.block_until_ready(item_encoder_forward(table, item[:2, :8]))
    assert jnp.array_equal(small, table[item[:2, :8]])

    print("KERNEL_OK")
</pallas_src>

<mosaic_0001>
module attributes {stable_mosaic.version = 11 : i64} {
  func.func @_gather_kernel_hilo(%arg0: i32, %arg1: memref<512x1xi32, #tpu.memory_space<vmem>>, %arg2: memref<512x128xbf16, #tpu.memory_space<vmem>>, %arg3: memref<512x128xbf16, #tpu.memory_space<vmem>>, %arg4: memref<512x128xf32, #tpu.memory_space<vmem>>) attributes {dimension_semantics = [#tpu.dimension_semantics<parallel>], iteration_bounds = array<i64: 2>, scalar_prefetch = 0 : i64, scratch_operands = 0 : i64, tpu.core_type = #tpu.core_type<tc>, window_params = [{transform_indices = @transform_0, window_bounds = array<i64: 512, 1>}, {pipeline_mode = #tpu.pipeline_mode<synchronous>, transform_indices = @transform_1, window_bounds = array<i64: 512, 128>}, {pipeline_mode = #tpu.pipeline_mode<synchronous>, transform_indices = @transform_2, window_bounds = array<i64: 512, 128>}, {transform_indices = @transform_3, window_bounds = array<i64: 512, 128>}]} {
    %c0 = arith.constant 0 : index
    %c0_0 = arith.constant 0 : index
    %0 = vector.load %arg1[%c0, %c0_0] : memref<512x1xi32, #tpu.memory_space<vmem>>, vector<512x1xi32>
    %1 = tpu.iota {dimensions = array<i32: 1>} : vector<512x512xi32>
    %2 = vector.broadcast %0 : vector<512x1xi32> to vector<512x512xi32>
    %3 = arith.cmpi eq, %1, %2 : vector<512x512xi32>
    %4 = arith.extui %3 : vector<512x512xi1> to vector<512x512xi32>
    %5 = arith.sitofp %4 : vector<512x512xi32> to vector<512x512xf32>
    %6 = arith.truncf %5 : vector<512x512xf32> to vector<512x512xbf16>
    %c0_1 = arith.constant 0 : index
    %c0_2 = arith.constant 0 : index
    %7 = vector.load %arg2[%c0_1, %c0_2] : memref<512x128xbf16, #tpu.memory_space<vmem>>, vector<512x128xbf16>
    %cst = arith.constant dense<0.000000e+00> : vector<512x128xf32>
    %8 = tpu.matmul %6, %7, %cst {dimension_numbers = #tpu.dot_dimension_numbers<[1], [0], [0], [1], [0, 0, 1, 1], [], []>} : vector<512x512xbf16>, vector<512x128xbf16>, vector<512x128xf32> -> vector<512x128xf32>
    %c0_3 = arith.constant 0 : index
    %c0_4 = arith.constant 0 : index
    %9 = vector.load %arg3[%c0_3, %c0_4] : memref<512x128xbf16, #tpu.memory_space<vmem>>, vector<512x128xbf16>
    %cst_5 = arith.constant dense<0.000000e+00> : vector<512x128xf32>
    %10 = tpu.matmul %6, %9, %cst_5 {dimension_numbers = #tpu.dot_dimension_numbers<[1], [0], [0], [1], [0, 0, 1, 1], [], []>} : vector<512x512xbf16>, vector<512x128xbf16>, vector<512x128xf32> -> vector<512x128xf32>
    %11 = arith.addf %8, %10 : vector<512x128xf32>
    %c0_6 = arith.constant 0 : index
    %c0_7 = arith.constant 0 : index
    %12 = vector.load %arg4[%c0_6, %c0_7] : memref<512x128xf32, #tpu.memory_space<vmem>>, vector<512x128xf32>
    tpu.vector_store %arg4[%c0_6, %c0_7], %11 {strides = array<i32>} : memref<512x128xf32, #tpu.memory_space<vmem>>, vector<512x128xf32>,
    return
  }
  func.func @transform_0(%arg0: i32) -> (i32, i32) {
    %c0_i32 = arith.constant 0 : i32
    %c0_i32_0 = arith.constant 0 : i32
    return %arg0, %c0_i32 : i32, i32
  }
  func.func @transform_1(%arg0: i32) -> (i32, i32) {
    %c0_i32 = arith.constant 0 : i32
    %c0_i32_0 = arith.constant 0 : i32
    %c0_i32_1 = arith.constant 0 : i32
    return %c0_i32, %c0_i32_0 : i32, i32
  }
  func.func @transform_2(%arg0: i32) -> (i32, i32) {
    %c0_i32 = arith.constant 0 : i32
    %c0_i32_0 = arith.constant 0 : i32
    %c0_i32_1 = arith.constant 0 : i32
    return %c0_i32, %c0_i32_0 : i32, i32
  }
  func.func @transform_3(%arg0: i32) -> (i32, i32) {
    %c0_i32 = arith.constant 0 : i32
    %c0_i32_0 = arith.constant 0 : i32
    return %arg0, %c0_i32 : i32, i32
  }
}

module attributes {stable_mosaic.version = 11 : i64} {
  func.func @_gather_kernel_hilo(%arg0: i32, %arg1: memref<512x1xi32, #tpu.memory_space<vmem>>, %arg2: memref<512x128xbf16, #tpu.memory_space<vmem>>, %arg3: memref<512x128xbf16, #tpu.memory_space<vmem>>, %arg4: memref<512x128xf32, #tpu.memory_space<vmem>>) attributes {dimension_semantics = [#tpu.dimension_semantics<parallel>], iteration_bounds = array<i64: 2>, scalar_prefetch = 0 : i64, scratch_operands = 0 : i64, tpu.core_type = #tpu.core_type<tc>, window_params = [{transform_indices = @transform_0, window_bounds = array<i64: 512, 1>}, {pipeline_mode = #tpu.pipeline_mode<synchronous>, transform_indices = @transform_1, window_bounds = array<i64: 512, 128>}, {pipeline_mode = #tpu.pipeline_mode<synchronous>, transform_indices = @transform_2, window_bounds = array<i64: 512, 128>}, {transform_indices = @transform_3, window_bounds = array<i64: 512, 128>}]} {
    %c0 = arith.constant 0 : index
    %c0_0 = arith.constant 0 : index
    %0 = vector.load %arg1[%c0, %c0_0] : memref<512x1xi32, #tpu.memory_space<vmem>>, vector<512x1xi32>
    %1 = tpu.iota {dimensions = array<i32: 1>} : vector<512x512xi32>
    %2 = vector.broadcast %0 : vector<512x1xi32> to vector<512x512xi32>
    %3 = arith.cmpi eq, %1, %2 : vector<512x512xi32>
    %4 = arith.extui %3 : vector<512x512xi1> to vector<512x512xi32>
    %5 = arith.sitofp %4 : vector<512x512xi32> to vector<512x512xf32>
    %6 = arith.truncf %5 : vector<512x512xf32> to vector<512x512xbf16>
    %c0_1 = arith.constant 0 : index
    %c0_2 = arith.constant 0 : index
    %7 = vector.load %arg2[%c0_1, %c0_2] : memref<512x128xbf16, #tpu.memory_space<vmem>>, vector<512x128xbf16>
    %cst = arith.constant dense<0.000000e+00> : vector<512x128xf32>
    %8 = tpu.matmul %6, %7, %cst {dimension_numbers = #tpu.dot_dimension_numbers<[1], [0], [0], [1], [0, 0, 1, 1], [], []>} : vector<512x512xbf16>, vector<512x128xbf16>, vector<512x128xf32> -> vector<512x128xf32>
    %c0_3 = arith.constant 0 : index
    %c0_4 = arith.constant 0 : index
    %9 = vector.load %arg3[%c0_3, %c0_4] : memref<512x128xbf16, #tpu.memory_space<vmem>>, vector<512x128xbf16>
    %cst_5 = arith.constant dense<0.000000e+00> : vector<512x128xf32>
    %10 = tpu.matmul %6, %9, %cst_5 {dimension_numbers = #tpu.dot_dimension_numbers<[1], [0], [0], [1], [0, 0, 1, 1], [], []>} : vector<512x512xbf16>, vector<512x128xbf16>, vector<512x128xf32> -> vector<512x128xf32>
    %11 = arith.addf %8, %10 : vector<512x128xf32>
    %c0_6 = arith.constant 0 : index
    %c0_7 = arith.constant 0 : index
    %12 = vector.load %arg4[%c0_6, %c0_7] : memref<512x128xf32, #tpu.memory_space<vmem>>, vector<512x128xf32>
    tpu.vector_store %arg4[%c0_6, %c0_7], %11 {strides = array<i32>} : memref<512x128xf32, #tpu.memory_space<vmem>>, vector<512x128xf32>,
    return
  }
  func.func @transform_0(%arg0: i32) -> (i32, i32) {
    %c0_i32 = arith.constant 0 : i32
    %c0_i32_0 = arith.constant 0 : i32
    return %arg0, %c0_i32 : i32, i32
  }
  func.func @transform_1(%arg0: i32) -> (i32, i32) {
    %c0_i32 = arith.constant 0 : i32
    %c0_i32_0 = arith.constant 0 : i32
    %c0_i32_1 = arith.constant 0 : i32
    return %c0_i32, %c0_i32_0 : i32, i32
  }
  func.func @transform_2(%arg0: i32) -> (i32, i32) {
    %c0_i32 = arith.constant 0 : i32
    %c0_i32_0 = arith.constant 0 : i32
    %c0_i32_1 = arith.constant 0 : i32
    return %c0_i32, %c0_i32_0 : i32, i32
  }
  func.func @transform_3(%arg0: i32) -> (i32, i32) {
    %c0_i32 = arith.constant 0 : i32
    %c0_i32_0 = arith.constant 0 : i32
    return %arg0, %c0_i32 : i32, i32
  }
}

</mosaic_0001>

<llo_original>
// kernel: tpu_custom_call.1
$region0: #{tpu_custom_call.1}
  #allocation0 [shape = 'u32[]', space=smem, size = 0x4, offset = 0x4, fixed_abs, tag = 'smem constant byte address 0x4 - core index']
  #allocation1 [shape = 'u32[144,128]{1,0:T(1,128)}', space=vmem, size = 0x12000, scoped, tag = 'internal scratch']
  %s0 = inlined_call_operand.vmem [shape: s32[1024,1], index: 0, kind: input, shape index: {}]
  %s1 = inlined_call_operand.vmem [shape: bf16[512,128], index: 1, kind: input, shape index: {}]
  %s2 = inlined_call_operand.vmem [shape: bf16[512,128], index: 2, kind: input, shape index: {}]
  %s3 = inlined_call_operand.hbm [shape: f32[1024,128], index: 3, kind: output, shape index: {}]
  %s4 = sld [smem:[#allocation0]]
  $region45: #{tpu_custom_call.1} parent=0
    _
  %s6 = ssub.s32 1, %s4
  %s7 = scalar_select 0, %s6, %s4
  $region1: #{tpu_custom_call.1} parent=0
    #allocation2 [shape = 'u8[524288]{0}', space=vmem, size = 0x80000, scoped, tag = 'output window, operand 0']
    #allocation3 [shape = 's32[2]{0}', space=sflag, size = 0x8, scoped, tag = 'scoped memory for tpu_custom_call.1']
    %8 = vsyncpa [#allocation3], 0
    %s9 = scalar_lea.sflag [#allocation3], 1
    %10 = vsyncpa %s9, 0
    loop: start=0, step=1, limit=4
    $region2: #{tpu_custom_call.1} parent=1 // loop_pre_header
      _
    $region3: #{tpu_custom_call.1} parent=1 // loop_header
      %s12 = sphi 0, %s16
      %p13 = scmp.ge.s32.totalorder %s12, 4
      %s22 = sphi 0, %s24
      %s25 = sphi 0, %s22
      %s26 = sphi 0, %s25
      %s42 = sphi 0, %s26
      %s46 = sphi 0, %s46
      %s48 = sphi 0, %s46
      %s49 = sphi 0, %s48
      %s63 = sphi 0, %s49
      %s67 = sphi 0, %s67
      %s69 = sphi 0, %s67
      %s70 = sphi 0, %s69
      %s84 = sphi 0, %s70
      %s90 = sphi 0, %s92
      %s93 = sphi 0, %s90
      %s94 = sphi 0, %s93
      %s110 = sphi 0, %s94
    $region4: #{tpu_custom_call.1} parent=1 // loop_header_branch
      %15 = sbr.rel (%p13) target = $region8
    $region5: #{tpu_custom_call.1} parent=1 // loop_body
      %s17 = ssub.s32 %s12, 1
      %s18 = ssub.s32 %s12, 2
      %s19 = sadd.s32 %s12, 1
      %s20 = ssub.s32 %s12, %s19
      %p21 = scmp.eq.s32.totalorder %s20, 0
      %s23 = sadd.s32 %s22, 1
      %s24 = scalar_select %p21, %s22, %s23
      %p27 = pneg %p21
      %p28 = scmp.eq.s32.totalorder %s12, 1
      %p29 = por %p27, %p28
      %p30 = scmp.ne.s32.totalorder %s22, %s25
      %p31 = scmp.eq.s32.totalorder %s12, 0
      %p32 = por %p30, %p31
      %p33 = scmp.ne.s32.totalorder %s22, %s25
      %p34 = scmp.eq.s32.totalorder %s17, 1
      %p35 = por %p33, %p34
      %p36 = scmp.ne.s32.totalorder %s25, %s26
      %p37 = scmp.eq.s32.totalorder %s17, 0
      %p38 = por %p36, %p37
      %p39 = scmp.ne.s32.totalorder %s25, %s26
      %p40 = scmp.eq.s32.totalorder %s18, 1
      %p41 = por %p39, %p40
      %p43 = scmp.ne.s32.totalorder %s26, %s42
      %p44 = scmp.eq.s32.totalorder %s18, 0
      %p45 = por %p43, %p44
      %s47 = sadd.s32 %s46, 1
      %p50 = scmp.eq.s32.totalorder %s12, 1
      %p51 = scmp.ne.s32.totalorder %s46, %s48
      %p52 = scmp.eq.s32.totalorder %s12, 0
      %p53 = por %p51, %p52
      %p54 = scmp.ne.s32.totalorder %s46, %s48
      %p55 = scmp.eq.s32.totalorder %s17, 1
      %p56 = por %p54, %p55
      %p57 = scmp.ne.s32.totalorder %s48, %s49
      %p58 = scmp.eq.s32.totalorder %s17, 0
      %p59 = por %p57, %p58
      %p60 = scmp.ne.s32.totalorder %s48, %s49
      %p61 = scmp.eq.s32.totalorder %s18, 1
      %p62 = por %p60, %p61
      %p64 = scmp.ne.s32.totalorder %s49, %s63
      %p65 = scmp.eq.s32.totalorder %s18, 0
      %p66 = por %p64, %p65
      %s68 = sadd.s32 %s67, 1
      %p71 = scmp.eq.s32.totalorder %s12, 1
      %p72 = scmp.ne.s32.totalorder %s67, %s69
      %p73 = scmp.eq.s32.totalorder %s12, 0
      %p74 = por %p72, %p73
      %p75 = scmp.ne.s32.totalorder %s67, %s69
      %p76 = scmp.eq.s32.totalorder %s17, 1
      %p77 = por %p75, %p76
      %p78 = scmp.ne.s32.totalorder %s69, %s70
      %p79 = scmp.eq.s32.totalorder %s17, 0
      %p80 = por %p78, %p79
      %p81 = scmp.ne.s32.totalorder %s69, %s70
      %p82 = scmp.eq.s32.totalorder %s18, 1
      %p83 = por %p81, %p82
      %p85 = scmp.ne.s32.totalorder %s70, %s84
      %p86 = scmp.eq.s32.totalorder %s18, 0
      %p87 = por %p85, %p86
      %s88 = ssub.s32 %s12, %s19
      %p89 = scmp.eq.s32.totalorder %s88, 0
      %s91 = sadd.s32 %s90, 1
      %s92 = scalar_select %p89, %s90, %s91
      %p95 = pneg %p89
      %p96 = scmp.eq.s32.totalorder %s12, 1
      %p97 = por %p95, %p96
      %p98 = scmp.ne.s32.totalorder %s90, %s93
      %p99 = scmp.eq.s32.totalorder %s12, 0
      %p100 = por %p98, %p99
      %p101 = scmp.ne.s32.totalorder %s90, %s93
      %p102 = scmp.eq.s32.totalorder %s17, 1
      %p103 = por %p101, %p102
      %p104 = scmp.ne.s32.totalorder %s93, %s94
      %p105 = scmp.eq.s32.totalorder %s17, 0
      %p106 = por %p104, %p105
      %p107 = scmp.ne.s32.totalorder %s93, %s94
      %p108 = scmp.eq.s32.totalorder %s18, 1
      %p109 = por %p107, %p108
      %p111 = scmp.ne.s32.totalorder %s94, %s110
      %p112 = scmp.eq.s32.totalorder %s18, 0
      %p113 = por %p111, %p112
      %p114 = scmp.le.s32.totalorder 1, %s12
      %p115 = scmp.lt.s32.totalorder %s12, 3
      %p116 = pnand %p114, %p115
      %p117 = pneg %p116
      // Predicated region
      $region9: #{tpu_custom_call.1} parent=5 // pred_check
        _
      $region10: #{tpu_custom_call.1} parent=5 // pred_check_branch
        %119 = sbr.rel (%p116) target = $region12
      $region11: #{tpu_custom_call.1} parent=5 // pred_region
        %s120 = ssub.s32 %s12, 1
        // Predicated region
        $region13: #{tpu_custom_call.1} parent=11 // pred_check
          %p121 = pneg %p59
        $region14: #{tpu_custom_call.1} parent=11 // pred_check_branch
          %123 = sbr.rel (%p121) target = $region16
        $region15: #{tpu_custom_call.1} parent=11 // pred_region
          _
        $region16: #{tpu_custom_call.1} parent=11 // pred_fallthru
          _
        // Predicated region
        $region17: #{tpu_custom_call.1} parent=11 // pred_check
          %p124 = pneg %p80
        $region18: #{tpu_custom_call.1} parent=11 // pred_check_branch
          %126 = sbr.rel (%p124) target = $region20
        $region19: #{tpu_custom_call.1} parent=11 // pred_region
          _
        $region20: #{tpu_custom_call.1} parent=11 // pred_fallthru
          _
      $region12: #{tpu_custom_call.1} parent=5 // pred_fallthru
        _
      %p127 = scmp.lt.s32.totalorder %s12, 2
      // Predicated region
      $region21: #{tpu_custom_call.1} parent=5 // pred_check
        %p128 = pneg %p127
      $region22: #{tpu_custom_call.1} parent=5 // pred_check_branch
        %130 = sbr.rel (%p128) target = $region24
      $region23: #{tpu_custom_call.1} parent=5 // pred_region
        // Predicated region
        $region25: #{tpu_custom_call.1} parent=23 // pred_check
          %p131 = pneg %p32
        $region26: #{tpu_custom_call.1} parent=23 // pred_check_branch
          %133 = sbr.rel (%p131) target = $region28
        $region27: #{tpu_custom_call.1} parent=23 // pred_region
          %s134 = smul.u32 64, %s12
          %p135 = scmp.lt.s32.totalorder %s134, 127
          %s136 = scalar_select %p135, %s134, 127
          %s137 = smul.addr %s136, 8
          %s138 = scalar_lea.vmem %s0, %s137
          %s139 = smul.u32 64, %s12
        $region28: #{tpu_custom_call.1} parent=23 // pred_fallthru
          _
      $region24: #{tpu_custom_call.1} parent=5 // pred_fallthru
        _
      %p140 = scmp.le.s32.totalorder 1, %s12
      %p141 = scmp.lt.s32.totalorder %s12, 3
      %p142 = pnand %p140, %p141
      %p143 = pneg %p142
      // Predicated region
      $region29: #{tpu_custom_call.1} parent=5 // pred_check
        _
      $region30: #{tpu_custom_call.1} parent=5 // pred_check_branch
        %145 = sbr.rel (%p142) target = $region32
      $region31: #{tpu_custom_call.1} parent=5 // pred_region
        %s146 = ssub.s32 %s12, 1
        %s147 = smul.u32 64, %s17
        %p148 = scmp.lt.s32.totalorder %s147, 127
        %s149 = scalar_select %p148, %s147, 127
        %s150 = smul.addr %s149, 8
        %s151 = scalar_lea.vmem %s0, %s150
        %p152 = pneg %p38
        %p153 = pneg %p35
        %p154 = pneg %p59
        %p155 = pneg %p56
        %p156 = pneg %p80
        %p157 = pneg %p77
        %p158 = pneg %p106
        %p159 = pneg %p103
        %s160 = sand.u32 %s93, 1
        %s161 = scalar_lea.sflag [#allocation3], %s160
        %s162 = sand.u32 %s93, 1
        %s163 = smul.addr %s162, 512
        %s164 = scalar_lea.vmem [#allocation2], %s163
        %s165 = smul.u32 64, %s17
        %p166 = scmp.lt.s32.totalorder %s165, 127
        %s167 = scalar_select %p166, %s165, 127
        %s168 = smul.addr %s167, 8
        %s169 = scalar_lea.vmem %s0, %s168
        %s170 = smul.u32 64, %s17
        %s171 = smul.u32 64, %s17
        %v173 = vld [vmem:[%s169] sm:$0xff]
        %v174 = vld [vmem:[%s169 + $0x8] sm:$0xff]
        %v175 = vld [vmem:[%s169 + $0x10] sm:$0xff]
        %v176 = vld [vmem:[%s169 + $0x18] sm:$0xff]
        %v177 = vld [vmem:[%s169 + $0x20] sm:$0xff]
        %v178 = vld [vmem:[%s169 + $0x28] sm:$0xff]
        %v179 = vld [vmem:[%s169 + $0x30] sm:$0xff]
        %v180 = vld [vmem:[%s169 + $0x38] sm:$0xff]
        %v181 = vld [vmem:[%s169 + $0x40] sm:$0xff]
        %v182 = vld [vmem:[%s169 + $0x48] sm:$0xff]
        %v183 = vld [vmem:[%s169 + $0x50] sm:$0xff]
        %v184 = vld [vmem:[%s169 + $0x58] sm:$0xff]
        %v185 = vld [vmem:[%s169 + $0x60] sm:$0xff]
        %v186 = vld [vmem:[%s169 + $0x68] sm:$0xff]
        %v187 = vld [vmem:[%s169 + $0x70] sm:$0xff]
        %v188 = vld [vmem:[%s169 + $0x78] sm:$0xff]
        %v189 = vld [vmem:[%s169 + $0x80] sm:$0xff]
        %v190 = vld [vmem:[%s169 + $0x88] sm:$0xff]
        %v191 = vld [vmem:[%s169 + $0x90] sm:$0xff]
        %v192 = vld [vmem:[%s169 + $0x98] sm:$0xff]
        %v193 = vld [vmem:[%s169 + $0xa0] sm:$0xff]
        %v194 = vld [vmem:[%s169 + $0xa8] sm:$0xff]
        %v195 = vld [vmem:[%s169 + $0xb0] sm:$0xff]
        %v196 = vld [vmem:[%s169 + $0xb8] sm:$0xff]
        %v197 = vld [vmem:[%s169 + $0xc0] sm:$0xff]
        %v198 = vld [vmem:[%s169 + $0xc8] sm:$0xff]
        %v199 = vld [vmem:[%s169 + $0xd0] sm:$0xff]
        %v200 = vld [vmem:[%s169 + $0xd8] sm:$0xff]
        %v201 = vld [vmem:[%s169 + $0xe0] sm:$0xff]
        %v202 = vld [vmem:[%s169 + $0xe8] sm:$0xff]
        %v203 = vld [vmem:[%s169 + $0xf0] sm:$0xff]
        %v204 = vld [vmem:[%s169 + $0xf8] sm:$0xff]
        %v205 = vld [vmem:[%s169 + $0x100] sm:$0xff]
        %v206 = vld [vmem:[%s169 + $0x108] sm:$0xff]
        %v207 = vld [vmem:[%s169 + $0x110] sm:$0xff]
        %v208 = vld [vmem:[%s169 + $0x118] sm:$0xff]
        %v209 = vld [vmem:[%s169 + $0x120] sm:$0xff]
        %v210 = vld [vmem:[%s169 + $0x128] sm:$0xff]
        %v211 = vld [vmem:[%s169 + $0x130] sm:$0xff]
        %v212 = vld [vmem:[%s169 + $0x138] sm:$0xff]
        %v213 = vld [vmem:[%s169 + $0x140] sm:$0xff]
        %v214 = vld [vmem:[%s169 + $0x148] sm:$0xff]
        %v215 = vld [vmem:[%s169 + $0x150] sm:$0xff]
        %v216 = vld [vmem:[%s169 + $0x158] sm:$0xff]
        %v217 = vld [vmem:[%s169 + $0x160] sm:$0xff]
        %v218 = vld [vmem:[%s169 + $0x168] sm:$0xff]
        %v219 = vld [vmem:[%s169 + $0x170] sm:$0xff]
        %v220 = vld [vmem:[%s169 + $0x178] sm:$0xff]
        %v221 = vld [vmem:[%s169 + $0x180] sm:$0xff]
        %v222 = vld [vmem:[%s169 + $0x188] sm:$0xff]
        %v223 = vld [vmem:[%s169 + $0x190] sm:$0xff]
        %v224 = vld [vmem:[%s169 + $0x198] sm:$0xff]
        %v225 = vld [vmem:[%s169 + $0x1a0] sm:$0xff]
        %v226 = vld [vmem:[%s169 + $0x1a8] sm:$0xff]
        %v227 = vld [vmem:[%s169 + $0x1b0] sm:$0xff]
        %v228 = vld [vmem:[%s169 + $0x1b8] sm:$0xff]
        %v229 = vld [vmem:[%s169 + $0x1c0] sm:$0xff]
        %v230 = vld [vmem:[%s169 + $0x1c8] sm:$0xff]
        %v231 = vld [vmem:[%s169 + $0x1d0] sm:$0xff]
        %v232 = vld [vmem:[%s169 + $0x1d8] sm:$0xff]
        %v233 = vld [vmem:[%s169 + $0x1e0] sm:$0xff]
        %v234 = vld [vmem:[%s169 + $0x1e8] sm:$0xff]
        %v235 = vld [vmem:[%s169 + $0x1f0] sm:$0xff]
        %v236 = vld [vmem:[%s169 + $0x1f8] sm:$0xff]
        %v237 = vlaneseq
        %v238 = vand.u32 %v237, 127
        %v239 = vadd.s32 %v238, 128
        %v240 = vadd.s32 %v238, 256
        %v241 = vadd.s32 %v238, 384
        %242 = vset.pattern.permute.xlu0 0
        %243 = vperm.xlu0 %242, %v173
        %v244 = vpop.permute.xlu0 %243
        %245 = vset.pattern.permute.xlu0 0
        %246 = vperm.xlu0 %245, %v174
        %v247 = vpop.permute.xlu0 %246
        %248 = vset.pattern.permute.xlu0 0
        %249 = vperm.xlu0 %248, %v175
        %v250 = vpop.permute.xlu0 %249
        %251 = vset.pattern.permute.xlu0 0
        %252 = vperm.xlu0 %251, %v176
        %v253 = vpop.permute.xlu0 %252
        %254 = vset.pattern.permute.xlu0 0
        %255 = vperm.xlu0 %254, %v177
        %v256 = vpop.permute.xlu0 %255
        %257 = vset.pattern.permute.xlu0 0
        %258 = vperm.xlu0 %257, %v178
        %v259 = vpop.permute.xlu0 %258
        %260 = vset.pattern.permute.xlu0 0
        %261 = vperm.xlu0 %260, %v179
        %v262 = vpop.permute.xlu0 %261
        %263 = vset.pattern.permute.xlu0 0
        %264 = vperm.xlu0 %263, %v180
        %v265 = vpop.permute.xlu0 %264
        %266 = vset.pattern.permute.xlu0 0
        %267 = vperm.xlu0 %266, %v181
        %v268 = vpop.permute.xlu0 %267
        %269 = vset.pattern.permute.xlu0 0
        %270 = vperm.xlu0 %269, %v182
        %v271 = vpop.permute.xlu0 %270
        %272 = vset.pattern.permute.xlu0 0
        %273 = vperm.xlu0 %272, %v183
        %v274 = vpop.permute.xlu0 %273
        %275 = vset.pattern.permute.xlu0 0
        %276 = vperm.xlu0 %275, %v184
        %v277 = vpop.permute.xlu0 %276
        %278 = vset.pattern.permute.xlu0 0
        %279 = vperm.xlu0 %278, %v185
        %v280 = vpop.permute.xlu0 %279
        %281 = vset.pattern.permute.xlu0 0
        %282 = vperm.xlu0 %281, %v186
        %v283 = vpop.permute.xlu0 %282
        %284 = vset.pattern.permute.xlu0 0
        %285 = vperm.xlu0 %284, %v187
        %v286 = vpop.permute.xlu0 %285
        %287 = vset.pattern.permute.xlu0 0
        %288 = vperm.xlu0 %287, %v188
        %v289 = vpop.permute.xlu0 %288
        %290 = vset.pattern.permute.xlu0 0
        %291 = vperm.xlu0 %290, %v189
        %v292 = vpop.permute.xlu0 %291
        %293 = vset.pattern.permute.xlu0 0
        %294 = vperm.xlu0 %293, %v190
        %v295 = vpop.permute.xlu0 %294
        %296 = vset.pattern.permute.xlu0 0
        %297 = vperm.xlu0 %296, %v191
        %v298 = vpop.permute.xlu0 %297
        %299 = vset.pattern.permute.xlu0 0
        %300 = vperm.xlu0 %299, %v192
        %v301 = vpop.permute.xlu0 %300
        %302 = vset.pattern.permute.xlu0 0
        %303 = vperm.xlu0 %302, %v193
        %v304 = vpop.permute.xlu0 %303
        %305 = vset.pattern.permute.xlu0 0
        %306 = vperm.xlu0 %305, %v194
        %v307 = vpop.permute.xlu0 %306
        %308 = vset.pattern.permute.xlu0 0
        %309 = vperm.xlu0 %308, %v195
        %v310 = vpop.permute.xlu0 %309
        %311 = vset.pattern.permute.xlu0 0
        %312 = vperm.xlu0 %311, %v196
        %v313 = vpop.permute.xlu0 %312
        %314 = vset.pattern.permute.xlu0 0
        %315 = vperm.xlu0 %314, %v197
        %v316 = vpop.permute.xlu0 %315
        %317 = vset.pattern.permute.xlu0 0
        %318 = vperm.xlu0 %317, %v198
        %v319 = vpop.permute.xlu0 %318
        %320 = vset.pattern.permute.xlu0 0
        %321 = vperm.xlu0 %320, %v199
        %v322 = vpop.permute.xlu0 %321
        %323 = vset.pattern.permute.xlu0 0
        %324 = vperm.xlu0 %323, %v200
        %v325 = vpop.permute.xlu0 %324
        %326 = vset.pattern.permute.xlu0 0
        %327 = vperm.xlu0 %326, %v201
        %v328 = vpop.permute.xlu0 %327
        %329 = vset.pattern.permute.xlu0 0
        %330 = vperm.xlu0 %329, %v202
        %v331 = vpop.permute.xlu0 %330
        %332 = vset.pattern.permute.xlu0 0
        %333 = vperm.xlu0 %332, %v203
        %v334 = vpop.permute.xlu0 %333
        %335 = vset.pattern.permute.xlu0 0
        %336 = vperm.xlu0 %335, %v204
        %v337 = vpop.permute.xlu0 %336
        %338 = vset.pattern.permute.xlu0 0
        %339 = vperm.xlu0 %338, %v205
        %v340 = vpop.permute.xlu0 %339
        %341 = vset.pattern.permute.xlu0 0
        %342 = vperm.xlu0 %341, %v206
        %v343 = vpop.permute.xlu0 %342
        %344 = vset.pattern.permute.xlu0 0
        %345 = vperm.xlu0 %344, %v207
        %v346 = vpop.permute.xlu0 %345
        %347 = vset.pattern.permute.xlu0 0
        %348 = vperm.xlu0 %347, %v208
        %v349 = vpop.permute.xlu0 %348
        %350 = vset.pattern.permute.xlu0 0
        %351 = vperm.xlu0 %350, %v209
        %v352 = vpop.permute.xlu0 %351
        %353 = vset.pattern.permute.xlu0 0
        %354 = vperm.xlu0 %353, %v210
        %v355 = vpop.permute.xlu0 %354
        %356 = vset.pattern.permute.xlu0 0
        %357 = vperm.xlu0 %356, %v211
        %v358 = vpop.permute.xlu0 %357
        %359 = vset.pattern.permute.xlu0 0
        %360 = vperm.xlu0 %359, %v212
        %v361 = vpop.permute.xlu0 %360
        %362 = vset.pattern.permute.xlu0 0
        %363 = vperm.xlu0 %362, %v213
        %v364 = vpop.permute.xlu0 %363
        %365 = vset.pattern.permute.xlu0 0
        %366 = vperm.xlu0 %365, %v214
        %v367 = vpop.permute.xlu0 %366
        %368 = vset.pattern.permute.xlu0 0
        %369 = vperm.xlu0 %368, %v215
        %v370 = vpop.permute.xlu0 %369
        %371 = vset.pattern.permute.xlu0 0
        %372 = vperm.xlu0 %371, %v216
        %v373 = vpop.permute.xlu0 %372
        %374 = vset.pattern.permute.xlu0 0
        %375 = vperm.xlu0 %374, %v217
        %v376 = vpop.permute.xlu0 %375
        %377 = vset.pattern.permute.xlu0 0
        %378 = vperm.xlu0 %377, %v218
        %v379 = vpop.permute.xlu0 %378
        %380 = vset.pattern.permute.xlu0 0
        %381 = vperm.xlu0 %380, %v219
        %v382 = vpop.permute.xlu0 %381
        %383 = vset.pattern.permute.xlu0 0
        %384 = vperm.xlu0 %383, %v220
        %v385 = vpop.permute.xlu0 %384
        %386 = vset.pattern.permute.xlu0 0
        %387 = vperm.xlu0 %386, %v221
        %v388 = vpop.permute.xlu0 %387
        %389 = vset.pattern.permute.xlu0 0
        %390 = vperm.xlu0 %389, %v222
        %v391 = vpop.permute.xlu0 %390
        %392 = vset.pattern.permute.xlu0 0
        %393 = vperm.xlu0 %392, %v223
        %v394 = vpop.permute.xlu0 %393
        %395 = vset.pattern.permute.xlu0 0
        %396 = vperm.xlu0 %395, %v224
        %v397 = vpop.permute.xlu0 %396
        %398 = vset.pattern.permute.xlu0 0
        %399 = vperm.xlu0 %398, %v225
        %v400 = vpop.permute.xlu0 %399
        %401 = vset.pattern.permute.xlu0 0
        %402 = vperm.xlu0 %401, %v226
        %v403 = vpop.permute.xlu0 %402
        %404 = vset.pattern.permute.xlu0 0
        %405 = vperm.xlu0 %404, %v227
        %v406 = vpop.permute.xlu0 %405
        %407 = vset.pattern.permute.xlu0 0
        %408 = vperm.xlu0 %407, %v228
        %v409 = vpop.permute.xlu0 %408
        %410 = vset.pattern.permute.xlu0 0
        %411 = vperm.xlu0 %410, %v229
        %v412 = vpop.permute.xlu0 %411
        %413 = vset.pattern.permute.xlu0 0
        %414 = vperm.xlu0 %413, %v230
        %v415 = vpop.permute.xlu0 %414
        %416 = vset.pattern.permute.xlu0 0
        %417 = vperm.xlu0 %416, %v231
        %v418 = vpop.permute.xlu0 %417
        %419 = vset.pattern.permute.xlu0 0
        %420 = vperm.xlu0 %419, %v232
        %v421 = vpop.permute.xlu0 %420
        %422 = vset.pattern.permute.xlu0 0
        %423 = vperm.xlu0 %422, %v233
        %v424 = vpop.permute.xlu0 %423
        %425 = vset.pattern.permute.xlu0 0
        %426 = vperm.xlu0 %425, %v234
        %v427 = vpop.permute.xlu0 %426
        %428 = vset.pattern.permute.xlu0 0
        %429 = vperm.xlu0 %428, %v235
        %v430 = vpop.permute.xlu0 %429
        %431 = vset.pattern.permute.xlu0 0
        %432 = vperm.xlu0 %431, %v236
        %v433 = vpop.permute.xlu0 %432
        %vm434 = vcmp.eq.s32.totalorder %v238, %v244
        %vm435 = vcmp.eq.s32.totalorder %v239, %v244
        %vm436 = vcmp.eq.s32.totalorder %v240, %v244
        %vm437 = vcmp.eq.s32.totalorder %v241, %v244
        %vm438 = vcmp.eq.s32.totalorder %v238, %v247
        %vm439 = vcmp.eq.s32.totalorder %v239, %v247
        %vm440 = vcmp.eq.s32.totalorder %v240, %v247
        %vm441 = vcmp.eq.s32.totalorder %v241, %v247
        %vm442 = vcmp.eq.s32.totalorder %v238, %v250
        %vm443 = vcmp.eq.s32.totalorder %v239, %v250
        %vm444 = vcmp.eq.s32.totalorder %v240, %v250
        %vm445 = vcmp.eq.s32.totalorder %v241, %v250
        %vm446 = vcmp.eq.s32.totalorder %v238, %v253
        %vm447 = vcmp.eq.s32.totalorder %v239, %v253
        %vm448 = vcmp.eq.s32.totalorder %v240, %v253
        %vm449 = vcmp.eq.s32.totalorder %v241, %v253
        %vm450 = vcmp.eq.s32.totalorder %v238, %v256
        %vm451 = vcmp.eq.s32.totalorder %v239, %v256
        %vm452 = vcmp.eq.s32.totalorder %v240, %v256
        %vm453 = vcmp.eq.s32.totalorder %v241, %v256
        %vm454 = vcmp.eq.s32.totalorder %v238, %v259
        %vm455 = vcmp.eq.s32.totalorder %v239, %v259
        %vm456 = vcmp.eq.s32.totalorder %v240, %v259
        %vm457 = vcmp.eq.s32.totalorder %v241, %v259
        %vm458 = vcmp.eq.s32.totalorder %v238, %v262
        %vm459 = vcmp.eq.s32.totalorder %v239, %v262
        %vm460 = vcmp.eq.s32.totalorder %v240, %v262
        %vm461 = vcmp.eq.s32.totalorder %v241, %v262
        %vm462 = vcmp.eq.s32.totalorder %v238, %v265
        %vm463 = vcmp.eq.s32.totalorder %v239, %v265
        %vm464 = vcmp.eq.s32.totalorder %v240, %v265
        %vm465 = vcmp.eq.s32.totalorder %v241, %v265
        %vm466 = vcmp.eq.s32.totalorder %v238, %v268
        %vm467 = vcmp.eq.s32.totalorder %v239, %v268
        %vm468 = vcmp.eq.s32.totalorder %v240, %v268
        %vm469 = vcmp.eq.s32.totalorder %v241, %v268
        %vm470 = vcmp.eq.s32.totalorder %v238, %v271
        %vm471 = vcmp.eq.s32.totalorder %v239, %v271
        %vm472 = vcmp.eq.s32.totalorder %v240, %v271
        %vm473 = vcmp.eq.s32.totalorder %v241, %v271
        %vm474 = vcmp.eq.s32.totalorder %v238, %v274
        %vm475 = vcmp.eq.s32.totalorder %v239, %v274
        %vm476 = vcmp.eq.s32.totalorder %v240, %v274
        %vm477 = vcmp.eq.s32.totalorder %v241, %v274
        %vm478 = vcmp.eq.s32.totalorder %v238, %v277
        %vm479 = vcmp.eq.s32.totalorder %v239, %v277
        %vm480 = vcmp.eq.s32.totalorder %v240, %v277
        %vm481 = vcmp.eq.s32.totalorder %v241, %v277
        %vm482 = vcmp.eq.s32.totalorder %v238, %v280
        %vm483 = vcmp.eq.s32.totalorder %v239, %v280
        %vm484 = vcmp.eq.s32.totalorder %v240, %v280
        %vm485 = vcmp.eq.s32.totalorder %v241, %v280
        %vm486 = vcmp.eq.s32.totalorder %v238, %v283
        %vm487 = vcmp.eq.s32.totalorder %v239, %v283
        %vm488 = vcmp.eq.s32.totalorder %v240, %v283
        %vm489 = vcmp.eq.s32.totalorder %v241, %v283
        %vm490 = vcmp.eq.s32.totalorder %v238, %v286
        %vm491 = vcmp.eq.s32.totalorder %v239, %v286
        %vm492 = vcmp.eq.s32.totalorder %v240, %v286
        %vm493 = vcmp.eq.s32.totalorder %v241, %v286
        %vm494 = vcmp.eq.s32.totalorder %v238, %v289
        %vm495 = vcmp.eq.s32.totalorder %v239, %v289
        %vm496 = vcmp.eq.s32.totalorder %v240, %v289
        %vm497 = vcmp.eq.s32.totalorder %v241, %v289
        %vm498 = vcmp.eq.s32.totalorder %v238, %v292
        %vm499 = vcmp.eq.s32.totalorder %v239, %v292
        %vm500 = vcmp.eq.s32.totalorder %v240, %v292
        %vm501 = vcmp.eq.s32.totalorder %v241, %v292
        %vm502 = vcmp.eq.s32.totalorder %v238, %v295
        %vm503 = vcmp.eq.s32.totalorder %v239, %v295
        %vm504 = vcmp.eq.s32.totalorder %v240, %v295
        %vm505 = vcmp.eq.s32.totalorder %v241, %v295
        %vm506 = vcmp.eq.s32.totalorder %v238, %v298
        %vm507 = vcmp.eq.s32.totalorder %v239, %v298
        %vm508 = vcmp.eq.s32.totalorder %v240, %v298
        %vm509 = vcmp.eq.s32.totalorder %v241, %v298
        %vm510 = vcmp.eq.s32.totalorder %v238, %v301
        %vm511 = vcmp.eq.s32.totalorder %v239, %v301
        %vm512 = vcmp.eq.s32.totalorder %v240, %v301
        %vm513 = vcmp.eq.s32.totalorder %v241, %v301
        %vm514 = vcmp.eq.s32.totalorder %v238, %v304
        %vm515 = vcmp.eq.s32.totalorder %v239, %v304
        %vm516 = vcmp.eq.s32.totalorder %v240, %v304
        %vm517 = vcmp.eq.s32.totalorder %v241, %v304
        %vm518 = vcmp.eq.s32.totalorder %v238, %v307
        %vm519 = vcmp.eq.s32.totalorder %v239, %v307
        %vm520 = vcmp.eq.s32.totalorder %v240, %v307
        %vm521 = vcmp.eq.s32.totalorder %v241, %v307
        %vm522 = vcmp.eq.s32.totalorder %v238, %v310
        %vm523 = vcmp.eq.s32.totalorder %v239, %v310
        %vm524 = vcmp.eq.s32.totalorder %v240, %v310
        %vm525 = vcmp.eq.s32.totalorder %v241, %v310
        %vm526 = vcmp.eq.s32.totalorder %v238, %v313
        %vm527 = vcmp.eq.s32.totalorder %v239, %v313
        %vm528 = vcmp.eq.s32.totalorder %v240, %v313
        %vm529 = vcmp.eq.s32.totalorder %v241, %v313
        %vm530 = vcmp.eq.s32.totalorder %v238, %v316
        %vm531 = vcmp.eq.s32.totalorder %v239, %v316
        %vm532 = vcmp.eq.s32.totalorder %v240, %v316
        %vm533 = vcmp.eq.s32.totalorder %v241, %v316
        %vm534 = vcmp.eq.s32.totalorder %v238, %v319
        %vm535 = vcmp.eq.s32.totalorder %v239, %v319
        %vm536 = vcmp.eq.s32.totalorder %v240, %v319
        %vm537 = vcmp.eq.s32.totalorder %v241, %v319
        %vm538 = vcmp.eq.s32.totalorder %v238, %v322
        %vm539 = vcmp.eq.s32.totalorder %v239, %v322
        %vm540 = vcmp.eq.s32.totalorder %v240, %v322
        %vm541 = vcmp.eq.s32.totalorder %v241, %v322
        %vm542 = vcmp.eq.s32.totalorder %v238, %v325
        %vm543 = vcmp.eq.s32.totalorder %v239, %v325
        %vm544 = vcmp.eq.s32.totalorder %v240, %v325
        %vm545 = vcmp.eq.s32.totalorder %v241, %v325
        %vm546 = vcmp.eq.s32.totalorder %v238, %v328
        %vm547 = vcmp.eq.s32.totalorder %v239, %v328
        %vm548 = vcmp.eq.s32.totalorder %v240, %v328
        %vm549 = vcmp.eq.s32.totalorder %v241, %v328
        %vm550 = vcmp.eq.s32.totalorder %v238, %v331
        %vm551 = vcmp.eq.s32.totalorder %v239, %v331
        %vm552 = vcmp.eq.s32.totalorder %v240, %v331
        %vm553 = vcmp.eq.s32.totalorder %v241, %v331
        %vm554 = vcmp.eq.s32.totalorder %v238, %v334
        %vm555 = vcmp.eq.s32.totalorder %v239, %v334
        %vm556 = vcmp.eq.s32.totalorder %v240, %v334
        %vm557 = vcmp.eq.s32.totalorder %v241, %v334
        %vm558 = vcmp.eq.s32.totalorder %v238, %v337
        %vm559 = vcmp.eq.s32.totalorder %v239, %v337
        %vm560 = vcmp.eq.s32.totalorder %v240, %v337
        %vm561 = vcmp.eq.s32.totalorder %v241, %v337
        %vm562 = vcmp.eq.s32.totalorder %v238, %v340
        %vm563 = vcmp.eq.s32.totalorder %v239, %v340
        %vm564 = vcmp.eq.s32.totalorder %v240, %v340
        %vm565 = vcmp.eq.s32.totalorder %v241, %v340
        %vm566 = vcmp.eq.s32.totalorder %v238, %v343
        %vm567 = vcmp.eq.s32.totalorder %v239, %v343
        %vm568 = vcmp.eq.s32.totalorder %v240, %v343
        %vm569 = vcmp.eq.s32.totalorder %v241, %v343
        %vm570 = vcmp.eq.s32.totalorder %v238, %v346
        %vm571 = vcmp.eq.s32.totalorder %v239, %v346
        %vm572 = vcmp.eq.s32.totalorder %v240, %v346
        %vm573 = vcmp.eq.s32.totalorder %v241, %v346
        %vm574 = vcmp.eq.s32.totalorder %v238, %v349
        %vm575 = vcmp.eq.s32.totalorder %v239, %v349
        %vm576 = vcmp.eq.s32.totalorder %v240, %v349
        %vm577 = vcmp.eq.s32.totalorder %v241, %v349
        %vm578 = vcmp.eq.s32.totalorder %v238, %v352
        %vm579 = vcmp.eq.s32.totalorder %v239, %v352
        %vm580 = vcmp.eq.s32.totalorder %v240, %v352
        %vm581 = vcmp.eq.s32.totalorder %v241, %v352
        %vm582 = vcmp.eq.s32.totalorder %v238, %v355
        %vm583 = vcmp.eq.s32.totalorder %v239, %v355
        %vm584 = vcmp.eq.s32.totalorder %v240, %v355
        %vm585 = vcmp.eq.s32.totalorder %v241, %v355
        %vm586 = vcmp.eq.s32.totalorder %v238, %v358
        %vm587 = vcmp.eq.s32.totalorder %v239, %v358
        %vm588 = vcmp.eq.s32.totalorder %v240, %v358
        %vm589 = vcmp.eq.s32.totalorder %v241, %v358
        %vm590 = vcmp.eq.s32.totalorder %v238, %v361
        %vm591 = vcmp.eq.s32.totalorder %v239, %v361
        %vm592 = vcmp.eq.s32.totalorder %v240, %v361
        %vm593 = vcmp.eq.s32.totalorder %v241, %v361
        %vm594 = vcmp.eq.s32.totalorder %v238, %v364
        %vm595 = vcmp.eq.s32.totalorder %v239, %v364
        %vm596 = vcmp.eq.s32.totalorder %v240, %v364
        %vm597 = vcmp.eq.s32.totalorder %v241, %v364
        %vm598 = vcmp.eq.s32.totalorder %v238, %v367
        %vm599 = vcmp.eq.s32.totalorder %v239, %v367
        %vm600 = vcmp.eq.s32.totalorder %v240, %v367
        %vm601 = vcmp.eq.s32.totalorder %v241, %v367
        %vm602 = vcmp.eq.s32.totalorder %v238, %v370
        %vm603 = vcmp.eq.s32.totalorder %v239, %v370
        %vm604 = vcmp.eq.s32.totalorder %v240, %v370
        %vm605 = vcmp.eq.s32.totalorder %v241, %v370
        %vm606 = vcmp.eq.s32.totalorder %v238, %v373
        %vm607 = vcmp.eq.s32.totalorder %v239, %v373
        %vm608 = vcmp.eq.s32.totalorder %v240, %v373
        %vm609 = vcmp.eq.s32.totalorder %v241, %v373
        %vm610 = vcmp.eq.s32.totalorder %v238, %v376
        %vm611 = vcmp.eq.s32.totalorder %v239, %v376
        %vm612 = vcmp.eq.s32.totalorder %v240, %v376
        %vm613 = vcmp.eq.s32.totalorder %v241, %v376
        %vm614 = vcmp.eq.s32.totalorder %v238, %v379
        %vm615 = vcmp.eq.s32.totalorder %v239, %v379
        %vm616 = vcmp.eq.s32.totalorder %v240, %v379
        %vm617 = vcmp.eq.s32.totalorder %v241, %v379
        %vm618 = vcmp.eq.s32.totalorder %v238, %v382
        %vm619 = vcmp.eq.s32.totalorder %v239, %v382
        %vm620 = vcmp.eq.s32.totalorder %v240, %v382
        %vm621 = vcmp.eq.s32.totalorder %v241, %v382
        %vm622 = vcmp.eq.s32.totalorder %v238, %v385
        %vm623 = vcmp.eq.s32.totalorder %v239, %v385
        %vm624 = vcmp.eq.s32.totalorder %v240, %v385
        %vm625 = vcmp.eq.s32.totalorder %v241, %v385
        %vm626 = vcmp.eq.s32.totalorder %v238, %v388
        %vm627 = vcmp.eq.s32.totalorder %v239, %v388
        %vm628 = vcmp.eq.s32.totalorder %v240, %v388
        %vm629 = vcmp.eq.s32.totalorder %v241, %v388
        %vm630 = vcmp.eq.s32.totalorder %v238, %v391
        %vm631 = vcmp.eq.s32.totalorder %v239, %v391
        %vm632 = vcmp.eq.s32.totalorder %v240, %v391
        %vm633 = vcmp.eq.s32.totalorder %v241, %v391
        %vm634 = vcmp.eq.s32.totalorder %v238, %v394
        %vm635 = vcmp.eq.s32.totalorder %v239, %v394
        %vm636 = vcmp.eq.s32.totalorder %v240, %v394
        %vm637 = vcmp.eq.s32.totalorder %v241, %v394
        %vm638 = vcmp.eq.s32.totalorder %v238, %v397
        %vm639 = vcmp.eq.s32.totalorder %v239, %v397
        %vm640 = vcmp.eq.s32.totalorder %v240, %v397
        %vm641 = vcmp.eq.s32.totalorder %v241, %v397
        %vm642 = vcmp.eq.s32.totalorder %v238, %v400
        %vm643 = vcmp.eq.s32.totalorder %v239, %v400
        %vm644 = vcmp.eq.s32.totalorder %v240, %v400
        %vm645 = vcmp.eq.s32.totalorder %v241, %v400
        %vm646 = vcmp.eq.s32.totalorder %v238, %v403
        %vm647 = vcmp.eq.s32.totalorder %v239, %v403
        %vm648 = vcmp.eq.s32.totalorder %v240, %v403
        %vm649 = vcmp.eq.s32.totalorder %v241, %v403
        %vm650 = vcmp.eq.s32.totalorder %v238, %v406
        %vm651 = vcmp.eq.s32.totalorder %v239, %v406
        %vm652 = vcmp.eq.s32.totalorder %v240, %v406
        %vm653 = vcmp.eq.s32.totalorder %v241, %v406
        %vm654 = vcmp.eq.s32.totalorder %v238, %v409
        %vm655 = vcmp.eq.s32.totalorder %v239, %v409
        %vm656 = vcmp.eq.s32.totalorder %v240, %v409
        %vm657 = vcmp.eq.s32.totalorder %v241, %v409
        %vm658 = vcmp.eq.s32.totalorder %v238, %v412
        %vm659 = vcmp.eq.s32.totalorder %v239, %v412
        %vm660 = vcmp.eq.s32.totalorder %v240, %v412
        %vm661 = vcmp.eq.s32.totalorder %v241, %v412
        %vm662 = vcmp.eq.s32.totalorder %v238, %v415
        %vm663 = vcmp.eq.s32.totalorder %v239, %v415
        %vm664 = vcmp.eq.s32.totalorder %v240, %v415
        %vm665 = vcmp.eq.s32.totalorder %v241, %v415
        %vm666 = vcmp.eq.s32.totalorder %v238, %v418
        %vm667 = vcmp.eq.s32.totalorder %v239, %v418
        %vm668 = vcmp.eq.s32.totalorder %v240, %v418
        %vm669 = vcmp.eq.s32.totalorder %v241, %v418
        %vm670 = vcmp.eq.s32.totalorder %v238, %v421
        %vm671 = vcmp.eq.s32.totalorder %v239, %v421
        %vm672 = vcmp.eq.s32.totalorder %v240, %v421
        %vm673 = vcmp.eq.s32.totalorder %v241, %v421
        %vm674 = vcmp.eq.s32.totalorder %v238, %v424
        %vm675 = vcmp.eq.s32.totalorder %v239, %v424
        %vm676 = vcmp.eq.s32.totalorder %v240, %v424
        %vm677 = vcmp.eq.s32.totalorder %v241, %v424
        %vm678 = vcmp.eq.s32.totalorder %v238, %v427
        %vm679 = vcmp.eq.s32.totalorder %v239, %v427
        %vm680 = vcmp.eq.s32.totalorder %v240, %v427
        %vm681 = vcmp.eq.s32.totalorder %v241, %v427
        %vm682 = vcmp.eq.s32.totalorder %v238, %v430
        %vm683 = vcmp.eq.s32.totalorder %v239, %v430
        %vm684 = vcmp.eq.s32.totalorder %v240, %v430
        %vm685 = vcmp.eq.s32.totalorder %v241, %v430
        %vm686 = vcmp.eq.s32.totalorder %v238, %v433
        %vm687 = vcmp.eq.s32.totalorder %v239, %v433
        %vm688 = vcmp.eq.s32.totalorder %v240, %v433
        %vm689 = vcmp.eq.s32.totalorder %v241, %v433
        %v690 = vsel %vm434, 1, 0
        %v691 = vsel %vm435, 1, 0
        %v692 = vsel %vm436, 1, 0
        %v693 = vsel %vm437, 1, 0
        %v694 = vsel %vm438, 1, 0
        %v695 = vsel %vm439, 1, 0
        %v696 = vsel %vm440, 1, 0
        %v697 = vsel %vm441, 1, 0
        %v698 = vsel %vm442, 1, 0
        %v699 = vsel %vm443, 1, 0
        %v700 = vsel %vm444, 1, 0
        %v701 = vsel %vm445, 1, 0
        %v702 = vsel %vm446, 1, 0
        %v703 = vsel %vm447, 1, 0
        %v704 = vsel %vm448, 1, 0
        %v705 = vsel %vm449, 1, 0
        %v706 = vsel %vm450, 1, 0
        %v707 = vsel %vm451, 1, 0
        %v708 = vsel %vm452, 1, 0
        %v709 = vsel %vm453, 1, 0
        %v710 = vsel %vm454, 1, 0
        %v711 = vsel %vm455, 1, 0
        %v712 = vsel %vm456, 1, 0
        %v713 = vsel %vm457, 1, 0
        %v714 = vsel %vm458, 1, 0
        %v715 = vsel %vm459, 1, 0
        %v716 = vsel %vm460, 1, 0
        %v717 = vsel %vm461, 1, 0
        %v718 = vsel %vm462, 1, 0
        %v719 = vsel %vm463, 1, 0
        %v720 = vsel %vm464, 1, 0
        %v721 = vsel %vm465, 1, 0
        %v722 = vsel %vm466, 1, 0
        %v723 = vsel %vm467, 1, 0
        %v724 = vsel %vm468, 1, 0
        %v725 = vsel %vm469, 1, 0
        %v726 = vsel %vm470, 1, 0
        %v727 = vsel %vm471, 1, 0
        %v728 = vsel %vm472, 1, 0
        %v729 = vsel %vm473, 1, 0
        %v730 = vsel %vm474, 1, 0
        %v731 = vsel %vm475, 1, 0
        %v732 = vsel %vm476, 1, 0
        %v733 = vsel %vm477, 1, 0
        %v734 = vsel %vm478, 1, 0
        %v735 = vsel %vm479, 1, 0
        %v736 = vsel %vm480, 1, 0
        %v737 = vsel %vm481, 1, 0
        %v738 = vsel %vm482, 1, 0
        %v739 = vsel %vm483, 1, 0
        %v740 = vsel %vm484, 1, 0
        %v741 = vsel %vm485, 1, 0
        %v742 = vsel %vm486, 1, 0
        %v743 = vsel %vm487, 1, 0
        %v744 = vsel %vm488, 1, 0
        %v745 = vsel %vm489, 1, 0
        %v746 = vsel %vm490, 1, 0
        %v747 = vsel %vm491, 1, 0
        %v748 = vsel %vm492, 1, 0
        %v749 = vsel %vm493, 1, 0
        %v750 = vsel %vm494, 1, 0
        %v751 = vsel %vm495, 1, 0
        %v752 = vsel %vm496, 1, 0
        %v753 = vsel %vm497, 1, 0
        %v754 = vsel %vm498, 1, 0
        %v755 = vsel %vm499, 1, 0
        %v756 = vsel %vm500, 1, 0
        %v757 = vsel %vm501, 1, 0
        %v758 = vsel %vm502, 1, 0
        %v759 = vsel %vm503, 1, 0
        %v760 = vsel %vm504, 1, 0
        %v761 = vsel %vm505, 1, 0
        %v762 = vsel %vm506, 1, 0
        %v763 = vsel %vm507, 1, 0
        %v764 = vsel %vm508, 1, 0
        %v765 = vsel %vm509, 1, 0
        %v766 = vsel %vm510, 1, 0
        %v767 = vsel %vm511, 1, 0
        %v768 = vsel %vm512, 1, 0
        %v769 = vsel %vm513, 1, 0
        %v770 = vsel %vm514, 1, 0
        %v771 = vsel %vm515, 1, 0
        %v772 = vsel %vm516, 1, 0
        %v773 = vsel %vm517, 1, 0
        %v774 = vsel %vm518, 1, 0
        %v775 = vsel %vm519, 1, 0
        %v776 = vsel %vm520, 1, 0
        %v777 = vsel %vm521, 1, 0
        %v778 = vsel %vm522, 1, 0
        %v779 = vsel %vm523, 1, 0
        %v780 = vsel %vm524, 1, 0
        %v781 = vsel %vm525, 1, 0
        %v782 = vsel %vm526, 1, 0
        %v783 = vsel %vm527, 1, 0
        %v784 = vsel %vm528, 1, 0
        %v785 = vsel %vm529, 1, 0
        %v786 = vsel %vm530, 1, 0
        %v787 = vsel %vm531, 1, 0
        %v788 = vsel %vm532, 1, 0
        %v789 = vsel %vm533, 1, 0
        %v790 = vsel %vm534, 1, 0
        %v791 = vsel %vm535, 1, 0
        %v792 = vsel %vm536, 1, 0
        %v793 = vsel %vm537, 1, 0
        %v794 = vsel %vm538, 1, 0
        %v795 = vsel %vm539, 1, 0
        %v796 = vsel %vm540, 1, 0
        %v797 = vsel %vm541, 1, 0
        %v798 = vsel %vm542, 1, 0
        %v799 = vsel %vm543, 1, 0
        %v800 = vsel %vm544, 1, 0
        %v801 = vsel %vm545, 1, 0
        %v802 = vsel %vm546, 1, 0
        %v803 = vsel %vm547, 1, 0
        %v804 = vsel %vm548, 1, 0
        %v805 = vsel %vm549, 1, 0
        %v806 = vsel %vm550, 1, 0
        %v807 = vsel %vm551, 1, 0
        %v808 = vsel %vm552, 1, 0
        %v809 = vsel %vm553, 1, 0
        %v810 = vsel %vm554, 1, 0
        %v811 = vsel %vm555, 1, 0
        %v812 = vsel %vm556, 1, 0
        %v813 = vsel %vm557, 1, 0
        %v814 = vsel %vm558, 1, 0
        %v815 = vsel %vm559, 1, 0
        %v816 = vsel %vm560, 1, 0
        %v817 = vsel %vm561, 1, 0
        %v818 = vsel %vm562, 1, 0
        %v819 = vsel %vm563, 1, 0
        %v820 = vsel %vm564, 1, 0
        %v821 = vsel %vm565, 1, 0
        %v822 = vsel %vm566, 1, 0
        %v823 = vsel %vm567, 1, 0
        %v824 = vsel %vm568, 1, 0
        %v825 = vsel %vm569, 1, 0
        %v826 = vsel %vm570, 1, 0
        %v827 = vsel %vm571, 1, 0
        %v828 = vsel %vm572, 1, 0
        %v829 = vsel %vm573, 1, 0
        %v830 = vsel %vm574, 1, 0
        %v831 = vsel %vm575, 1, 0
        %v832 = vsel %vm576, 1, 0
        %v833 = vsel %vm577, 1, 0
        %v834 = vsel %vm578, 1, 0
        %v835 = vsel %vm579, 1, 0
        %v836 = vsel %vm580, 1, 0
        %v837 = vsel %vm581, 1, 0
        %v838 = vsel %vm582, 1, 0
        %v839 = vsel %vm583, 1, 0
        %v840 = vsel %vm584, 1, 0
        %v841 = vsel %vm585, 1, 0
        %v842 = vsel %vm586, 1, 0
        %v843 = vsel %vm587, 1, 0
        %v844 = vsel %vm588, 1, 0
        %v845 = vsel %vm589, 1, 0
        %v846 = vsel %vm590, 1, 0
        %v847 = vsel %vm591, 1, 0
        %v848 = vsel %vm592, 1, 0
        %v849 = vsel %vm593, 1, 0
        %v850 = vsel %vm594, 1, 0
        %v851 = vsel %vm595, 1, 0
        %v852 = vsel %vm596, 1, 0
        %v853 = vsel %vm597, 1, 0
        %v854 = vsel %vm598, 1, 0
        %v855 = vsel %vm599, 1, 0
        %v856 = vsel %vm600, 1, 0
        %v857 = vsel %vm601, 1, 0
        %v858 = vsel %vm602, 1, 0
        %v859 = vsel %vm603, 1, 0
        %v860 = vsel %vm604, 1, 0
        %v861 = vsel %vm605, 1, 0
        %v862 = vsel %vm606, 1, 0
        %v863 = vsel %vm607, 1, 0
        %v864 = vsel %vm608, 1, 0
        %v865 = vsel %vm609, 1, 0
        %v866 = vsel %vm610, 1, 0
        %v867 = vsel %vm611, 1, 0
        %v868 = vsel %vm612, 1, 0
        %v869 = vsel %vm613, 1, 0
        %v870 = vsel %vm614, 1, 0
        %v871 = vsel %vm615, 1, 0
        %v872 = vsel %vm616, 1, 0
        %v873 = vsel %vm617, 1, 0
        %v874 = vsel %vm618, 1, 0
        %v875 = vsel %vm619, 1, 0
        %v876 = vsel %vm620, 1, 0
        %v877 = vsel %vm621, 1, 0
        %v878 = vsel %vm622, 1, 0
        %v879 = vsel %vm623, 1, 0
        %v880 = vsel %vm624, 1, 0
        %v881 = vsel %vm625, 1, 0
        %v882 = vsel %vm626, 1, 0
        %v883 = vsel %vm627, 1, 0
        %v884 = vsel %vm628, 1, 0
        %v885 = vsel %vm629, 1, 0
        %v886 = vsel %vm630, 1, 0
        %v887 = vsel %vm631, 1, 0
        %v888 = vsel %vm632, 1, 0
        %v889 = vsel %vm633, 1, 0
        %v890 = vsel %vm634, 1, 0
        %v891 = vsel %vm635, 1, 0
        %v892 = vsel %vm636, 1, 0
        %v893 = vsel %vm637, 1, 0
        %v894 = vsel %vm638, 1, 0
        %v895 = vsel %vm639, 1, 0
        %v896 = vsel %vm640, 1, 0
        %v897 = vsel %vm641, 1, 0
        %v898 = vsel %vm642, 1, 0
        %v899 = vsel %vm643, 1, 0
        %v900 = vsel %vm644, 1, 0
        %v901 = vsel %vm645, 1, 0
        %v902 = vsel %vm646, 1, 0
        %v903 = vsel %vm647, 1, 0
        %v904 = vsel %vm648, 1, 0
        %v905 = vsel %vm649, 1, 0
        %v906 = vsel %vm650, 1, 0
        %v907 = vsel %vm651, 1, 0
        %v908 = vsel %vm652, 1, 0
        %v909 = vsel %vm653, 1, 0
        %v910 = vsel %vm654, 1, 0
        %v911 = vsel %vm655, 1, 0
        %v912 = vsel %vm656, 1, 0
        %v913 = vsel %vm657, 1, 0
        %v914 = vsel %vm658, 1, 0
        %v915 = vsel %vm659, 1, 0
        %v916 = vsel %vm660, 1, 0
        %v917 = vsel %vm661, 1, 0
        %v918 = vsel %vm662, 1, 0
        %v919 = vsel %vm663, 1, 0
        %v920 = vsel %vm664, 1, 0
        %v921 = vsel %vm665, 1, 0
        %v922 = vsel %vm666, 1, 0
        %v923 = vsel %vm667, 1, 0
        %v924 = vsel %vm668, 1, 0
        %v925 = vsel %vm669, 1, 0
        %v926 = vsel %vm670, 1, 0
        %v927 = vsel %vm671, 1, 0
        %v928 = vsel %vm672, 1, 0
        %v929 = vsel %vm673, 1, 0
        %v930 = vsel %vm674, 1, 0
        %v931 = vsel %vm675, 1, 0
        %v932 = vsel %vm676, 1, 0
        %v933 = vsel %vm677, 1, 0
        %v934 = vsel %vm678, 1, 0
        %v935 = vsel %vm679, 1, 0
        %v936 = vsel %vm680, 1, 0
        %v937 = vsel %vm681, 1, 0
        %v938 = vsel %vm682, 1, 0
        %v939 = vsel %vm683, 1, 0
        %v940 = vsel %vm684, 1, 0
        %v941 = vsel %vm685, 1, 0
        %v942 = vsel %vm686, 1, 0
        %v943 = vsel %vm687, 1, 0
        %v944 = vsel %vm688, 1, 0
        %v945 = vsel %vm689, 1, 0
        %v946 = vcvt.s32.f32 %v690
        %v947 = vcvt.s32.f32 %v691
        %v948 = vcvt.s32.f32 %v692
        %v949 = vcvt.s32.f32 %v693
        %v950 = vcvt.s32.f32 %v694
        %v951 = vcvt.s32.f32 %v695
        %v952 = vcvt.s32.f32 %v696
        %v953 = vcvt.s32.f32 %v697
        %v954 = vcvt.s32.f32 %v698
        %v955 = vcvt.s32.f32 %v699
        %v956 = vcvt.s32.f32 %v700
        %v957 = vcvt.s32.f32 %v701
        %v958 = vcvt.s32.f32 %v702
        %v959 = vcvt.s32.f32 %v703
        %v960 = vcvt.s32.f32 %v704
        %v961 = vcvt.s32.f32 %v705
        %v962 = vcvt.s32.f32 %v706
        %v963 = vcvt.s32.f32 %v707
        %v964 = vcvt.s32.f32 %v708
        %v965 = vcvt.s32.f32 %v709
        %v966 = vcvt.s32.f32 %v710
        %v967 = vcvt.s32.f32 %v711
        %v968 = vcvt.s32.f32 %v712
        %v969 = vcvt.s32.f32 %v713
        %v970 = vcvt.s32.f32 %v714
        %v971 = vcvt.s32.f32 %v715
        %v972 = vcvt.s32.f32 %v716
        %v973 = vcvt.s32.f32 %v717
        %v974 = vcvt.s32.f32 %v718
        %v975 = vcvt.s32.f32 %v719
        %v976 = vcvt.s32.f32 %v720
        %v977 = vcvt.s32.f32 %v721
        %v978 = vcvt.s32.f32 %v722
        %v979 = vcvt.s32.f32 %v723
        %v980 = vcvt.s32.f32 %v724
        %v981 = vcvt.s32.f32 %v725
        %v982 = vcvt.s32.f32 %v726
        %v983 = vcvt.s32.f32 %v727
        %v984 = vcvt.s32.f32 %v728
        %v985 = vcvt.s32.f32 %v729
        %v986 = vcvt.s32.f32 %v730
        %v987 = vcvt.s32.f32 %v731
        %v988 = vcvt.s32.f32 %v732
        %v989 = vcvt.s32.f32 %v733
        %v990 = vcvt.s32.f32 %v734
        %v991 = vcvt.s32.f32 %v735
        %v992 = vcvt.s32.f32 %v736
        %v993 = vcvt.s32.f32 %v737
        %v994 = vcvt.s32.f32 %v738
        %v995 = vcvt.s32.f32 %v739
        %v996 = vcvt.s32.f32 %v740
        %v997 = vcvt.s32.f32 %v741
        %v998 = vcvt.s32.f32 %v742
        %v999 = vcvt.s32.f32 %v743
        %v1000 = vcvt.s32.f32 %v744
        %v1001 = vcvt.s32.f32 %v745
        %v1002 = vcvt.s32.f32 %v746
        %v1003 = vcvt.s32.f32 %v747
        %v1004 = vcvt.s32.f32 %v748
        %v1005 = vcvt.s32.f32 %v749
        %v1006 = vcvt.s32.f32 %v750
        %v1007 = vcvt.s32.f32 %v751
        %v1008 = vcvt.s32.f32 %v752
        %v1009 = vcvt.s32.f32 %v753
        %v1010 = vcvt.s32.f32 %v754
        %v1011 = vcvt.s32.f32 %v755
        %v1012 = vcvt.s32.f32 %v756
        %v1013 = vcvt.s32.f32 %v757
        %v1014 = vcvt.s32.f32 %v758
        %v1015 = vcvt.s32.f32 %v759
        %v1016 = vcvt.s32.f32 %v760
        %v1017 = vcvt.s32.f32 %v761
        %v1018 = vcvt.s32.f32 %v762
        %v1019 = vcvt.s32.f32 %v763
        %v1020 = vcvt.s32.f32 %v764
        %v1021 = vcvt.s32.f32 %v765
        %v1022 = vcvt.s32.f32 %v766
        %v1023 = vcvt.s32.f32 %v767
        %v1024 = vcvt.s32.f32 %v768
        %v1025 = vcvt.s32.f32 %v769
        %v1026 = vcvt.s32.f32 %v770
        %v1027 = vcvt.s32.f32 %v771
        %v1028 = vcvt.s32.f32 %v772
        %v1029 = vcvt.s32.f32 %v773
        %v1030 = vcvt.s32.f32 %v774
        %v1031 = vcvt.s32.f32 %v775
        %v1032 = vcvt.s32.f32 %v776
        %v1033 = vcvt.s32.f32 %v777
        %v1034 = vcvt.s32.f32 %v778
        %v1035 = vcvt.s32.f32 %v779
        %v1036 = vcvt.s32.f32 %v780
        %v1037 = vcvt.s32.f32 %v781
        %v1038 = vcvt.s32.f32 %v782
        %v1039 = vcvt.s32.f32 %v783
        %v1040 = vcvt.s32.f32 %v784
        %v1041 = vcvt.s32.f32 %v785
        %v1042 = vcvt.s32.f32 %v786
        %v1043 = vcvt.s32.f32 %v787
        %v1044 = vcvt.s32.f32 %v788
        %v1045 = vcvt.s32.f32 %v789
        %v1046 = vcvt.s32.f32 %v790
        %v1047 = vcvt.s32.f32 %v791
        %v1048 = vcvt.s32.f32 %v792
        %v1049 = vcvt.s32.f32 %v793
        %v1050 = vcvt.s32.f32 %v794
        %v1051 = vcvt.s32.f32 %v795
        %v1052 = vcvt.s32.f32 %v796
        %v1053 = vcvt.s32.f32 %v797
        %v1054 = vcvt.s32.f32 %v798
        %v1055 = vcvt.s32.f32 %v799
        %v1056 = vcvt.s32.f32 %v800
        %v1057 = vcvt.s32.f32 %v801
        %v1058 = vcvt.s32.f32 %v802
        %v1059 = vcvt.s32.f32 %v803
        %v1060 = vcvt.s32.f32 %v804
        %v1061 = vcvt.s32.f32 %v805
        %v1062 = vcvt.s32.f32 %v806
        %v1063 = vcvt.s32.f32 %v807
        %v1064 = vcvt.s32.f32 %v808
        %v1065 = vcvt.s32.f32 %v809
        %v1066 = vcvt.s32.f32 %v810
        %v1067 = vcvt.s32.f32 %v811
        %v1068 = vcvt.s32.f32 %v812
        %v1069 = vcvt.s32.f32 %v813
        %v1070 = vcvt.s32.f32 %v814
        %v1071 = vcvt.s32.f32 %v815
        %v1072 = vcvt.s32.f32 %v816
        %v1073 = vcvt.s32.f32 %v817
        %v1074 = vcvt.s32.f32 %v818
        %v1075 = vcvt.s32.f32 %v819
        %v1076 = vcvt.s32.f32 %v820
        %v1077 = vcvt.s32.f32 %v821
        %v1078 = vcvt.s32.f32 %v822
        %v1079 = vcvt.s32.f32 %v823
        %v1080 = vcvt.s32.f32 %v824
        %v1081 = vcvt.s32.f32 %v825
        %v1082 = vcvt.s32.f32 %v826
        %v1083 = vcvt.s32.f32 %v827
        %v1084 = vcvt.s32.f32 %v828
        %v1085 = vcvt.s32.f32 %v829
        %v1086 = vcvt.s32.f32 %v830
        %v1087 = vcvt.s32.f32 %v831
        %v1088 = vcvt.s32.f32 %v832
        %v1089 = vcvt.s32.f32 %v833
        %v1090 = vcvt.s32.f32 %v834
        %v1091 = vcvt.s32.f32 %v835
        %v1092 = vcvt.s32.f32 %v836
        %v1093 = vcvt.s32.f32 %v837
        %v1094 = vcvt.s32.f32 %v838
        %v1095 = vcvt.s32.f32 %v839
        %v1096 = vcvt.s32.f32 %v840
        %v1097 = vcvt.s32.f32 %v841
        %v1098 = vcvt.s32.f32 %v842
        %v1099 = vcvt.s32.f32 %v843
        %v1100 = vcvt.s32.f32 %v844
        %v1101 = vcvt.s32.f32 %v845
        %v1102 = vcvt.s32.f32 %v846
        %v1103 = vcvt.s32.f32 %v847
        %v1104 = vcvt.s32.f32 %v848
        %v1105 = vcvt.s32.f32 %v849
        %v1106 = vcvt.s32.f32 %v850
        %v1107 = vcvt.s32.f32 %v851
        %v1108 = vcvt.s32.f32 %v852
        %v1109 = vcvt.s32.f32 %v853
        %v1110 = vcvt.s32.f32 %v854
        %v1111 = vcvt.s32.f32 %v855
        %v1112 = vcvt.s32.f32 %v856
        %v1113 = vcvt.s32.f32 %v857
        %v1114 = vcvt.s32.f32 %v858
        %v1115 = vcvt.s32.f32 %v859
        %v1116 = vcvt.s32.f32 %v860
        %v1117 = vcvt.s32.f32 %v861
        %v1118 = vcvt.s32.f32 %v862
        %v1119 = vcvt.s32.f32 %v863
        %v1120 = vcvt.s32.f32 %v864
        %v1121 = vcvt.s32.f32 %v865
        %v1122 = vcvt.s32.f32 %v866
        %v1123 = vcvt.s32.f32 %v867
        %v1124 = vcvt.s32.f32 %v868
        %v1125 = vcvt.s32.f32 %v869
        %v1126 = vcvt.s32.f32 %v870
        %v1127 = vcvt.s32.f32 %v871
        %v1128 = vcvt.s32.f32 %v872
        %v1129 = vcvt.s32.f32 %v873
        %v1130 = vcvt.s32.f32 %v874
        %v1131 = vcvt.s32.f32 %v875
        %v1132 = vcvt.s32.f32 %v876
        %v1133 = vcvt.s32.f32 %v877
        %v1134 = vcvt.s32.f32 %v878
        %v1135 = vcvt.s32.f32 %v879
        %v1136 = vcvt.s32.f32 %v880
        %v1137 = vcvt.s32.f32 %v881
        %v1138 = vcvt.s32.f32 %v882
        %v1139 = vcvt.s32.f32 %v883
        %v1140 = vcvt.s32.f32 %v884
        %v1141 = vcvt.s32.f32 %v885
        %v1142 = vcvt.s32.f32 %v886
        %v1143 = vcvt.s32.f32 %v887
        %v1144 = vcvt.s32.f32 %v888
        %v1145 = vcvt.s32.f32 %v889
        %v1146 = vcvt.s32.f32 %v890
        %v1147 = vcvt.s32.f32 %v891
        %v1148 = vcvt.s32.f32 %v892
        %v1149 = vcvt.s32.f32 %v893
        %v1150 = vcvt.s32.f32 %v894
        %v1151 = vcvt.s32.f32 %v895
        %v1152 = vcvt.s32.f32 %v896
        %v1153 = vcvt.s32.f32 %v897
        %v1154 = vcvt.s32.f32 %v898
        %v1155 = vcvt.s32.f32 %v899
        %v1156 = vcvt.s32.f32 %v900
        %v1157 = vcvt.s32.f32 %v901
        %v1158 = vcvt.s32.f32 %v902
        %v1159 = vcvt.s32.f32 %v903
        %v1160 = vcvt.s32.f32 %v904
        %v1161 = vcvt.s32.f32 %v905
        %v1162 = vcvt.s32.f32 %v906
        %v1163 = vcvt.s32.f32 %v907
        %v1164 = vcvt.s32.f32 %v908
        %v1165 = vcvt.s32.f32 %v909
        %v1166 = vcvt.s32.f32 %v910
        %v1167 = vcvt.s32.f32 %v911
        %v1168 = vcvt.s32.f32 %v912
        %v1169 = vcvt.s32.f32 %v913
        %v1170 = vcvt.s32.f32 %v914
        %v1171 = vcvt.s32.f32 %v915
        %v1172 = vcvt.s32.f32 %v916
        %v1173 = vcvt.s32.f32 %v917
        %v1174 = vcvt.s32.f32 %v918
        %v1175 = vcvt.s32.f32 %v919
        %v1176 = vcvt.s32.f32 %v920
        %v1177 = vcvt.s32.f32 %v921
        %v1178 = vcvt.s32.f32 %v922
        %v1179 = vcvt.s32.f32 %v923
        %v1180 = vcvt.s32.f32 %v924
        %v1181 = vcvt.s32.f32 %v925
        %v1182 = vcvt.s32.f32 %v926
        %v1183 = vcvt.s32.f32 %v927
        %v1184 = vcvt.s32.f32 %v928
        %v1185 = vcvt.s32.f32 %v929
        %v1186 = vcvt.s32.f32 %v930
        %v1187 = vcvt.s32.f32 %v931
        %v1188 = vcvt.s32.f32 %v932
        %v1189 = vcvt.s32.f32 %v933
        %v1190 = vcvt.s32.f32 %v934
        %v1191 = vcvt.s32.f32 %v935
        %v1192 = vcvt.s32.f32 %v936
        %v1193 = vcvt.s32.f32 %v937
        %v1194 = vcvt.s32.f32 %v938
        %v1195 = vcvt.s32.f32 %v939
        %v1196 = vcvt.s32.f32 %v940
        %v1197 = vcvt.s32.f32 %v941
        %v1198 = vcvt.s32.f32 %v942
        %v1199 = vcvt.s32.f32 %v943
        %v1200 = vcvt.s32.f32 %v944
        %v1201 = vcvt.s32.f32 %v945
        %v1202 = vpack.c.bf16 %v950, %v946
        %v1203 = vpack.c.bf16 %v951, %v947
        %v1204 = vpack.c.bf16 %v952, %v948
        %v1205 = vpack.c.bf16 %v953, %v949
        %v1206 = vpack.c.bf16 %v958, %v954
        %v1207 = vpack.c.bf16 %v959, %v955
        %v1208 = vpack.c.bf16 %v960, %v956
        %v1209 = vpack.c.bf16 %v961, %v957
        %v1210 = vpack.c.bf16 %v966, %v962
        %v1211 = vpack.c.bf16 %v967, %v963
        %v1212 = vpack.c.bf16 %v968, %v964
        %v1213 = vpack.c.bf16 %v969, %v965
        %v1214 = vpack.c.bf16 %v974, %v970
        %v1215 = vpack.c.bf16 %v975, %v971
        %v1216 = vpack.c.bf16 %v976, %v972
        %v1217 = vpack.c.bf16 %v977, %v973
        %v1218 = vpack.c.bf16 %v982, %v978
        %v1219 = vpack.c.bf16 %v983, %v979
        %v1220 = vpack.c.bf16 %v984, %v980
        %v1221 = vpack.c.bf16 %v985, %v981
        %v1222 = vpack.c.bf16 %v990, %v986
        %v1223 = vpack.c.bf16 %v991, %v987
        %v1224 = vpack.c.bf16 %v992, %v988
        %v1225 = vpack.c.bf16 %v993, %v989
        %v1226 = vpack.c.bf16 %v998, %v994
        %v1227 = vpack.c.bf16 %v999, %v995
        %v1228 = vpack.c.bf16 %v1000, %v996
        %v1229 = vpack.c.bf16 %v1001, %v997
        %v1230 = vpack.c.bf16 %v1006, %v1002
        %v1231 = vpack.c.bf16 %v1007, %v1003
        %v1232 = vpack.c.bf16 %v1008, %v1004
        %v1233 = vpack.c.bf16 %v1009, %v1005
        %v1234 = vpack.c.bf16 %v1014, %v1010
        %v1235 = vpack.c.bf16 %v1015, %v1011
        %v1236 = vpack.c.bf16 %v1016, %v1012
        %v1237 = vpack.c.bf16 %v1017, %v1013
        %v1238 = vpack.c.bf16 %v1022, %v1018
        %v1239 = vpack.c.bf16 %v1023, %v1019
        %v1240 = vpack.c.bf16 %v1024, %v1020
        %v1241 = vpack.c.bf16 %v1025, %v1021
        %v1242 = vpack.c.bf16 %v1030, %v1026
        %v1243 = vpack.c.bf16 %v1031, %v1027
        %v1244 = vpack.c.bf16 %v1032, %v1028
        %v1245 = vpack.c.bf16 %v1033, %v1029
        %v1246 = vpack.c.bf16 %v1038, %v1034
        %v1247 = vpack.c.bf16 %v1039, %v1035
        %v1248 = vpack.c.bf16 %v1040, %v1036
        %v1249 = vpack.c.bf16 %v1041, %v1037
        %v1250 = vpack.c.bf16 %v1046, %v1042
        %v1251 = vpack.c.bf16 %v1047, %v1043
        %v1252 = vpack.c.bf16 %v1048, %v1044
        %v1253 = vpack.c.bf16 %v1049, %v1045
        %v1254 = vpack.c.bf16 %v1054, %v1050
        %v1255 = vpack.c.bf16 %v1055, %v1051
        %v1256 = vpack.c.bf16 %v1056, %v1052
        %v1257 = vpack.c.bf16 %v1057, %v1053
        %v1258 = vpack.c.bf16 %v1062, %v1058
        %v1259 = vpack.c.bf16 %v1063, %v1059
        %v1260 = vpack.c.bf16 %v1064, %v1060
        %v1261 = vpack.c.bf16 %v1065, %v1061
        %v1262 = vpack.c.bf16 %v1070, %v1066
        %v1263 = vpack.c.bf16 %v1071, %v1067
        %v1264 = vpack.c.bf16 %v1072, %v1068
        %v1265 = vpack.c.bf16 %v1073, %v1069
        %v1266 = vpack.c.bf16 %v1078, %v1074
        %v1267 = vpack.c.bf16 %v1079, %v1075
        %v1268 = vpack.c.bf16 %v1080, %v1076
        %v1269 = vpack.c.bf16 %v1081, %v1077
        %v1270 = vpack.c.bf16 %v1086, %v1082
        %v1271 = vpack.c.bf16 %v1087, %v1083
        %v1272 = vpack.c.bf16 %v1088, %v1084
        %v1273 = vpack.c.bf16 %v1089, %v1085
        %v1274 = vpack.c.bf16 %v1094, %v1090
        %v1275 = vpack.c.bf16 %v1095, %v1091
        %v1276 = vpack.c.bf16 %v1096, %v1092
        %v1277 = vpack.c.bf16 %v1097, %v1093
        %v1278 = vpack.c.bf16 %v1102, %v1098
        %v1279 = vpack.c.bf16 %v1103, %v1099
        %v1280 = vpack.c.bf16 %v1104, %v1100
        %v1281 = vpack.c.bf16 %v1105, %v1101
        %v1282 = vpack.c.bf16 %v1110, %v1106
        %v1283 = vpack.c.bf16 %v1111, %v1107
        %v1284 = vpack.c.bf16 %v1112, %v1108
        %v1285 = vpack.c.bf16 %v1113, %v1109
        %v1286 = vpack.c.bf16 %v1118, %v1114
        %v1287 = vpack.c.bf16 %v1119, %v1115
        %v1288 = vpack.c.bf16 %v1120, %v1116
        %v1289 = vpack.c.bf16 %v1121, %v1117
        %v1290 = vpack.c.bf16 %v1126, %v1122
        %v1291 = vpack.c.bf16 %v1127, %v1123
        %v1292 = vpack.c.bf16 %v1128, %v1124
        %v1293 = vpack.c.bf16 %v1129, %v1125
        %v1294 = vpack.c.bf16 %v1134, %v1130
        %v1295 = vpack.c.bf16 %v1135, %v1131
        %v1296 = vpack.c.bf16 %v1136, %v1132
        %v1297 = vpack.c.bf16 %v1137, %v1133
        %v1298 = vpack.c.bf16 %v1142, %v1138
        %v1299 = vpack.c.bf16 %v1143, %v1139
        %v1300 = vpack.c.bf16 %v1144, %v1140
        %v1301 = vpack.c.bf16 %v1145, %v1141
        %v1302 = vpack.c.bf16 %v1150, %v1146
        %v1303 = vpack.c.bf16 %v1151, %v1147
        %v1304 = vpack.c.bf16 %v1152, %v1148
        %v1305 = vpack.c.bf16 %v1153, %v1149
        %v1306 = vpack.c.bf16 %v1158, %v1154
        %v1307 = vpack.c.bf16 %v1159, %v1155
        %v1308 = vpack.c.bf16 %v1160, %v1156
        %v1309 = vpack.c.bf16 %v1161, %v1157
        %v1310 = vpack.c.bf16 %v1166, %v1162
        %v1311 = vpack.c.bf16 %v1167, %v1163
        %v1312 = vpack.c.bf16 %v1168, %v1164
        %v1313 = vpack.c.bf16 %v1169, %v1165
        %v1314 = vpack.c.bf16 %v1174, %v1170
        %v1315 = vpack.c.bf16 %v1175, %v1171
        %v1316 = vpack.c.bf16 %v1176, %v1172
        %v1317 = vpack.c.bf16 %v1177, %v1173
        %v1318 = vpack.c.bf16 %v1182, %v1178
        %v1319 = vpack.c.bf16 %v1183, %v1179
        %v1320 = vpack.c.bf16 %v1184, %v1180
        %v1321 = vpack.c.bf16 %v1185, %v1181
        %v1322 = vpack.c.bf16 %v1190, %v1186
        %v1323 = vpack.c.bf16 %v1191, %v1187
        %v1324 = vpack.c.bf16 %v1192, %v1188
        %v1325 = vpack.c.bf16 %v1193, %v1189
        %v1326 = vpack.c.bf16 %v1198, %v1194
        %v1327 = vpack.c.bf16 %v1199, %v1195
        %v1328 = vpack.c.bf16 %v1200, %v1196
        %v1329 = vpack.c.bf16 %v1201, %v1197
        %v1330 = vld [vmem:[%s1] sm:$0xf]
        %v1331 = vld [vmem:[%s1 + $0x4] sm:$0xf]
        %v1332 = vld [vmem:[%s1 + $0x8] sm:$0xf]
        %v1333 = vld [vmem:[%s1 + $0xc] sm:$0xf]
        %v1334 = vld [vmem:[%s1 + $0x10] sm:$0xf]
        %v1335 = vld [vmem:[%s1 + $0x14] sm:$0xf]
        %v1336 = vld [vmem:[%s1 + $0x18] sm:$0xf]
        %v1337 = vld [vmem:[%s1 + $0x1c] sm:$0xf]
        %v1338 = vld [vmem:[%s1 + $0x20] sm:$0xf]
        %v1339 = vld [vmem:[%s1 + $0x24] sm:$0xf]
        %v1340 = vld [vmem:[%s1 + $0x28] sm:$0xf]
        %v1341 = vld [vmem:[%s1 + $0x2c] sm:$0xf]
        %v1342 = vld [vmem:[%s1 + $0x30] sm:$0xf]
        %v1343 = vld [vmem:[%s1 + $0x34] sm:$0xf]
        %v1344 = vld [vmem:[%s1 + $0x38] sm:$0xf]
        %v1345 = vld [vmem:[%s1 + $0x3c] sm:$0xf]
        %v1346 = vld [vmem:[%s1 + $0x40] sm:$0xf]
        %v1347 = vld [vmem:[%s1 + $0x44] sm:$0xf]
        %v1348 = vld [vmem:[%s1 + $0x48] sm:$0xf]
        %v1349 = vld [vmem:[%s1 + $0x4c] sm:$0xf]
        %v1350 = vld [vmem:[%s1 + $0x50] sm:$0xf]
        %v1351 = vld [vmem:[%s1 + $0x54] sm:$0xf]
        %v1352 = vld [vmem:[%s1 + $0x58] sm:$0xf]
        %v1353 = vld [vmem:[%s1 + $0x5c] sm:$0xf]
        %v1354 = vld [vmem:[%s1 + $0x60] sm:$0xf]
        %v1355 = vld [vmem:[%s1 + $0x64] sm:$0xf]
        %v1356 = vld [vmem:[%s1 + $0x68] sm:$0xf]
        %v1357 = vld [vmem:[%s1 + $0x6c] sm:$0xf]
        %v1358 = vld [vmem:[%s1 + $0x70] sm:$0xf]
        %v1359 = vld [vmem:[%s1 + $0x74] sm:$0xf]
        %v1360 = vld [vmem:[%s1 + $0x78] sm:$0xf]
        %v1361 = vld [vmem:[%s1 + $0x7c] sm:$0xf]
        %v1362 = vld [vmem:[%s1 + $0x80] sm:$0xf]
        %v1363 = vld [vmem:[%s1 + $0x84] sm:$0xf]
        %v1364 = vld [vmem:[%s1 + $0x88] sm:$0xf]
        %v1365 = vld [vmem:[%s1 + $0x8c] sm:$0xf]
        %v1366 = vld [vmem:[%s1 + $0x90] sm:$0xf]
        %v1367 = vld [vmem:[%s1 + $0x94] sm:$0xf]
        %v1368 = vld [vmem:[%s1 + $0x98] sm:$0xf]
        %v1369 = vld [vmem:[%s1 + $0x9c] sm:$0xf]
        %v1370 = vld [vmem:[%s1 + $0xa0] sm:$0xf]
        %v1371 = vld [vmem:[%s1 + $0xa4] sm:$0xf]
        %v1372 = vld [vmem:[%s1 + $0xa8] sm:$0xf]
        %v1373 = vld [vmem:[%s1 + $0xac] sm:$0xf]
        %v1374 = vld [vmem:[%s1 + $0xb0] sm:$0xf]
        %v1375 = vld [vmem:[%s1 + $0xb4] sm:$0xf]
        %v1376 = vld [vmem:[%s1 + $0xb8] sm:$0xf]
        %v1377 = vld [vmem:[%s1 + $0xbc] sm:$0xf]
        %v1378 = vld [vmem:[%s1 + $0xc0] sm:$0xf]
        %v1379 = vld [vmem:[%s1 + $0xc4] sm:$0xf]
        %v1380 = vld [vmem:[%s1 + $0xc8] sm:$0xf]
        %v1381 = vld [vmem:[%s1 + $0xcc] sm:$0xf]
        %v1382 = vld [vmem:[%s1 + $0xd0] sm:$0xf]
        %v1383 = vld [vmem:[%s1 + $0xd4] sm:$0xf]
        %v1384 = vld [vmem:[%s1 + $0xd8] sm:$0xf]
        %v1385 = vld [vmem:[%s1 + $0xdc] sm:$0xf]
        %v1386 = vld [vmem:[%s1 + $0xe0] sm:$0xf]
        %v1387 = vld [vmem:[%s1 + $0xe4] sm:$0xf]
        %v1388 = vld [vmem:[%s1 + $0xe8] sm:$0xf]
        %v1389 = vld [vmem:[%s1 + $0xec] sm:$0xf]
        %v1390 = vld [vmem:[%s1 + $0xf0] sm:$0xf]
        %v1391 = vld [vmem:[%s1 + $0xf4] sm:$0xf]
        %v1392 = vld [vmem:[%s1 + $0xf8] sm:$0xf]
        %v1393 = vld [vmem:[%s1 + $0xfc] sm:$0xf]
        %v1394 = vld [vmem:[%s2] sm:$0xf]
        %v1395 = vld [vmem:[%s2 + $0x4] sm:$0xf]
        %v1396 = vld [vmem:[%s2 + $0x8] sm:$0xf]
        %v1397 = vld [vmem:[%s2 + $0xc] sm:$0xf]
        %v1398 = vld [vmem:[%s2 + $0x10] sm:$0xf]
        %v1399 = vld [vmem:[%s2 + $0x14] sm:$0xf]
        %v1400 = vld [vmem:[%s2 + $0x18] sm:$0xf]
        %v1401 = vld [vmem:[%s2 + $0x1c] sm:$0xf]
        %v1402 = vld [vmem:[%s2 + $0x20] sm:$0xf]
        %v1403 = vld [vmem:[%s2 + $0x24] sm:$0xf]
        %v1404 = vld [vmem:[%s2 + $0x28] sm:$0xf]
        %v1405 = vld [vmem:[%s2 + $0x2c] sm:$0xf]
        %v1406 = vld [vmem:[%s2 + $0x30] sm:$0xf]
        %v1407 = vld [vmem:[%s2 + $0x34] sm:$0xf]
        %v1408 = vld [vmem:[%s2 + $0x38] sm:$0xf]
        %v1409 = vld [vmem:[%s2 + $0x3c] sm:$0xf]
        %v1410 = vld [vmem:[%s2 + $0x40] sm:$0xf]
        %v1411 = vld [vmem:[%s2 + $0x44] sm:$0xf]
        %v1412 = vld [vmem:[%s2 + $0x48] sm:$0xf]
        %v1413 = vld [vmem:[%s2 + $0x4c] sm:$0xf]
        %v1414 = vld [vmem:[%s2 + $0x50] sm:$0xf]
        %v1415 = vld [vmem:[%s2 + $0x54] sm:$0xf]
        %v1416 = vld [vmem:[%s2 + $0x58] sm:$0xf]
        %v1417 = vld [vmem:[%s2 + $0x5c] sm:$0xf]
        %v1418 = vld [vmem:[%s2 + $0x60] sm:$0xf]
        %v1419 = vld [vmem:[%s2 + $0x64] sm:$0xf]
        %v1420 = vld [vmem:[%s2 + $0x68] sm:$0xf]
        %v1421 = vld [vmem:[%s2 + $0x6c] sm:$0xf]
        %v1422 = vld [vmem:[%s2 + $0x70] sm:$0xf]
        %v1423 = vld [vmem:[%s2 + $0x74] sm:$0xf]
        %v1424 = vld [vmem:[%s2 + $0x78] sm:$0xf]
        %v1425 = vld [vmem:[%s2 + $0x7c] sm:$0xf]
        %v1426 = vld [vmem:[%s2 + $0x80] sm:$0xf]
        %v1427 = vld [vmem:[%s2 + $0x84] sm:$0xf]
        %v1428 = vld [vmem:[%s2 + $0x88] sm:$0xf]
        %v1429 = vld [vmem:[%s2 + $0x8c] sm:$0xf]
        %v1430 = vld [vmem:[%s2 + $0x90] sm:$0xf]
        %v1431 = vld [vmem:[%s2 + $0x94] sm:$0xf]
        %v1432 = vld [vmem:[%s2 + $0x98] sm:$0xf]
        %v1433 = vld [vmem:[%s2 + $0x9c] sm:$0xf]
        %v1434 = vld [vmem:[%s2 + $0xa0] sm:$0xf]
        %v1435 = vld [vmem:[%s2 + $0xa4] sm:$0xf]
        %v1436 = vld [vmem:[%s2 + $0xa8] sm:$0xf]
        %v1437 = vld [vmem:[%s2 + $0xac] sm:$0xf]
        %v1438 = vld [vmem:[%s2 + $0xb0] sm:$0xf]
        %v1439 = vld [vmem:[%s2 + $0xb4] sm:$0xf]
        %v1440 = vld [vmem:[%s2 + $0xb8] sm:$0xf]
        %v1441 = vld [vmem:[%s2 + $0xbc] sm:$0xf]
        %v1442 = vld [vmem:[%s2 + $0xc0] sm:$0xf]
        %v1443 = vld [vmem:[%s2 + $0xc4] sm:$0xf]
        %v1444 = vld [vmem:[%s2 + $0xc8] sm:$0xf]
        %v1445 = vld [vmem:[%s2 + $0xcc] sm:$0xf]
        %v1446 = vld [vmem:[%s2 + $0xd0] sm:$0xf]
        %v1447 = vld [vmem:[%s2 + $0xd4] sm:$0xf]
        %v1448 = vld [vmem:[%s2 + $0xd8] sm:$0xf]
        %v1449 = vld [vmem:[%s2 + $0xdc] sm:$0xf]
        %v1450 = vld [vmem:[%s2 + $0xe0] sm:$0xf]
        %v1451 = vld [vmem:[%s2 + $0xe4] sm:$0xf]
        %v1452 = vld [vmem:[%s2 + $0xe8] sm:$0xf]
        %v1453 = vld [vmem:[%s2 + $0xec] sm:$0xf]
        %v1454 = vld [vmem:[%s2 + $0xf0] sm:$0xf]
        %v1455 = vld [vmem:[%s2 + $0xf4] sm:$0xf]
        %v1456 = vld [vmem:[%s2 + $0xf8] sm:$0xf]
        %v1457 = vld [vmem:[%s2 + $0xfc] sm:$0xf]
        %v1522 = vunpack.c.l.b16 %v1394
        %v1523 = vunpack.c.l.b16 %v1395
        %v1524 = vunpack.c.l.b16 %v1396
        %v1525 = vunpack.c.l.b16 %v1397
        %v1526 = vunpack.c.l.b16 %v1398
        %v1527 = vunpack.c.l.b16 %v1399
        %v1528 = vunpack.c.l.b16 %v1400
        %v1529 = vunpack.c.l.b16 %v1401
        %v1530 = vunpack.c.l.b16 %v1402
        %v1531 = vunpack.c.l.b16 %v1403
        %v1532 = vunpack.c.l.b16 %v1404
        %v1533 = vunpack.c.l.b16 %v1405
        %v1534 = vunpack.c.l.b16 %v1406
        %v1535 = vunpack.c.l.b16 %v1407
        %v1536 = vunpack.c.l.b16 %v1408
        %v1537 = vunpack.c.l.b16 %v1409
        %v1538 = vunpack.c.l.b16 %v1410
        %v1539 = vunpack.c.l.b16 %v1411
        %v1540 = vunpack.c.l.b16 %v1412
        %v1541 = vunpack.c.l.b16 %v1413
        %v1542 = vunpack.c.l.b16 %v1414
        %v1543 = vunpack.c.l.b16 %v1415
        %v1544 = vunpack.c.l.b16 %v1416
        %v1545 = vunpack.c.l.b16 %v1417
        %v1546 = vunpack.c.l.b16 %v1418
        %v1547 = vunpack.c.l.b16 %v1419
        %v1548 = vunpack.c.l.b16 %v1420
        %v1549 = vunpack.c.l.b16 %v1421
        %v1550 = vunpack.c.l.b16 %v1422
        %v1551 = vunpack.c.l.b16 %v1423
        %v1552 = vunpack.c.l.b16 %v1424
        %v1553 = vunpack.c.l.b16 %v1425
        %v1554 = vunpack.c.l.b16 %v1426
        %v1555 = vunpack.c.l.b16 %v1427
        %v1556 = vunpack.c.l.b16 %v1428
        %v1557 = vunpack.c.l.b16 %v1429
        %v1558 = vunpack.c.l.b16 %v1430
        %v1559 = vunpack.c.l.b16 %v1431
        %v1560 = vunpack.c.l.b16 %v1432
        %v1561 = vunpack.c.l.b16 %v1433
        %v1562 = vunpack.c.l.b16 %v1434
        %v1563 = vunpack.c.l.b16 %v1435
        %v1564 = vunpack.c.l.b16 %v1436
        %v1565 = vunpack.c.l.b16 %v1437
        %v1566 = vunpack.c.l.b16 %v1438
        %v1567 = vunpack.c.l.b16 %v1439
        %v1568 = vunpack.c.l.b16 %v1440
        %v1569 = vunpack.c.l.b16 %v1441
        %v1570 = vunpack.c.l.b16 %v1442
        %v1571 = vunpack.c.l.b16 %v1443
        %v1572 = vunpack.c.l.b16 %v1444
        %v1573 = vunpack.c.l.b16 %v1445
        %v1574 = vunpack.c.l.b16 %v1446
        %v1575 = vunpack.c.l.b16 %v1447
        %v1576 = vunpack.c.l.b16 %v1448
        %v1577 = vunpack.c.l.b16 %v1449
        %v1578 = vunpack.c.l.b16 %v1450
        %v1579 = vunpack.c.l.b16 %v1451
        %v1580 = vunpack.c.l.b16 %v1452
        %v1581 = vunpack.c.l.b16 %v1453
        %v1582 = vunpack.c.l.b16 %v1454
        %v1583 = vunpack.c.l.b16 %v1455
        %v1584 = vunpack.c.l.b16 %v1456
        %v1585 = vunpack.c.l.b16 %v1457
        %v1586 = vpack.c.b16 %v1523, %v1522
        %v1587 = vpack.c.b16 %v1525, %v1524
        %v1588 = vpack.c.b16 %v1527, %v1526
        %v1589 = vpack.c.b16 %v1529, %v1528
        %v1590 = vpack.c.b16 %v1531, %v1530
        %v1591 = vpack.c.b16 %v1533, %v1532
        %v1592 = vpack.c.b16 %v1535, %v1534
        %v1593 = vpack.c.b16 %v1537, %v1536
        %v1594 = vpack.c.b16 %v1539, %v1538
        %v1595 = vpack.c.b16 %v1541, %v1540
        %v1596 = vpack.c.b16 %v1543, %v1542
        %v1597 = vpack.c.b16 %v1545, %v1544
        %v1598 = vpack.c.b16 %v1547, %v1546
        %v1599 = vpack.c.b16 %v1549, %v1548
        %v1600 = vpack.c.b16 %v1551, %v1550
        %v1601 = vpack.c.b16 %v1553, %v1552
        %v1602 = vpack.c.b16 %v1555, %v1554
        %v1603 = vpack.c.b16 %v1557, %v1556
        %v1604 = vpack.c.b16 %v1559, %v1558
        %v1605 = vpack.c.b16 %v1561, %v1560
        %v1606 = vpack.c.b16 %v1563, %v1562
        %v1607 = vpack.c.b16 %v1565, %v1564
        %v1608 = vpack.c.b16 %v1567, %v1566
        %v1609 = vpack.c.b16 %v1569, %v1568
        %v1610 = vpack.c.b16 %v1571, %v1570
        %v1611 = vpack.c.b16 %v1573, %v1572
        %v1612 = vpack.c.b16 %v1575, %v1574
        %v1613 = vpack.c.b16 %v1577, %v1576
        %v1614 = vpack.c.b16 %v1579, %v1578
        %v1615 = vpack.c.b16 %v1581, %v1580
        %v1616 = vpack.c.b16 %v1583, %v1582
        %v1617 = vpack.c.b16 %v1585, %v1584
        %1650 = vmatprep.subr.bf16.mxu0 0
        %1651 = vmatpush1.bf16.msra.mxu0 %v1586
        %1652 = vmatprep.subr.bf16.mxu0 0
        %1653 = vmatpush1.bf16.msra.mxu0 %v1587
        %1654 = vmatprep.subr.bf16.mxu0 0
        %1655 = vmatpush1.bf16.msra.mxu0 %v1588
        %1656 = vmatprep.subr.bf16.mxu0 0
        %1657 = vmatpush1.bf16.msra.mxu0 %v1589
        %1658 = vmatprep.subr.bf16.mxu0 0
        %1659 = vmatpush1.bf16.msra.mxu0 %v1590
        %1660 = vmatprep.subr.bf16.mxu0 0
        %1661 = vmatpush1.bf16.msra.mxu0 %v1591
        %1662 = vmatprep.subr.bf16.mxu0 0
        %1663 = vmatpush1.bf16.msra.mxu0 %v1592
        %1664 = vmatprep.subr.bf16.mxu0 0
        %1665 = vmatpush1.bf16.msra.mxu0 %v1593
        %1666 = vmatprep.subr.bf16.mxu0 0
        %1667 = vmatpush1.bf16.msra.mxu0 %v1594
        %1668 = vmatprep.subr.bf16.mxu0 0
        %1669 = vmatpush1.bf16.msra.mxu0 %v1595
        %1670 = vmatprep.subr.bf16.mxu0 0
        %1671 = vmatpush1.bf16.msra.mxu0 %v1596
        %1672 = vmatprep.subr.bf16.mxu0 0
        %1673 = vmatpush1.bf16.msra.mxu0 %v1597
        %1674 = vmatprep.subr.bf16.mxu0 0
        %1675 = vmatpush1.bf16.msra.mxu0 %v1598
        %1676 = vmatprep.subr.bf16.mxu0 0
        %1677 = vmatpush1.bf16.msra.mxu0 %v1599
        %1678 = vmatprep.subr.bf16.mxu0 0
        %1679 = vmatpush1.bf16.msra.mxu0 %v1600
        %1680 = vmatprep.subr.bf16.mxu0 0
        %1681 = vmatpush1.bf16.msra.mxu0 %v1601
        %1682 = vmatprep.mubr.bf16.mxu0 %v1203
        %1683 = vmatmul.mubr.bf16.gmra.mrb[0].mxu0 %v1202
        %v1684 = vpop.f32.mrb[0].mxu0
        %v1685 = vadd.f32 0.0, %v1684
        %v1686 = vpop.f32.mrb[0].mxu0
        %v1687 = vpop.f32.mrb[0].mxu0
        %v1688 = vadd.f32 0.0, %v1687
        %v1689 = vpop.f32.mrb[0].mxu0
        %1690 = vmatprep.mubr.bf16.mxu0 %v1207
        %1691 = vmatmul.mubr.bf16.gmra.mrb[0].mxu0 %v1206
        %v1692 = vpop.f32.mrb[0].mxu0
        %v1693 = vadd.f32 0.0, %v1692
        %v1694 = vpop.f32.mrb[0].mxu0
        %v1695 = vpop.f32.mrb[0].mxu0
        %v1696 = vadd.f32 0.0, %v1695
        %v1697 = vpop.f32.mrb[0].mxu0
        %1698 = vmatprep.mubr.bf16.mxu0 %v1211
        %1699 = vmatmul.mubr.bf16.gmra.mrb[0].mxu0 %v1210
        %v1700 = vpop.f32.mrb[0].mxu0
        %v1701 = vadd.f32 0.0, %v1700
        %v1702 = vpop.f32.mrb[0].mxu0
        %v1703 = vpop.f32.mrb[0].mxu0
        %v1704 = vadd.f32 0.0, %v1703
        %v1705 = vpop.f32.mrb[0].mxu0
        %1706 = vmatprep.mubr.bf16.mxu0 %v1215
        %1707 = vmatmul.mubr.bf16.gmra.mrb[0].mxu0 %v1214
        %v1708 = vpop.f32.mrb[0].mxu0
        %v1709 = vadd.f32 0.0, %v1708
        %v1710 = vpop.f32.mrb[0].mxu0
        %v1711 = vpop.f32.mrb[0].mxu0
        %v1712 = vadd.f32 0.0, %v1711
        %v1713 = vpop.f32.mrb[0].mxu0
        %1714 = vmatprep.mubr.bf16.mxu0 %v1219
        %1715 = vmatmul.mubr.bf16.gmra.mrb[0].mxu0 %v1218
        %v1716 = vpop.f32.mrb[0].mxu0
        %v1717 = vadd.f32 0.0, %v1716
        %v1718 = vpop.f32.mrb[0].mxu0
        %v1719 = vpop.f32.mrb[0].mxu0
        %v1720 = vadd.f32 0.0, %v1719
        %v1721 = vpop.f32.mrb[0].mxu0
        %1722 = vmatprep.mubr.bf16.mxu0 %v1223
        %1723 = vmatmul.mubr.bf16.gmra.mrb[0].mxu0 %v1222
        %v1724 = vpop.f32.mrb[0].mxu0
        %v1725 = vadd.f32 0.0, %v1724
        %v1726 = vpop.f32.mrb[0].mxu0
        %v1727 = vpop.f32.mrb[0].mxu0
        %v1728 = vadd.f32 0.0, %v1727
        %v1729 = vpop.f32.mrb[0].mxu0
        %1730 = vmatprep.mubr.bf16.mxu0 %v1227
        %1731 = vmatmul.mubr.bf16.gmra.mrb[0].mxu0 %v1226
        %v1732 = vpop.f32.mrb[0].mxu0
        %v1733 = vadd.f32 0.0, %v1732
        %v1734 = vpop.f32.mrb[0].mxu0
        %v1735 = vpop.f32.mrb[0].mxu0
        %v1736 = vadd.f32 0.0, %v1735
        %v1737 = vpop.f32.mrb[0].mxu0
        %1738 = vmatprep.mubr.bf16.mxu0 %v1231
        %1739 = vmatmul.mubr.bf16.gmra.mrb[0].mxu0 %v1230
        %v1740 = vpop.f32.mrb[0].mxu0
        %v1741 = vadd.f32 0.0, %v1740
        %v1742 = vpop.f32.mrb[0].mxu0
        %v1743 = vpop.f32.mrb[0].mxu0
        %v1744 = vadd.f32 0.0, %v1743
        %v1745 = vpop.f32.mrb[0].mxu0
        %1746 = vmatprep.mubr.bf16.mxu0 %v1235
        %1747 = vmatmul.mubr.bf16.gmra.mrb[0].mxu0 %v1234
        %v1748 = vpop.f32.mrb[0].mxu0
        %v1749 = vadd.f32 0.0, %v1748
        %v1750 = vpop.f32.mrb[0].mxu0
        %v1751 = vpop.f32.mrb[0].mxu0
        %v1752 = vadd.f32 0.0, %v1751
        %v1753 = vpop.f32.mrb[0].mxu0
        %1754 = vmatprep.mubr.bf16.mxu0 %v1239
        %1755 = vmatmul.mubr.bf16.gmra.mrb[0].mxu0 %v1238
        %v1756 = vpop.f32.mrb[0].mxu0
        %v1757 = vadd.f32 0.0, %v1756
        %v1758 = vpop.f32.mrb[0].mxu0
        %v1759 = vpop.f32.mrb[0].mxu0
        %v1760 = vadd.f32 0.0, %v1759
        %v1761 = vpop.f32.mrb[0].mxu0
        %1762 = vmatprep.mubr.bf16.mxu0 %v1243
        %1763 = vmatmul.mubr.bf16.gmra.mrb[0].mxu0 %v1242
        %v1764 = vpop.f32.mrb[0].mxu0
        %v1765 = vadd.f32 0.0, %v1764
        %v1766 = vpop.f32.mrb[0].mxu0
        %v1767 = vpop.f32.mrb[0].mxu0
        %v1768 = vadd.f32 0.0, %v1767
        %v1769 = vpop.f32.mrb[0].mxu0
        %1770 = vmatprep.mubr.bf16.mxu0 %v1247
        %1771 = vmatmul.mubr.bf16.gmra.mrb[0].mxu0 %v1246
        %v1772 = vpop.f32.mrb[0].mxu0
        %v1773 = vadd.f32 0.0, %v1772
        %v1774 = vpop.f32.mrb[0].mxu0
        %v1775 = vpop.f32.mrb[0].mxu0
        %v1776 = vadd.f32 0.0, %v1775
        %v1777 = vpop.f32.mrb[0].mxu0
        %1778 = vmatprep.mubr.bf16.mxu0 %v1251
        %1779 = vmatmul.mubr.bf16.gmra.mrb[0].mxu0 %v1250
        %v1780 = vpop.f32.mrb[0].mxu0
        %v1781 = vadd.f32 0.0, %v1780
        %v1782 = vpop.f32.mrb[0].mxu0
        %v1783 = vpop.f32.mrb[0].mxu0
        %v1784 = vadd.f32 0.0, %v1783
        %v1785 = vpop.f32.mrb[0].mxu0
        %1786 = vmatprep.mubr.bf16.mxu0 %v1255
        %1787 = vmatmul.mubr.bf16.gmra.mrb[0].mxu0 %v1254
        %v1788 = vpop.f32.mrb[0].mxu0
        %v1789 = vadd.f32 0.0, %v1788
        %v1790 = vpop.f32.mrb[0].mxu0
        %v1791 = vpop.f32.mrb[0].mxu0
        %v1792 = vadd.f32 0.0, %v1791
        %v1793 = vpop.f32.mrb[0].mxu0
        %1794 = vmatprep.mubr.bf16.mxu0 %v1259
        %1795 = vmatmul.mubr.bf16.gmra.mrb[0].mxu0 %v1258
        %v1796 = vpop.f32.mrb[0].mxu0
        %v1797 = vadd.f32 0.0, %v1796
        %v1798 = vpop.f32.mrb[0].mxu0
        %v1799 = vpop.f32.mrb[0].mxu0
        %v1800 = vadd.f32 0.0, %v1799
        %v1801 = vpop.f32.mrb[0].mxu0
        %1802 = vmatprep.mubr.bf16.mxu0 %v1263
        %1803 = vmatmul.mubr.bf16.gmra.mrb[0].mxu0 %v1262
        %v1804 = vpop.f32.mrb[0].mxu0
        %v1805 = vadd.f32 0.0, %v1804
        %v1806 = vpop.f32.mrb[0].mxu0
        %v1807 = vpop.f32.mrb[0].mxu0
        %v1808 = vadd.f32 0.0, %v1807
        %v1809 = vpop.f32.mrb[0].mxu0
        %1810 = vmatprep.mubr.bf16.mxu0 %v1267
        %1811 = vmatmul.mubr.bf16.gmra.mrb[0].mxu0 %v1266
        %v1812 = vpop.f32.mrb[0].mxu0
        %v1813 = vadd.f32 0.0, %v1812
        %v1814 = vpop.f32.mrb[0].mxu0
        %v1815 = vpop.f32.mrb[0].mxu0
        %v1816 = vadd.f32 0.0, %v1815
        %v1817 = vpop.f32.mrb[0].mxu0
        %1818 = vmatprep.mubr.bf16.mxu0 %v1271
        %1819 = vmatmul.mubr.bf16.gmra.mrb[0].mxu0 %v1270
        %v1820 = vpop.f32.mrb[0].mxu0
        %v1821 = vadd.f32 0.0, %v1820
        %v1822 = vpop.f32.mrb[0].mxu0
        %v1823 = vpop.f32.mrb[0].mxu0
        %v1824 = vadd.f32 0.0, %v1823
        %v1825 = vpop.f32.mrb[0].mxu0
        %1826 = vmatprep.mubr.bf16.mxu0 %v1275
        %1827 = vmatmul.mubr.bf16.gmra.mrb[0].mxu0 %v1274
        %v1828 = vpop.f32.mrb[0].mxu0
        %v1829 = vadd.f32 0.0, %v1828
        %v1830 = vpop.f32.mrb[0].mxu0
        %v1831 = vpop.f32.mrb[0].mxu0
        %v1832 = vadd.f32 0.0, %v1831
        %v1833 = vpop.f32.mrb[0].mxu0
        %1834 = vmatprep.mubr.bf16.mxu0 %v1279
        %1835 = vmatmul.mubr.bf16.gmra.mrb[0].mxu0 %v1278
        %v1836 = vpop.f32.mrb[0].mxu0
        %v1837 = vadd.f32 0.0, %v1836
        %v1838 = vpop.f32.mrb[0].mxu0
        %v1839 = vpop.f32.mrb[0].mxu0
        %v1840 = vadd.f32 0.0, %v1839
        %v1841 = vpop.f32.mrb[0].mxu0
        %1842 = vmatprep.mubr.bf16.mxu0 %v1283
        %1843 = vmatmul.mubr.bf16.gmra.mrb[0].mxu0 %v1282
        %v1844 = vpop.f32.mrb[0].mxu0
        %v1845 = vadd.f32 0.0, %v1844
        %v1846 = vpop.f32.mrb[0].mxu0
        %v1847 = vpop.f32.mrb[0].mxu0
        %v1848 = vadd.f32 0.0, %v1847
        %v1849 = vpop.f32.mrb[0].mxu0
        %1850 = vmatprep.mubr.bf16.mxu0 %v1287
        %1851 = vmatmul.mubr.bf16.gmra.mrb[0].mxu0 %v1286
        %v1852 = vpop.f32.mrb[0].mxu0
        %v1853 = vadd.f32 0.0, %v1852
        %v1854 = vpop.f32.mrb[0].mxu0
        %v1855 = vpop.f32.mrb[0].mxu0
        %v1856 = vadd.f32 0.0, %v1855
        %v1857 = vpop.f32.mrb[0].mxu0
        %1858 = vmatprep.mubr.bf16.mxu0 %v1291
        %1859 = vmatmul.mubr.bf16.gmra.mrb[0].mxu0 %v1290
        %v1860 = vpop.f32.mrb[0].mxu0
        %v1861 = vadd.f32 0.0, %v1860
        %v1862 = vpop.f32.mrb[0].mxu0
        %v1863 = vpop.f32.mrb[0].mxu0
        %v1864 = vadd.f32 0.0, %v1863
        %v1865 = vpop.f32.mrb[0].mxu0
        %1866 = vmatprep.mubr.bf16.mxu0 %v1295
        %1867 = vmatmul.mubr.bf16.gmra.mrb[0].mxu0 %v1294
        %v1868 = vpop.f32.mrb[0].mxu0
        %v1869 = vadd.f32 0.0, %v1868
        %v1870 = vpop.f32.mrb[0].mxu0
        %v1871 = vpop.f32.mrb[0].mxu0
        %v1872 = vadd.f32 0.0, %v1871
        %v1873 = vpop.f32.mrb[0].mxu0
        %1874 = vmatprep.mubr.bf16.mxu0 %v1299
        %1875 = vmatmul.mubr.bf16.gmra.mrb[0].mxu0 %v1298
        %v1876 = vpop.f32.mrb[0].mxu0
        %v1877 = vadd.f32 0.0, %v1876
        %v1878 = vpop.f32.mrb[0].mxu0
        %v1879 = vpop.f32.mrb[0].mxu0
        %v1880 = vadd.f32 0.0, %v1879
        %v1881 = vpop.f32.mrb[0].mxu0
        %1882 = vmatprep.mubr.bf16.mxu0 %v1303
        %1883 = vmatmul.mubr.bf16.gmra.mrb[0].mxu0 %v1302
        %v1884 = vpop.f32.mrb[0].mxu0
        %v1885 = vadd.f32 0.0, %v1884
        %v1886 = vpop.f32.mrb[0].mxu0
        %v1887 = vpop.f32.mrb[0].mxu0
        %v1888 = vadd.f32 0.0, %v1887
        %v1889 = vpop.f32.mrb[0].mxu0
        %1890 = vmatprep.mubr.bf16.mxu0 %v1307
        %1891 = vmatmul.mubr.bf16.gmra.mrb[0].mxu0 %v1306
        %v1892 = vpop.f32.mrb[0].mxu0
        %v1893 = vadd.f32 0.0, %v1892
        %v1894 = vpop.f32.mrb[0].mxu0
        %v1895 = vpop.f32.mrb[0].mxu0
        %v1896 = vadd.f32 0.0, %v1895
        %v1897 = vpop.f32.mrb[0].mxu0
        %1898 = vmatprep.mubr.bf16.mxu0 %v1311
        %1899 = vmatmul.mubr.bf16.gmra.mrb[0].mxu0 %v1310
        %v1900 = vpop.f32.mrb[0].mxu0
        %v1901 = vadd.f32 0.0, %v1900
        %v1902 = vpop.f32.mrb[0].mxu0
        %v1903 = vpop.f32.mrb[0].mxu0
        %v1904 = vadd.f32 0.0, %v1903
        %v1905 = vpop.f32.mrb[0].mxu0
        %1906 = vmatprep.mubr.bf16.mxu0 %v1315
        %1907 = vmatmul.mubr.bf16.gmra.mrb[0].mxu0 %v1314
        %v1908 = vpop.f32.mrb[0].mxu0
        %v1909 = vadd.f32 0.0, %v1908
        %v1910 = vpop.f32.mrb[0].mxu0
        %v1911 = vpop.f32.mrb[0].mxu0
        %v1912 = vadd.f32 0.0, %v1911
        %v1913 = vpop.f32.mrb[0].mxu0
        %1914 = vmatprep.mubr.bf16.mxu0 %v1319
        %1915 = vmatmul.mubr.bf16.gmra.mrb[0].mxu0 %v1318
        %v1916 = vpop.f32.mrb[0].mxu0
        %v1917 = vadd.f32 0.0, %v1916
        %v1918 = vpop.f32.mrb[0].mxu0
        %v1919 = vpop.f32.mrb[0].mxu0
        %v1920 = vadd.f32 0.0, %v1919
        %v1921 = vpop.f32.mrb[0].mxu0
        %1922 = vmatprep.mubr.bf16.mxu0 %v1323
        %1923 = vmatmul.mubr.bf16.gmra.mrb[0].mxu0 %v1322
        %v1924 = vpop.f32.mrb[0].mxu0
        %v1925 = vadd.f32 0.0, %v1924
        %v1926 = vpop.f32.mrb[0].mxu0
        %v1927 = vpop.f32.mrb[0].mxu0
        %v1928 = vadd.f32 0.0, %v1927
        %v1929 = vpop.f32.mrb[0].mxu0
        %1930 = vmatprep.mubr.bf16.mxu0 %v1327
        %1931 = vmatmul.mubr.bf16.gmra.mrb[0].mxu0 %v1326
        %v1932 = vpop.f32.mrb[0].mxu0
        %v1933 = vadd.f32 0.0, %v1932
        %v1934 = vpop.f32.mrb[0].mxu0
        %v1935 = vpop.f32.mrb[0].mxu0
        %v1936 = vadd.f32 0.0, %v1935
        %v1937 = vpop.f32.mrb[0].mxu0
        %1938 = vdwg.mxu0
        %1939 = vmatprep.subr.bf16.mxu0 0
        %1940 = vmatpush1.bf16.msra.mxu0 %v1602
        %1941 = vmatprep.subr.bf16.mxu0 0
        %1942 = vmatpush1.bf16.msra.mxu0 %v1603
        %1943 = vmatprep.subr.bf16.mxu0 0
        %1944 = vmatpush1.bf16.msra.mxu0 %v1604
        %1945 = vmatprep.subr.bf16.mxu0 0
        %1946 = vmatpush1.bf16.msra.mxu0 %v1605
        %1947 = vmatprep.subr.bf16.mxu0 0
        %1948 = vmatpush1.bf16.msra.mxu0 %v1606
        %1949 = vmatprep.subr.bf16.mxu0 0
        %1950 = vmatpush1.bf16.msra.mxu0 %v1607
        %1951 = vmatprep.subr.bf16.mxu0 0
        %1952 = vmatpush1.bf16.msra.mxu0 %v1608
        %1953 = vmatprep.subr.bf16.mxu0 0
        %1954 = vmatpush1.bf16.msra.mxu0 %v1609
        %1955 = vmatprep.subr.bf16.mxu0 0
        %1956 = vmatpush1.bf16.msra.mxu0 %v1610
        %1957 = vmatprep.subr.bf16.mxu0 0
        %1958 = vmatpush1.bf16.msra.mxu0 %v1611
        %1959 = vmatprep.subr.bf16.mxu0 0
        %1960 = vmatpush1.bf16.msra.mxu0 %v1612
        %1961 = vmatprep.subr.bf16.mxu0 0
        %1962 = vmatpush1.bf16.msra.mxu0 %v1613
        %1963 = vmatprep.subr.bf16.mxu0 0
        %1964 = vmatpush1.bf16.msra.mxu0 %v1614
        %1965 = vmatprep.subr.bf16.mxu0 0
        %1966 = vmatpush1.bf16.msra.mxu0 %v1615
        %1967 = vmatprep.subr.bf16.mxu0 0
        %1968 = vmatpush1.bf16.msra.mxu0 %v1616
        %1969 = vmatprep.subr.bf16.mxu0 0
        %1970 = vmatpush1.bf16.msra.mxu0 %v1617
        %1971 = vmatprep.mubr.bf16.mxu0 %v1205
        %1972 = vmatmul.mubr.bf16.gmra.mrb[0].mxu0 %v1204
        %v1973 = vpop.f32.mrb[0].mxu0
        %v1974 = vadd.f32 %v1685, %v1973
        %v1975 = vpop.f32.mrb[0].mxu0
        %v1976 = vpop.f32.mrb[0].mxu0
        %v1977 = vadd.f32 %v1688, %v1976
        %v1978 = vpop.f32.mrb[0].mxu0
        %1979 = vmatprep.mubr.bf16.mxu0 %v1209
        %1980 = vmatmul.mubr.bf16.gmra.mrb[0].mxu0 %v1208
        %v1981 = vpop.f32.mrb[0].mxu0
        %v1982 = vadd.f32 %v1693, %v1981
        %v1983 = vpop.f32.mrb[0].mxu0
        %v1984 = vpop.f32.mrb[0].mxu0
        %v1985 = vadd.f32 %v1696, %v1984
        %v1986 = vpop.f32.mrb[0].mxu0
        %1987 = vmatprep.mubr.bf16.mxu0 %v1213
        %1988 = vmatmul.mubr.bf16.gmra.mrb[0].mxu0 %v1212
        %v1989 = vpop.f32.mrb[0].mxu0
        %v1990 = vadd.f32 %v1701, %v1989
        %v1991 = vpop.f32.mrb[0].mxu0
        %v1992 = vpop.f32.mrb[0].mxu0
        %v1993 = vadd.f32 %v1704, %v1992
        %v1994 = vpop.f32.mrb[0].mxu0
        %1995 = vmatprep.mubr.bf16.mxu0 %v1217
        %1996 = vmatmul.mubr.bf16.gmra.mrb[0].mxu0 %v1216
        %v1997 = vpop.f32.mrb[0].mxu0
        %v1998 = vadd.f32 %v1709, %v1997
        %v1999 = vpop.f32.mrb[0].mxu0
        %v2000 = vpop.f32.mrb[0].mxu0
        %v2001 = vadd.f32 %v1712, %v2000
        %v2002 = vpop.f32.mrb[0].mxu0
        %2003 = vmatprep.mubr.bf16.mxu0 %v1221
        %2004 = vmatmul.mubr.bf16.gmra.mrb[0].mxu0 %v1220
        %v2005 = vpop.f32.mrb[0].mxu0
        %v2006 = vadd.f32 %v1717, %v2005
        %v2007 = vpop.f32.mrb[0].mxu0
        %v2008 = vpop.f32.mrb[0].mxu0
        %v2009 = vadd.f32 %v1720, %v2008
        %v2010 = vpop.f32.mrb[0].mxu0
        %2011 = vmatprep.mubr.bf16.mxu0 %v1225
        %2012 = vmatmul.mubr.bf16.gmra.mrb[0].mxu0 %v1224
        %v2013 = vpop.f32.mrb[0].mxu0
        %v2014 = vadd.f32 %v1725, %v2013
        %v2015 = vpop.f32.mrb[0].mxu0
        %v2016 = vpop.f32.mrb[0].mxu0
        %v2017 = vadd.f32 %v1728, %v2016
        %v2018 = vpop.f32.mrb[0].mxu0
        %2019 = vmatprep.mubr.bf16.mxu0 %v1229
        %2020 = vmatmul.mubr.bf16.gmra.mrb[0].mxu0 %v1228
        %v2021 = vpop.f32.mrb[0].mxu0
        %v2022 = vadd.f32 %v1733, %v2021
        %v2023 = vpop.f32.mrb[0].mxu0
        %v2024 = vpop.f32.mrb[0].mxu0
        %v2025 = vadd.f32 %v1736, %v2024
        %v2026 = vpop.f32.mrb[0].mxu0
        %2027 = vmatprep.mubr.bf16.mxu0 %v1233
        %2028 = vmatmul.mubr.bf16.gmra.mrb[0].mxu0 %v1232
        %v2029 = vpop.f32.mrb[0].mxu0
        %v2030 = vadd.f32 %v1741, %v2029
        %v2031 = vpop.f32.mrb[0].mxu0
        %v2032 = vpop.f32.mrb[0].mxu0
        %v2033 = vadd.f32 %v1744, %v2032
        %v2034 = vpop.f32.mrb[0].mxu0
        %2035 = vmatprep.mubr.bf16.mxu0 %v1237
        %2036 = vmatmul.mubr.bf16.gmra.mrb[0].mxu0 %v1236
        %v2037 = vpop.f32.mrb[0].mxu0
        %v2038 = vadd.f32 %v1749, %v2037
        %v2039 = vpop.f32.mrb[0].mxu0
        %v2040 = vpop.f32.mrb[0].mxu0
        %v2041 = vadd.f32 %v1752, %v2040
        %v2042 = vpop.f32.mrb[0].mxu0
        %2043 = vmatprep.mubr.bf16.mxu0 %v1241
        %2044 = vmatmul.mubr.bf16.gmra.mrb[0].mxu0 %v1240
        %v2045 = vpop.f32.mrb[0].mxu0
        %v2046 = vadd.f32 %v1757, %v2045
        %v2047 = vpop.f32.mrb[0].mxu0
        %v2048 = vpop.f32.mrb[0].mxu0
        %v2049 = vadd.f32 %v1760, %v2048
        %v2050 = vpop.f32.mrb[0].mxu0
        %2051 = vmatprep.mubr.bf16.mxu0 %v1245
        %2052 = vmatmul.mubr.bf16.gmra.mrb[0].mxu0 %v1244
        %v2053 = vpop.f32.mrb[0].mxu0
        %v2054 = vadd.f32 %v1765, %v2053
        %v2055 = vpop.f32.mrb[0].mxu0
        %v2056 = vpop.f32.mrb[0].mxu0
        %v2057 = vadd.f32 %v1768, %v2056
        %v2058 = vpop.f32.mrb[0].mxu0
        %2059 = vmatprep.mubr.bf16.mxu0 %v1249
        %2060 = vmatmul.mubr.bf16.gmra.mrb[0].mxu0 %v1248
        %v2061 = vpop.f32.mrb[0].mxu0
        %v2062 = vadd.f32 %v1773, %v2061
        %v2063 = vpop.f32.mrb[0].mxu0
        %v2064 = vpop.f32.mrb[0].mxu0
        %v2065 = vadd.f32 %v1776, %v2064
        %v2066 = vpop.f32.mrb[0].mxu0
        %2067 = vmatprep.mubr.bf16.mxu0 %v1253
        %2068 = vmatmul.mubr.bf16.gmra.mrb[0].mxu0 %v1252
        %v2069 = vpop.f32.mrb[0].mxu0
        %v2070 = vadd.f32 %v1781, %v2069
        %v2071 = vpop.f32.mrb[0].mxu0
        %v2072 = vpop.f32.mrb[0].mxu0
        %v2073 = vadd.f32 %v1784, %v2072
        %v2074 = vpop.f32.mrb[0].mxu0
        %2075 = vmatprep.mubr.bf16.mxu0 %v1257
        %2076 = vmatmul.mubr.bf16.gmra.mrb[0].mxu0 %v1256
        %v2077 = vpop.f32.mrb[0].mxu0
        %v2078 = vadd.f32 %v1789, %v2077
        %v2079 = vpop.f32.mrb[0].mxu0
        %v2080 = vpop.f32.mrb[0].mxu0
        %v2081 = vadd.f32 %v1792, %v2080
        %v2082 = vpop.f32.mrb[0].mxu0
        %2083 = vmatprep.mubr.bf16.mxu0 %v1261
        %2084 = vmatmul.mubr.bf16.gmra.mrb[0].mxu0 %v1260
        %v2085 = vpop.f32.mrb[0].mxu0
        %v2086 = vadd.f32 %v1797, %v2085
        %v2087 = vpop.f32.mrb[0].mxu0
        %v2088 = vpop.f32.mrb[0].mxu0
        %v2089 = vadd.f32 %v1800, %v2088
        %v2090 = vpop.f32.mrb[0].mxu0
        %2091 = vmatprep.mubr.bf16.mxu0 %v1265
        %2092 = vmatmul.mubr.bf16.gmra.mrb[0].mxu0 %v1264
        %v2093 = vpop.f32.mrb[0].mxu0
        %v2094 = vadd.f32 %v1805, %v2093
        %v2095 = vpop.f32.mrb[0].mxu0
        %v2096 = vpop.f32.mrb[0].mxu0
        %v2097 = vadd.f32 %v1808, %v2096
        %v2098 = vpop.f32.mrb[0].mxu0
        %2099 = vmatprep.mubr.bf16.mxu0 %v1269
        %2100 = vmatmul.mubr.bf16.gmra.mrb[0].mxu0 %v1268
        %v2101 = vpop.f32.mrb[0].mxu0
        %v2102 = vadd.f32 %v1813, %v2101
        %v2103 = vpop.f32.mrb[0].mxu0
        %v2104 = vpop.f32.mrb[0].mxu0
        %v2105 = vadd.f32 %v1816, %v2104
        %v2106 = vpop.f32.mrb[0].mxu0
        %2107 = vmatprep.mubr.bf16.mxu0 %v1273
        %2108 = vmatmul.mubr.bf16.gmra.mrb[0].mxu0 %v1272
        %v2109 = vpop.f32.mrb[0].mxu0
        %v2110 = vadd.f32 %v1821, %v2109
        %v2111 = vpop.f32.mrb[0].mxu0
        %v2112 = vpop.f32.mrb[0].mxu0
        %v2113 = vadd.f32 %v1824, %v2112
        %v2114 = vpop.f32.mrb[0].mxu0
        %2115 = vmatprep.mubr.bf16.mxu0 %v1277
        %2116 = vmatmul.mubr.bf16.gmra.mrb[0].mxu0 %v1276
        %v2117 = vpop.f32.mrb[0].mxu0
        %v2118 = vadd.f32 %v1829, %v2117
        %v2119 = vpop.f32.mrb[0].mxu0
        %v2120 = vpop.f32.mrb[0].mxu0
        %v2121 = vadd.f32 %v1832, %v2120
        %v2122 = vpop.f32.mrb[0].mxu0
        %2123 = vmatprep.mubr.bf16.mxu0 %v1281
        %2124 = vmatmul.mubr.bf16.gmra.mrb[0].mxu0 %v1280
        %v2125 = vpop.f32.mrb[0].mxu0
        %v2126 = vadd.f32 %v1837, %v2125
        %v2127 = vpop.f32.mrb[0].mxu0
        %v2128 = vpop.f32.mrb[0].mxu0
        %v2129 = vadd.f32 %v1840, %v2128
        %v2130 = vpop.f32.mrb[0].mxu0
        %2131 = vmatprep.mubr.bf16.mxu0 %v1285
        %2132 = vmatmul.mubr.bf16.gmra.mrb[0].mxu0 %v1284
        %v2133 = vpop.f32.mrb[0].mxu0
        %v2134 = vadd.f32 %v1845, %v2133
        %v2135 = vpop.f32.mrb[0].mxu0
        %v2136 = vpop.f32.mrb[0].mxu0
        %v2137 = vadd.f32 %v1848, %v2136
        %v2138 = vpop.f32.mrb[0].mxu0
        %2139 = vmatprep.mubr.bf16.mxu0 %v1289
        %2140 = vmatmul.mubr.bf16.gmra.mrb[0].mxu0 %v1288
        %v2141 = vpop.f32.mrb[0].mxu0
        %v2142 = vadd.f32 %v1853, %v2141
        %v2143 = vpop.f32.mrb[0].mxu0
        %v2144 = vpop.f32.mrb[0].mxu0
        %v2145 = vadd.f32 %v1856, %v2144
        %v2146 = vpop.f32.mrb[0].mxu0
        %2147 = vmatprep.mubr.bf16.mxu0 %v1293
        %2148 = vmatmul.mubr.bf16.gmra.mrb[0].mxu0 %v1292
        %v2149 = vpop.f32.mrb[0].mxu0
        %v2150 = vadd.f32 %v1861, %v2149
        %v2151 = vpop.f32.mrb[0].mxu0
        %v2152 = vpop.f32.mrb[0].mxu0
        %v2153 = vadd.f32 %v1864, %v2152
        %v2154 = vpop.f32.mrb[0].mxu0
        %2155 = vmatprep.mubr.bf16.mxu0 %v1297
        %2156 = vmatmul.mubr.bf16.gmra.mrb[0].mxu0 %v1296
        %v2157 = vpop.f32.mrb[0].mxu0
        %v2158 = vadd.f32 %v1869, %v2157
        %v2159 = vpop.f32.mrb[0].mxu0
        %v2160 = vpop.f32.mrb[0].mxu0
        %v2161 = vadd.f32 %v1872, %v2160
        %v2162 = vpop.f32.mrb[0].mxu0
        %2163 = vmatprep.mubr.bf16.mxu0 %v1301
        %2164 = vmatmul.mubr.bf16.gmra.mrb[0].mxu0 %v1300
        %v2165 = vpop.f32.mrb[0].mxu0
        %v2166 = vadd.f32 %v1877, %v2165
        %v2167 = vpop.f32.mrb[0].mxu0
        %v2168 = vpop.f32.mrb[0].mxu0
        %v2169 = vadd.f32 %v1880, %v2168
        %v2170 = vpop.f32.mrb[0].mxu0
        %2171 = vmatprep.mubr.bf16.mxu0 %v1305
        %2172 = vmatmul.mubr.bf16.gmra.mrb[0].mxu0 %v1304
        %v2173 = vpop.f32.mrb[0].mxu0
        %v2174 = vadd.f32 %v1885, %v2173
        %v2175 = vpop.f32.mrb[0].mxu0
        %v2176 = vpop.f32.mrb[0].mxu0
        %v2177 = vadd.f32 %v1888, %v2176
        %v2178 = vpop.f32.mrb[0].mxu0
        %2179 = vmatprep.mubr.bf16.mxu0 %v1309
        %2180 = vmatmul.mubr.bf16.gmra.mrb[0].mxu0 %v1308
        %v2181 = vpop.f32.mrb[0].mxu0
        %v2182 = vadd.f32 %v1893, %v2181
        %v2183 = vpop.f32.mrb[0].mxu0
        %v2184 = vpop.f32.mrb[0].mxu0
        %v2185 = vadd.f32 %v1896, %v2184
        %v2186 = vpop.f32.mrb[0].mxu0
        %2187 = vmatprep.mubr.bf16.mxu0 %v1313
        %2188 = vmatmul.mubr.bf16.gmra.mrb[0].mxu0 %v1312
        %v2189 = vpop.f32.mrb[0].mxu0
        %v2190 = vadd.f32 %v1901, %v2189
        %v2191 = vpop.f32.mrb[0].mxu0
        %v2192 = vpop.f32.mrb[0].mxu0
        %v2193 = vadd.f32 %v1904, %v2192
        %v2194 = vpop.f32.mrb[0].mxu0
        %2195 = vmatprep.mubr.bf16.mxu0 %v1317
        %2196 = vmatmul.mubr.bf16.gmra.mrb[0].mxu0 %v1316
        %v2197 = vpop.f32.mrb[0].mxu0
        %v2198 = vadd.f32 %v1909, %v2197
        %v2199 = vpop.f32.mrb[0].mxu0
        %v2200 = vpop.f32.mrb[0].mxu0
        %v2201 = vadd.f32 %v1912, %v2200
        %v2202 = vpop.f32.mrb[0].mxu0
        %2203 = vmatprep.mubr.bf16.mxu0 %v1321
        %2204 = vmatmul.mubr.bf16.gmra.mrb[0].mxu0 %v1320
        %v2205 = vpop.f32.mrb[0].mxu0
        %v2206 = vadd.f32 %v1917, %v2205
        %v2207 = vpop.f32.mrb[0].mxu0
        %v2208 = vpop.f32.mrb[0].mxu0
        %v2209 = vadd.f32 %v1920, %v2208
        %v2210 = vpop.f32.mrb[0].mxu0
        %2211 = vmatprep.mubr.bf16.mxu0 %v1325
        %2212 = vmatmul.mubr.bf16.gmra.mrb[0].mxu0 %v1324
        %v2213 = vpop.f32.mrb[0].mxu0
        %v2214 = vadd.f32 %v1925, %v2213
        %v2215 = vpop.f32.mrb[0].mxu0
        %v2216 = vpop.f32.mrb[0].mxu0
        %v2217 = vadd.f32 %v1928, %v2216
        %v2218 = vpop.f32.mrb[0].mxu0
        %2219 = vmatprep.mubr.bf16.mxu0 %v1329
        %2220 = vmatmul.mubr.bf16.gmra.mrb[0].mxu0 %v1328
        %v2221 = vpop.f32.mrb[0].mxu0
        %v2222 = vadd.f32 %v1933, %v2221
        %v2223 = vpop.f32.mrb[0].mxu0
        %v2224 = vpop.f32.mrb[0].mxu0
        %v2225 = vadd.f32 %v1936, %v2224
        %v2226 = vpop.f32.mrb[0].mxu0
        %2227 = vdwg.mxu0
        %v2292 = vunpack.c.l.b16 %v1330
        %v2293 = vunpack.c.l.b16 %v1331
        %v2294 = vunpack.c.l.b16 %v1332
        %v2295 = vunpack.c.l.b16 %v1333
        %v2296 = vunpack.c.l.b16 %v1334
        %v2297 = vunpack.c.l.b16 %v1335
        %v2298 = vunpack.c.l.b16 %v1336
        %v2299 = vunpack.c.l.b16 %v1337
        %v2300 = vunpack.c.l.b16 %v1338
        %v2301 = vunpack.c.l.b16 %v1339
        %v2302 = vunpack.c.l.b16 %v1340
        %v2303 = vunpack.c.l.b16 %v1341
        %v2304 = vunpack.c.l.b16 %v1342
        %v2305 = vunpack.c.l.b16 %v1343
        %v2306 = vunpack.c.l.b16 %v1344
        %v2307 = vunpack.c.l.b16 %v1345
        %v2308 = vunpack.c.l.b16 %v1346
        %v2309 = vunpack.c.l.b16 %v1347
        %v2310 = vunpack.c.l.b16 %v1348
        %v2311 = vunpack.c.l.b16 %v1349
        %v2312 = vunpack.c.l.b16 %v1350
        %v2313 = vunpack.c.l.b16 %v1351
        %v2314 = vunpack.c.l.b16 %v1352
        %v2315 = vunpack.c.l.b16 %v1353
        %v2316 = vunpack.c.l.b16 %v1354
        %v2317 = vunpack.c.l.b16 %v1355
        %v2318 = vunpack.c.l.b16 %v1356
        %v2319 = vunpack.c.l.b16 %v1357
        %v2320 = vunpack.c.l.b16 %v1358
        %v2321 = vunpack.c.l.b16 %v1359
        %v2322 = vunpack.c.l.b16 %v1360
        %v2323 = vunpack.c.l.b16 %v1361
        %v2324 = vunpack.c.l.b16 %v1362
        %v2325 = vunpack.c.l.b16 %v1363
        %v2326 = vunpack.c.l.b16 %v1364
        %v2327 = vunpack.c.l.b16 %v1365
        %v2328 = vunpack.c.l.b16 %v1366
        %v2329 = vunpack.c.l.b16 %v1367
        %v2330 = vunpack.c.l.b16 %v1368
        %v2331 = vunpack.c.l.b16 %v1369
        %v2332 = vunpack.c.l.b16 %v1370
        %v2333 = vunpack.c.l.b16 %v1371
        %v2334 = vunpack.c.l.b16 %v1372
        %v2335 = vunpack.c.l.b16 %v1373
        %v2336 = vunpack.c.l.b16 %v1374
        %v2337 = vunpack.c.l.b16 %v1375
        %v2338 = vunpack.c.l.b16 %v1376
        %v2339 = vunpack.c.l.b16 %v1377
        %v2340 = vunpack.c.l.b16 %v1378
        %v2341 = vunpack.c.l.b16 %v1379
        %v2342 = vunpack.c.l.b16 %v1380
        %v2343 = vunpack.c.l.b16 %v1381
        %v2344 = vunpack.c.l.b16 %v1382
        %v2345 = vunpack.c.l.b16 %v1383
        %v2346 = vunpack.c.l.b16 %v1384
        %v2347 = vunpack.c.l.b16 %v1385
        %v2348 = vunpack.c.l.b16 %v1386
        %v2349 = vunpack.c.l.b16 %v1387
        %v2350 = vunpack.c.l.b16 %v1388
        %v2351 = vunpack.c.l.b16 %v1389
        %v2352 = vunpack.c.l.b16 %v1390
        %v2353 = vunpack.c.l.b16 %v1391
        %v2354 = vunpack.c.l.b16 %v1392
        %v2355 = vunpack.c.l.b16 %v1393
        %v2356 = vpack.c.b16 %v2293, %v2292
        %v2357 = vpack.c.b16 %v2295, %v2294
        %v2358 = vpack.c.b16 %v2297, %v2296
        %v2359 = vpack.c.b16 %v2299, %v2298
        %v2360 = vpack.c.b16 %v2301, %v2300
        %v2361 = vpack.c.b16 %v2303, %v2302
        %v2362 = vpack.c.b16 %v2305, %v2304
        %v2363 = vpack.c.b16 %v2307, %v2306
        %v2364 = vpack.c.b16 %v2309, %v2308
        %v2365 = vpack.c.b16 %v2311, %v2310
        %v2366 = vpack.c.b16 %v2313, %v2312
        %v2367 = vpack.c.b16 %v2315, %v2314
        %v2368 = vpack.c.b16 %v2317, %v2316
        %v2369 = vpack.c.b16 %v2319, %v2318
        %v2370 = vpack.c.b16 %v2321, %v2320
        %v2371 = vpack.c.b16 %v2323, %v2322
        %v2372 = vpack.c.b16 %v2325, %v2324
        %v2373 = vpack.c.b16 %v2327, %v2326
        %v2374 = vpack.c.b16 %v2329, %v2328
        %v2375 = vpack.c.b16 %v2331, %v2330
        %v2376 = vpack.c.b16 %v2333, %v2332
        %v2377 = vpack.c.b16 %v2335, %v2334
        %v2378 = vpack.c.b16 %v2337, %v2336
        %v2379 = vpack.c.b16 %v2339, %v2338
        %v2380 = vpack.c.b16 %v2341, %v2340
        %v2381 = vpack.c.b16 %v2343, %v2342
        %v2382 = vpack.c.b16 %v2345, %v2344
        %v2383 = vpack.c.b16 %v2347, %v2346
        %v2384 = vpack.c.b16 %v2349, %v2348
        %v2385 = vpack.c.b16 %v2351, %v2350
        %v2386 = vpack.c.b16 %v2353, %v2352
        %v2387 = vpack.c.b16 %v2355, %v2354
        %2420 = vmatprep.subr.bf16.mxu0 0
        %2421 = vmatpush1.bf16.msra.mxu0 %v2356
        %2422 = vmatprep.subr.bf16.mxu0 0
        %2423 = vmatpush1.bf16.msra.mxu0 %v2357
        %2424 = vmatprep.subr.bf16.mxu0 0
        %2425 = vmatpush1.bf16.msra.mxu0 %v2358
        %2426 = vmatprep.subr.bf16.mxu0 0
        %2427 = vmatpush1.bf16.msra.mxu0 %v2359
        %2428 = vmatprep.subr.bf16.mxu0 0
        %2429 = vmatpush1.bf16.msra.mxu0 %v2360
        %2430 = vmatprep.subr.bf16.mxu0 0
        %2431 = vmatpush1.bf16.msra.mxu0 %v2361
        %2432 = vmatprep.subr.bf16.mxu0 0
        %2433 = vmatpush1.bf16.msra.mxu0 %v2362
        %2434 = vmatprep.subr.bf16.mxu0 0
        %2435 = vmatpush1.bf16.msra.mxu0 %v2363
        %2436 = vmatprep.subr.bf16.mxu0 0
        %2437 = vmatpush1.bf16.msra.mxu0 %v2364
        %2438 = vmatprep.subr.bf16.mxu0 0
        %2439 = vmatpush1.bf16.msra.mxu0 %v2365
        %2440 = vmatprep.subr.bf16.mxu0 0
        %2441 = vmatpush1.bf16.msra.mxu0 %v2366
        %2442 = vmatprep.subr.bf16.mxu0 0
        %2443 = vmatpush1.bf16.msra.mxu0 %v2367
        %2444 = vmatprep.subr.bf16.mxu0 0
        %2445 = vmatpush1.bf16.msra.mxu0 %v2368
        %2446 = vmatprep.subr.bf16.mxu0 0
        %2447 = vmatpush1.bf16.msra.mxu0 %v2369
        %2448 = vmatprep.subr.bf16.mxu0 0
        %2449 = vmatpush1.bf16.msra.mxu0 %v2370
        %2450 = vmatprep.subr.bf16.mxu0 0
        %2451 = vmatpush1.bf16.msra.mxu0 %v2371
        %2452 = vmatprep.mubr.bf16.mxu0 %v1203
        %2453 = vmatmul.mubr.bf16.gmra.mrb[0].mxu0 %v1202
        %v2454 = vpop.f32.mrb[0].mxu0
        %v2455 = vadd.f32 %v1974, %v2454
        %v2456 = vpop.f32.mrb[0].mxu0
        %v2457 = vpop.f32.mrb[0].mxu0
        %v2458 = vadd.f32 %v1977, %v2457
        %v2459 = vpop.f32.mrb[0].mxu0
        %2460 = vmatprep.mubr.bf16.mxu0 %v1207
        %2461 = vmatmul.mubr.bf16.gmra.mrb[0].mxu0 %v1206
        %v2462 = vpop.f32.mrb[0].mxu0
        %v2463 = vadd.f32 %v1982, %v2462
        %v2464 = vpop.f32.mrb[0].mxu0
        %v2465 = vpop.f32.mrb[0].mxu0
        %v2466 = vadd.f32 %v1985, %v2465
        %v2467 = vpop.f32.mrb[0].mxu0
        %2468 = vmatprep.mubr.bf16.mxu0 %v1211
        %2469 = vmatmul.mubr.bf16.gmra.mrb[0].mxu0 %v1210
        %v2470 = vpop.f32.mrb[0].mxu0
        %v2471 = vadd.f32 %v1990, %v2470
        %v2472 = vpop.f32.mrb[0].mxu0
        %v2473 = vpop.f32.mrb[0].mxu0
        %v2474 = vadd.f32 %v1993, %v2473
        %v2475 = vpop.f32.mrb[0].mxu0
        %2476 = vmatprep.mubr.bf16.mxu0 %v1215
        %2477 = vmatmul.mubr.bf16.gmra.mrb[0].mxu0 %v1214
        %v2478 = vpop.f32.mrb[0].mxu0
        %v2479 = vadd.f32 %v1998, %v2478
        %v2480 = vpop.f32.mrb[0].mxu0
        %v2481 = vpop.f32.mrb[0].mxu0
        %v2482 = vadd.f32 %v2001, %v2481
        %v2483 = vpop.f32.mrb[0].mxu0
        %2484 = vmatprep.mubr.bf16.mxu0 %v1219
        %2485 = vmatmul.mubr.bf16.gmra.mrb[0].mxu0 %v1218
        %v2486 = vpop.f32.mrb[0].mxu0
        %v2487 = vadd.f32 %v2006, %v2486
        %v2488 = vpop.f32.mrb[0].mxu0
        %v2489 = vpop.f32.mrb[0].mxu0
        %v2490 = vadd.f32 %v2009, %v2489
        %v2491 = vpop.f32.mrb[0].mxu0
        %2492 = vmatprep.mubr.bf16.mxu0 %v1223
        %2493 = vmatmul.mubr.bf16.gmra.mrb[0].mxu0 %v1222
        %v2494 = vpop.f32.mrb[0].mxu0
        %v2495 = vadd.f32 %v2014, %v2494
        %v2496 = vpop.f32.mrb[0].mxu0
        %v2497 = vpop.f32.mrb[0].mxu0
        %v2498 = vadd.f32 %v2017, %v2497
        %v2499 = vpop.f32.mrb[0].mxu0
        %2500 = vmatprep.mubr.bf16.mxu0 %v1227
        %2501 = vmatmul.mubr.bf16.gmra.mrb[0].mxu0 %v1226
        %v2502 = vpop.f32.mrb[0].mxu0
        %v2503 = vadd.f32 %v2022, %v2502
        %v2504 = vpop.f32.mrb[0].mxu0
        %v2505 = vpop.f32.mrb[0].mxu0
        %v2506 = vadd.f32 %v2025, %v2505
        %v2507 = vpop.f32.mrb[0].mxu0
        %2508 = vmatprep.mubr.bf16.mxu0 %v1231
        %2509 = vmatmul.mubr.bf16.gmra.mrb[0].mxu0 %v1230
        %v2510 = vpop.f32.mrb[0].mxu0
        %v2511 = vadd.f32 %v2030, %v2510
        %v2512 = vpop.f32.mrb[0].mxu0
        %v2513 = vpop.f32.mrb[0].mxu0
        %v2514 = vadd.f32 %v2033, %v2513
        %v2515 = vpop.f32.mrb[0].mxu0
        %2516 = vmatprep.mubr.bf16.mxu0 %v1235
        %2517 = vmatmul.mubr.bf16.gmra.mrb[0].mxu0 %v1234
        %v2518 = vpop.f32.mrb[0].mxu0
        %v2519 = vadd.f32 %v2038, %v2518
        %v2520 = vpop.f32.mrb[0].mxu0
        %v2521 = vpop.f32.mrb[0].mxu0
        %v2522 = vadd.f32 %v2041, %v2521
        %v2523 = vpop.f32.mrb[0].mxu0
        %2524 = vmatprep.mubr.bf16.mxu0 %v1239
        %2525 = vmatmul.mubr.bf16.gmra.mrb[0].mxu0 %v1238
        %v2526 = vpop.f32.mrb[0].mxu0
        %v2527 = vadd.f32 %v2046, %v2526
        %v2528 = vpop.f32.mrb[0].mxu0
        %v2529 = vpop.f32.mrb[0].mxu0
        %v2530 = vadd.f32 %v2049, %v2529
        %v2531 = vpop.f32.mrb[0].mxu0
        %2532 = vmatprep.mubr.bf16.mxu0 %v1243
        %2533 = vmatmul.mubr.bf16.gmra.mrb[0].mxu0 %v1242
        %v2534 = vpop.f32.mrb[0].mxu0
        %v2535 = vadd.f32 %v2054, %v2534
        %v2536 = vpop.f32.mrb[0].mxu0
        %v2537 = vpop.f32.mrb[0].mxu0
        %v2538 = vadd.f32 %v2057, %v2537
        %v2539 = vpop.f32.mrb[0].mxu0
        %2540 = vmatprep.mubr.bf16.mxu0 %v1247
        %2541 = vmatmul.mubr.bf16.gmra.mrb[0].mxu0 %v1246
        %v2542 = vpop.f32.mrb[0].mxu0
        %v2543 = vadd.f32 %v2062, %v2542
        %v2544 = vpop.f32.mrb[0].mxu0
        %v2545 = vpop.f32.mrb[0].mxu0
        %v2546 = vadd.f32 %v2065, %v2545
        %v2547 = vpop.f32.mrb[0].mxu0
        %2548 = vmatprep.mubr.bf16.mxu0 %v1251
        %2549 = vmatmul.mubr.bf16.gmra.mrb[0].mxu0 %v1250
        %v2550 = vpop.f32.mrb[0].mxu0
        %v2551 = vadd.f32 %v2070, %v2550
        %v2552 = vpop.f32.mrb[0].mxu0
        %v2553 = vpop.f32.mrb[0].mxu0
        %v2554 = vadd.f32 %v2073, %v2553
        %v2555 = vpop.f32.mrb[0].mxu0
        %2556 = vmatprep.mubr.bf16.mxu0 %v1255
        %2557 = vmatmul.mubr.bf16.gmra.mrb[0].mxu0 %v1254
        %v2558 = vpop.f32.mrb[0].mxu0
        %v2559 = vadd.f32 %v2078, %v2558
        %v2560 = vpop.f32.mrb[0].mxu0
        %v2561 = vpop.f32.mrb[0].mxu0
        %v2562 = vadd.f32 %v2081, %v2561
        %v2563 = vpop.f32.mrb[0].mxu0
        %2564 = vmatprep.mubr.bf16.mxu0 %v1259
        %2565 = vmatmul.mubr.bf16.gmra.mrb[0].mxu0 %v1258
        %v2566 = vpop.f32.mrb[0].mxu0
        %v2567 = vadd.f32 %v2086, %v2566
        %v2568 = vpop.f32.mrb[0].mxu0
        %v2569 = vpop.f32.mrb[0].mxu0
        %v2570 = vadd.f32 %v2089, %v2569
        %v2571 = vpop.f32.mrb[0].mxu0
        %2572 = vmatprep.mubr.bf16.mxu0 %v1263
        %2573 = vmatmul.mubr.bf16.gmra.mrb[0].mxu0 %v1262
        %v2574 = vpop.f32.mrb[0].mxu0
        %v2575 = vadd.f32 %v2094, %v2574
        %v2576 = vpop.f32.mrb[0].mxu0
        %v2577 = vpop.f32.mrb[0].mxu0
        %v2578 = vadd.f32 %v2097, %v2577
        %v2579 = vpop.f32.mrb[0].mxu0
        %2580 = vmatprep.mubr.bf16.mxu0 %v1267
        %2581 = vmatmul.mubr.bf16.gmra.mrb[0].mxu0 %v1266
        %v2582 = vpop.f32.mrb[0].mxu0
        %v2583 = vadd.f32 %v2102, %v2582
        %v2584 = vpop.f32.mrb[0].mxu0
        %v2585 = vpop.f32.mrb[0].mxu0
        %v2586 = vadd.f32 %v2105, %v2585
        %v2587 = vpop.f32.mrb[0].mxu0
        %2588 = vmatprep.mubr.bf16.mxu0 %v1271
        %2589 = vmatmul.mubr.bf16.gmra.mrb[0].mxu0 %v1270
        %v2590 = vpop.f32.mrb[0].mxu0
        %v2591 = vadd.f32 %v2110, %v2590
        %v2592 = vpop.f32.mrb[0].mxu0
        %v2593 = vpop.f32.mrb[0].mxu0
        %v2594 = vadd.f32 %v2113, %v2593
        %v2595 = vpop.f32.mrb[0].mxu0
        %2596 = vmatprep.mubr.bf16.mxu0 %v1275
        %2597 = vmatmul.mubr.bf16.gmra.mrb[0].mxu0 %v1274
        %v2598 = vpop.f32.mrb[0].mxu0
        %v2599 = vadd.f32 %v2118, %v2598
        %v2600 = vpop.f32.mrb[0].mxu0
        %v2601 = vpop.f32.mrb[0].mxu0
        %v2602 = vadd.f32 %v2121, %v2601
        %v2603 = vpop.f32.mrb[0].mxu0
        %2604 = vmatprep.mubr.bf16.mxu0 %v1279
        %2605 = vmatmul.mubr.bf16.gmra.mrb[0].mxu0 %v1278
        %v2606 = vpop.f32.mrb[0].mxu0
        %v2607 = vadd.f32 %v2126, %v2606
        %v2608 = vpop.f32.mrb[0].mxu0
        %v2609 = vpop.f32.mrb[0].mxu0
        %v2610 = vadd.f32 %v2129, %v2609
        %v2611 = vpop.f32.mrb[0].mxu0
        %2612 = vmatprep.mubr.bf16.mxu0 %v1283
        %2613 = vmatmul.mubr.bf16.gmra.mrb[0].mxu0 %v1282
        %v2614 = vpop.f32.mrb[0].mxu0
        %v2615 = vadd.f32 %v2134, %v2614
        %v2616 = vpop.f32.mrb[0].mxu0
        %v2617 = vpop.f32.mrb[0].mxu0
        %v2618 = vadd.f32 %v2137, %v2617
        %v2619 = vpop.f32.mrb[0].mxu0
        %2620 = vmatprep.mubr.bf16.mxu0 %v1287
        %2621 = vmatmul.mubr.bf16.gmra.mrb[0].mxu0 %v1286
        %v2622 = vpop.f32.mrb[0].mxu0
        %v2623 = vadd.f32 %v2142, %v2622
        %v2624 = vpop.f32.mrb[0].mxu0
        %v2625 = vpop.f32.mrb[0].mxu0
        %v2626 = vadd.f32 %v2145, %v2625
        %v2627 = vpop.f32.mrb[0].mxu0
        %2628 = vmatprep.mubr.bf16.mxu0 %v1291
        %2629 = vmatmul.mubr.bf16.gmra.mrb[0].mxu0 %v1290
        %v2630 = vpop.f32.mrb[0].mxu0
        %v2631 = vadd.f32 %v2150, %v2630
        %v2632 = vpop.f32.mrb[0].mxu0
        %v2633 = vpop.f32.mrb[0].mxu0
        %v2634 = vadd.f32 %v2153, %v2633
        %v2635 = vpop.f32.mrb[0].mxu0
        %2636 = vmatprep.mubr.bf16.mxu0 %v1295
        %2637 = vmatmul.mubr.bf16.gmra.mrb[0].mxu0 %v1294
        %v2638 = vpop.f32.mrb[0].mxu0
        %v2639 = vadd.f32 %v2158, %v2638
        %v2640 = vpop.f32.mrb[0].mxu0
        %v2641 = vpop.f32.mrb[0].mxu0
        %v2642 = vadd.f32 %v2161, %v2641
        %v2643 = vpop.f32.mrb[0].mxu0
        %2644 = vmatprep.mubr.bf16.mxu0 %v1299
        %2645 = vmatmul.mubr.bf16.gmra.mrb[0].mxu0 %v1298
        %v2646 = vpop.f32.mrb[0].mxu0
        %v2647 = vadd.f32 %v2166, %v2646
        %v2648 = vpop.f32.mrb[0].mxu0
        %v2649 = vpop.f32.mrb[0].mxu0
        %v2650 = vadd.f32 %v2169, %v2649
        %v2651 = vpop.f32.mrb[0].mxu0
        %2652 = vmatprep.mubr.bf16.mxu0 %v1303
        %2653 = vmatmul.mubr.bf16.gmra.mrb[0].mxu0 %v1302
        %v2654 = vpop.f32.mrb[0].mxu0
        %v2655 = vadd.f32 %v2174, %v2654
        %v2656 = vpop.f32.mrb[0].mxu0
        %v2657 = vpop.f32.mrb[0].mxu0
        %v2658 = vadd.f32 %v2177, %v2657
        %v2659 = vpop.f32.mrb[0].mxu0
        %2660 = vmatprep.mubr.bf16.mxu0 %v1307
        %2661 = vmatmul.mubr.bf16.gmra.mrb[0].mxu0 %v1306
        %v2662 = vpop.f32.mrb[0].mxu0
        %v2663 = vadd.f32 %v2182, %v2662
        %v2664 = vpop.f32.mrb[0].mxu0
        %v2665 = vpop.f32.mrb[0].mxu0
        %v2666 = vadd.f32 %v2185, %v2665
        %v2667 = vpop.f32.mrb[0].mxu0
        %2668 = vmatprep.mubr.bf16.mxu0 %v1311
        %2669 = vmatmul.mubr.bf16.gmra.mrb[0].mxu0 %v1310
        %v2670 = vpop.f32.mrb[0].mxu0
        %v2671 = vadd.f32 %v2190, %v2670
        %v2672 = vpop.f32.mrb[0].mxu0
        %v2673 = vpop.f32.mrb[0].mxu0
        %v2674 = vadd.f32 %v2193, %v2673
        %v2675 = vpop.f32.mrb[0].mxu0
        %2676 = vmatprep.mubr.bf16.mxu0 %v1315
        %2677 = vmatmul.mubr.bf16.gmra.mrb[0].mxu0 %v1314
        %v2678 = vpop.f32.mrb[0].mxu0
        %v2679 = vadd.f32 %v2198, %v2678
        %v2680 = vpop.f32.mrb[0].mxu0
        %v2681 = vpop.f32.mrb[0].mxu0
        %v2682 = vadd.f32 %v2201, %v2681
        %v2683 = vpop.f32.mrb[0].mxu0
        %2684 = vmatprep.mubr.bf16.mxu0 %v1319
        %2685 = vmatmul.mubr.bf16.gmra.mrb[0].mxu0 %v1318
        %v2686 = vpop.f32.mrb[0].mxu0
        %v2687 = vadd.f32 %v2206, %v2686
        %v2688 = vpop.f32.mrb[0].mxu0
        %v2689 = vpop.f32.mrb[0].mxu0
        %v2690 = vadd.f32 %v2209, %v2689
        %v2691 = vpop.f32.mrb[0].mxu0
        %2692 = vmatprep.mubr.bf16.mxu0 %v1323
        %2693 = vmatmul.mubr.bf16.gmra.mrb[0].mxu0 %v1322
        %v2694 = vpop.f32.mrb[0].mxu0
        %v2695 = vadd.f32 %v2214, %v2694
        %v2696 = vpop.f32.mrb[0].mxu0
        %v2697 = vpop.f32.mrb[0].mxu0
        %v2698 = vadd.f32 %v2217, %v2697
        %v2699 = vpop.f32.mrb[0].mxu0
        %2700 = vmatprep.mubr.bf16.mxu0 %v1327
        %2701 = vmatmul.mubr.bf16.gmra.mrb[0].mxu0 %v1326
        %v2702 = vpop.f32.mrb[0].mxu0
        %v2703 = vadd.f32 %v2222, %v2702
        %v2704 = vpop.f32.mrb[0].mxu0
        %v2705 = vpop.f32.mrb[0].mxu0
        %v2706 = vadd.f32 %v2225, %v2705
        %v2707 = vpop.f32.mrb[0].mxu0
        %2708 = vdwg.mxu0
        %2709 = vmatprep.subr.bf16.mxu0 0
        %2710 = vmatpush1.bf16.msra.mxu0 %v2372
        %2711 = vmatprep.subr.bf16.mxu0 0
        %2712 = vmatpush1.bf16.msra.mxu0 %v2373
        %2713 = vmatprep.subr.bf16.mxu0 0
        %2714 = vmatpush1.bf16.msra.mxu0 %v2374
        %2715 = vmatprep.subr.bf16.mxu0 0
        %2716 = vmatpush1.bf16.msra.mxu0 %v2375
        %2717 = vmatprep.subr.bf16.mxu0 0
        %2718 = vmatpush1.bf16.msra.mxu0 %v2376
        %2719 = vmatprep.subr.bf16.mxu0 0
        %2720 = vmatpush1.bf16.msra.mxu0 %v2377
        %2721 = vmatprep.subr.bf16.mxu0 0
        %2722 = vmatpush1.bf16.msra.mxu0 %v2378
        %2723 = vmatprep.subr.bf16.mxu0 0
        %2724 = vmatpush1.bf16.msra.mxu0 %v2379
        %2725 = vmatprep.subr.bf16.mxu0 0
        %2726 = vmatpush1.bf16.msra.mxu0 %v2380
        %2727 = vmatprep.subr.bf16.mxu0 0
        %2728 = vmatpush1.bf16.msra.mxu0 %v2381
        %2729 = vmatprep.subr.bf16.mxu0 0
        %2730 = vmatpush1.bf16.msra.mxu0 %v2382
        %2731 = vmatprep.subr.bf16.mxu0 0
        %2732 = vmatpush1.bf16.msra.mxu0 %v2383
        %2733 = vmatprep.subr.bf16.mxu0 0
        %2734 = vmatpush1.bf16.msra.mxu0 %v2384
        %2735 = vmatprep.subr.bf16.mxu0 0
        %2736 = vmatpush1.bf16.msra.mxu0 %v2385
        %2737 = vmatprep.subr.bf16.mxu0 0
        %2738 = vmatpush1.bf16.msra.mxu0 %v2386
        %2739 = vmatprep.subr.bf16.mxu0 0
        %2740 = vmatpush1.bf16.msra.mxu0 %v2387
        %2741 = vmatprep.mubr.bf16.mxu0 %v1205
        %2742 = vmatmul.mubr.bf16.gmra.mrb[0].mxu0 %v1204
        %v2743 = vpop.f32.mrb[0].mxu0
        %v2744 = vadd.f32 %v2455, %v2743
        %v2745 = vpop.f32.mrb[0].mxu0
        %v2746 = vpop.f32.mrb[0].mxu0
        %v2747 = vadd.f32 %v2458, %v2746
        %v2748 = vpop.f32.mrb[0].mxu0
        %2749 = vmatprep.mubr.bf16.mxu0 %v1209
        %2750 = vmatmul.mubr.bf16.gmra.mrb[0].mxu0 %v1208
        %v2751 = vpop.f32.mrb[0].mxu0
        %v2752 = vadd.f32 %v2463, %v2751
        %v2753 = vpop.f32.mrb[0].mxu0
        %v2754 = vpop.f32.mrb[0].mxu0
        %v2755 = vadd.f32 %v2466, %v2754
        %v2756 = vpop.f32.mrb[0].mxu0
        %2757 = vmatprep.mubr.bf16.mxu0 %v1213
        %2758 = vmatmul.mubr.bf16.gmra.mrb[0].mxu0 %v1212
        %v2759 = vpop.f32.mrb[0].mxu0
        %v2760 = vadd.f32 %v2471, %v2759
        %v2761 = vpop.f32.mrb[0].mxu0
        %v2762 = vpop.f32.mrb[0].mxu0
        %v2763 = vadd.f32 %v2474, %v2762
        %v2764 = vpop.f32.mrb[0].mxu0
        %2765 = vmatprep.mubr.bf16.mxu0 %v1217
        %2766 = vmatmul.mubr.bf16.gmra.mrb[0].mxu0 %v1216
        %v2767 = vpop.f32.mrb[0].mxu0
        %v2768 = vadd.f32 %v2479, %v2767
        %v2769 = vpop.f32.mrb[0].mxu0
        %v2770 = vpop.f32.mrb[0].mxu0
        %v2771 = vadd.f32 %v2482, %v2770
        %v2772 = vpop.f32.mrb[0].mxu0
        %2773 = vmatprep.mubr.bf16.mxu0 %v1221
        %2774 = vmatmul.mubr.bf16.gmra.mrb[0].mxu0 %v1220
        %v2775 = vpop.f32.mrb[0].mxu0
        %v2776 = vadd.f32 %v2487, %v2775
        %v2777 = vpop.f32.mrb[0].mxu0
        %v2778 = vpop.f32.mrb[0].mxu0
        %v2779 = vadd.f32 %v2490, %v2778
        %v2780 = vpop.f32.mrb[0].mxu0
        %2781 = vmatprep.mubr.bf16.mxu0 %v1225
        %2782 = vmatmul.mubr.bf16.gmra.mrb[0].mxu0 %v1224
        %v2783 = vpop.f32.mrb[0].mxu0
        %v2784 = vadd.f32 %v2495, %v2783
        %v2785 = vpop.f32.mrb[0].mxu0
        %v2786 = vpop.f32.mrb[0].mxu0
        %v2787 = vadd.f32 %v2498, %v2786
        %v2788 = vpop.f32.mrb[0].mxu0
        %2789 = vmatprep.mubr.bf16.mxu0 %v1229
        %2790 = vmatmul.mubr.bf16.gmra.mrb[0].mxu0 %v1228
        %v2791 = vpop.f32.mrb[0].mxu0
        %v2792 = vadd.f32 %v2503, %v2791
        %v2793 = vpop.f32.mrb[0].mxu0
        %v2794 = vpop.f32.mrb[0].mxu0
        %v2795 = vadd.f32 %v2506, %v2794
        %v2796 = vpop.f32.mrb[0].mxu0
        %2797 = vmatprep.mubr.bf16.mxu0 %v1233
        %2798 = vmatmul.mubr.bf16.gmra.mrb[0].mxu0 %v1232
        %v2799 = vpop.f32.mrb[0].mxu0
        %v2800 = vadd.f32 %v2511, %v2799
        %v2801 = vpop.f32.mrb[0].mxu0
        %v2802 = vpop.f32.mrb[0].mxu0
        %v2803 = vadd.f32 %v2514, %v2802
        %v2804 = vpop.f32.mrb[0].mxu0
        %2805 = vmatprep.mubr.bf16.mxu0 %v1237
        %2806 = vmatmul.mubr.bf16.gmra.mrb[0].mxu0 %v1236
        %v2807 = vpop.f32.mrb[0].mxu0
        %v2808 = vadd.f32 %v2519, %v2807
        %v2809 = vpop.f32.mrb[0].mxu0
        %v2810 = vpop.f32.mrb[0].mxu0
        %v2811 = vadd.f32 %v2522, %v2810
        %v2812 = vpop.f32.mrb[0].mxu0
        %2813 = vmatprep.mubr.bf16.mxu0 %v1241
        %2814 = vmatmul.mubr.bf16.gmra.mrb[0].mxu0 %v1240
        %v2815 = vpop.f32.mrb[0].mxu0
        %v2816 = vadd.f32 %v2527, %v2815
        %v2817 = vpop.f32.mrb[0].mxu0
        %v2818 = vpop.f32.mrb[0].mxu0
        %v2819 = vadd.f32 %v2530, %v2818
        %v2820 = vpop.f32.mrb[0].mxu0
        %2821 = vmatprep.mubr.bf16.mxu0 %v1245
        %2822 = vmatmul.mubr.bf16.gmra.mrb[0].mxu0 %v1244
        %v2823 = vpop.f32.mrb[0].mxu0
        %v2824 = vadd.f32 %v2535, %v2823
        %v2825 = vpop.f32.mrb[0].mxu0
        %v2826 = vpop.f32.mrb[0].mxu0
        %v2827 = vadd.f32 %v2538, %v2826
        %v2828 = vpop.f32.mrb[0].mxu0
        %2829 = vmatprep.mubr.bf16.mxu0 %v1249
        %2830 = vmatmul.mubr.bf16.gmra.mrb[0].mxu0 %v1248
        %v2831 = vpop.f32.mrb[0].mxu0
        %v2832 = vadd.f32 %v2543, %v2831
        %v2833 = vpop.f32.mrb[0].mxu0
        %v2834 = vpop.f32.mrb[0].mxu0
        %v2835 = vadd.f32 %v2546, %v2834
        %v2836 = vpop.f32.mrb[0].mxu0
        %2837 = vmatprep.mubr.bf16.mxu0 %v1253
        %2838 = vmatmul.mubr.bf16.gmra.mrb[0].mxu0 %v1252
        %v2839 = vpop.f32.mrb[0].mxu0
        %v2840 = vadd.f32 %v2551, %v2839
        %v2841 = vpop.f32.mrb[0].mxu0
        %v2842 = vpop.f32.mrb[0].mxu0
        %v2843 = vadd.f32 %v2554, %v2842
        %v2844 = vpop.f32.mrb[0].mxu0
        %2845 = vmatprep.mubr.bf16.mxu0 %v1257
        %2846 = vmatmul.mubr.bf16.gmra.mrb[0].mxu0 %v1256
        %v2847 = vpop.f32.mrb[0].mxu0
        %v2848 = vadd.f32 %v2559, %v2847
        %v2849 = vpop.f32.mrb[0].mxu0
        %v2850 = vpop.f32.mrb[0].mxu0
        %v2851 = vadd.f32 %v2562, %v2850
        %v2852 = vpop.f32.mrb[0].mxu0
        %2853 = vmatprep.mubr.bf16.mxu0 %v1261
        %2854 = vmatmul.mubr.bf16.gmra.mrb[0].mxu0 %v1260
        %v2855 = vpop.f32.mrb[0].mxu0
        %v2856 = vadd.f32 %v2567, %v2855
        %v2857 = vpop.f32.mrb[0].mxu0
        %v2858 = vpop.f32.mrb[0].mxu0
        %v2859 = vadd.f32 %v2570, %v2858
        %v2860 = vpop.f32.mrb[0].mxu0
        %2861 = vmatprep.mubr.bf16.mxu0 %v1265
        %2862 = vmatmul.mubr.bf16.gmra.mrb[0].mxu0 %v1264
        %v2863 = vpop.f32.mrb[0].mxu0
        %v2864 = vadd.f32 %v2575, %v2863
        %v2865 = vpop.f32.mrb[0].mxu0
        %v2866 = vpop.f32.mrb[0].mxu0
        %v2867 = vadd.f32 %v2578, %v2866
        %v2868 = vpop.f32.mrb[0].mxu0
        %2869 = vmatprep.mubr.bf16.mxu0 %v1269
        %2870 = vmatmul.mubr.bf16.gmra.mrb[0].mxu0 %v1268
        %v2871 = vpop.f32.mrb[0].mxu0
        %v2872 = vadd.f32 %v2583, %v2871
        %v2873 = vpop.f32.mrb[0].mxu0
        %v2874 = vpop.f32.mrb[0].mxu0
        %v2875 = vadd.f32 %v2586, %v2874
        %v2876 = vpop.f32.mrb[0].mxu0
        %2877 = vmatprep.mubr.bf16.mxu0 %v1273
        %2878 = vmatmul.mubr.bf16.gmra.mrb[0].mxu0 %v1272
        %v2879 = vpop.f32.mrb[0].mxu0
        %v2880 = vadd.f32 %v2591, %v2879
        %v2881 = vpop.f32.mrb[0].mxu0
        %v2882 = vpop.f32.mrb[0].mxu0
        %v2883 = vadd.f32 %v2594, %v2882
        %v2884 = vpop.f32.mrb[0].mxu0
        %2885 = vmatprep.mubr.bf16.mxu0 %v1277
        %2886 = vmatmul.mubr.bf16.gmra.mrb[0].mxu0 %v1276
        %v2887 = vpop.f32.mrb[0].mxu0
        %v2888 = vadd.f32 %v2599, %v2887
        %v2889 = vpop.f32.mrb[0].mxu0
        %v2890 = vpop.f32.mrb[0].mxu0
        %v2891 = vadd.f32 %v2602, %v2890
        %v2892 = vpop.f32.mrb[0].mxu0
        %2893 = vmatprep.mubr.bf16.mxu0 %v1281
        %2894 = vmatmul.mubr.bf16.gmra.mrb[0].mxu0 %v1280
        %v2895 = vpop.f32.mrb[0].mxu0
        %v2896 = vadd.f32 %v2607, %v2895
        %v2897 = vpop.f32.mrb[0].mxu0
        %v2898 = vpop.f32.mrb[0].mxu0
        %v2899 = vadd.f32 %v2610, %v2898
        %v2900 = vpop.f32.mrb[0].mxu0
        %2901 = vmatprep.mubr.bf16.mxu0 %v1285
        %2902 = vmatmul.mubr.bf16.gmra.mrb[0].mxu0 %v1284
        %v2903 = vpop.f32.mrb[0].mxu0
        %v2904 = vadd.f32 %v2615, %v2903
        %v2905 = vpop.f32.mrb[0].mxu0
        %v2906 = vpop.f32.mrb[0].mxu0
        %v2907 = vadd.f32 %v2618, %v2906
        %v2908 = vpop.f32.mrb[0].mxu0
        %2909 = vmatprep.mubr.bf16.mxu0 %v1289
        %2910 = vmatmul.mubr.bf16.gmra.mrb[0].mxu0 %v1288
        %v2911 = vpop.f32.mrb[0].mxu0
        %v2912 = vadd.f32 %v2623, %v2911
        %v2913 = vpop.f32.mrb[0].mxu0
        %v2914 = vpop.f32.mrb[0].mxu0
        %v2915 = vadd.f32 %v2626, %v2914
        %v2916 = vpop.f32.mrb[0].mxu0
        %2917 = vmatprep.mubr.bf16.mxu0 %v1293
        %2918 = vmatmul.mubr.bf16.gmra.mrb[0].mxu0 %v1292
        %v2919 = vpop.f32.mrb[0].mxu0
        %v2920 = vadd.f32 %v2631, %v2919
        %v2921 = vpop.f32.mrb[0].mxu0
        %v2922 = vpop.f32.mrb[0].mxu0
        %v2923 = vadd.f32 %v2634, %v2922
        %v2924 = vpop.f32.mrb[0].mxu0
        %2925 = vmatprep.mubr.bf16.mxu0 %v1297
        %2926 = vmatmul.mubr.bf16.gmra.mrb[0].mxu0 %v1296
        %v2927 = vpop.f32.mrb[0].mxu0
        %v2928 = vadd.f32 %v2639, %v2927
        %v2929 = vpop.f32.mrb[0].mxu0
        %v2930 = vpop.f32.mrb[0].mxu0
        %v2931 = vadd.f32 %v2642, %v2930
        %v2932 = vpop.f32.mrb[0].mxu0
        %2933 = vmatprep.mubr.bf16.mxu0 %v1301
        %2934 = vmatmul.mubr.bf16.gmra.mrb[0].mxu0 %v1300
        %v2935 = vpop.f32.mrb[0].mxu0
        %v2936 = vadd.f32 %v2647, %v2935
        %v2937 = vpop.f32.mrb[0].mxu0
        %v2938 = vpop.f32.mrb[0].mxu0
        %v2939 = vadd.f32 %v2650, %v2938
        %v2940 = vpop.f32.mrb[0].mxu0
        %2941 = vmatprep.mubr.bf16.mxu0 %v1305
        %2942 = vmatmul.mubr.bf16.gmra.mrb[0].mxu0 %v1304
        %v2943 = vpop.f32.mrb[0].mxu0
        %v2944 = vadd.f32 %v2655, %v2943
        %v2945 = vpop.f32.mrb[0].mxu0
        %v2946 = vpop.f32.mrb[0].mxu0
        %v2947 = vadd.f32 %v2658, %v2946
        %v2948 = vpop.f32.mrb[0].mxu0
        %2949 = vmatprep.mubr.bf16.mxu0 %v1309
        %2950 = vmatmul.mubr.bf16.gmra.mrb[0].mxu0 %v1308
        %v2951 = vpop.f32.mrb[0].mxu0
        %v2952 = vadd.f32 %v2663, %v2951
        %v2953 = vpop.f32.mrb[0].mxu0
        %v2954 = vpop.f32.mrb[0].mxu0
        %v2955 = vadd.f32 %v2666, %v2954
        %v2956 = vpop.f32.mrb[0].mxu0
        %2957 = vmatprep.mubr.bf16.mxu0 %v1313
        %2958 = vmatmul.mubr.bf16.gmra.mrb[0].mxu0 %v1312
        %v2959 = vpop.f32.mrb[0].mxu0
        %v2960 = vadd.f32 %v2671, %v2959
        %v2961 = vpop.f32.mrb[0].mxu0
        %v2962 = vpop.f32.mrb[0].mxu0
        %v2963 = vadd.f32 %v2674, %v2962
        %v2964 = vpop.f32.mrb[0].mxu0
        %2965 = vmatprep.mubr.bf16.mxu0 %v1317
        %2966 = vmatmul.mubr.bf16.gmra.mrb[0].mxu0 %v1316
        %v2967 = vpop.f32.mrb[0].mxu0
        %v2968 = vadd.f32 %v2679, %v2967
        %v2969 = vpop.f32.mrb[0].mxu0
        %v2970 = vpop.f32.mrb[0].mxu0
        %v2971 = vadd.f32 %v2682, %v2970
        %v2972 = vpop.f32.mrb[0].mxu0
        %2973 = vmatprep.mubr.bf16.mxu0 %v1321
        %2974 = vmatmul.mubr.bf16.gmra.mrb[0].mxu0 %v1320
        %v2975 = vpop.f32.mrb[0].mxu0
        %v2976 = vadd.f32 %v2687, %v2975
        %v2977 = vpop.f32.mrb[0].mxu0
        %v2978 = vpop.f32.mrb[0].mxu0
        %v2979 = vadd.f32 %v2690, %v2978
        %v2980 = vpop.f32.mrb[0].mxu0
        %2981 = vmatprep.mubr.bf16.mxu0 %v1325
        %2982 = vmatmul.mubr.bf16.gmra.mrb[0].mxu0 %v1324
        %v2983 = vpop.f32.mrb[0].mxu0
        %v2984 = vadd.f32 %v2695, %v2983
        %v2985 = vpop.f32.mrb[0].mxu0
        %v2986 = vpop.f32.mrb[0].mxu0
        %v2987 = vadd.f32 %v2698, %v2986
        %v2988 = vpop.f32.mrb[0].mxu0
        %2989 = vmatprep.mubr.bf16.mxu0 %v1329
        %2990 = vmatmul.mubr.bf16.gmra.mrb[0].mxu0 %v1328
        %v2991 = vpop.f32.mrb[0].mxu0
        %v2992 = vadd.f32 %v2703, %v2991
        %v2993 = vpop.f32.mrb[0].mxu0
        %v2994 = vpop.f32.mrb[0].mxu0
        %v2995 = vadd.f32 %v2706, %v2994
        %v2996 = vpop.f32.mrb[0].mxu0
        %2997 = vdwg.mxu0
        %2998 = vst [vmem:[%s164] sm:$0xff] %v2744
        %2999 = vst [vmem:[%s164 + $0x8] sm:$0xff] %v2747
        %3000 = vst [vmem:[%s164 + $0x10] sm:$0xff] %v2752
        %3001 = vst [vmem:[%s164 + $0x18] sm:$0xff] %v2755
        %3002 = vst [vmem:[%s164 + $0x20] sm:$0xff] %v2760
        %3003 = vst [vmem:[%s164 + $0x28] sm:$0xff] %v2763
        %3004 = vst [vmem:[%s164 + $0x30] sm:$0xff] %v2768
        %3005 = vst [vmem:[%s164 + $0x38] sm:$0xff] %v2771
        %3006 = vst [vmem:[%s164 + $0x40] sm:$0xff] %v2776
        %3007 = vst [vmem:[%s164 + $0x48] sm:$0xff] %v2779
        %3008 = vst [vmem:[%s164 + $0x50] sm:$0xff] %v2784
        %3009 = vst [vmem:[%s164 + $0x58] sm:$0xff] %v2787
        %3010 = vst [vmem:[%s164 + $0x60] sm:$0xff] %v2792
        %3011 = vst [vmem:[%s164 + $0x68] sm:$0xff] %v2795
        %3012 = vst [vmem:[%s164 + $0x70] sm:$0xff] %v2800
        %3013 = vst [vmem:[%s164 + $0x78] sm:$0xff] %v2803
        %3014 = vst [vmem:[%s164 + $0x80] sm:$0xff] %v2808
        %3015 = vst [vmem:[%s164 + $0x88] sm:$0xff] %v2811
        %3016 = vst [vmem:[%s164 + $0x90] sm:$0xff] %v2816
        %3017 = vst [vmem:[%s164 + $0x98] sm:$0xff] %v2819
        %3018 = vst [vmem:[%s164 + $0xa0] sm:$0xff] %v2824
        %3019 = vst [vmem:[%s164 + $0xa8] sm:$0xff] %v2827
        %3020 = vst [vmem:[%s164 + $0xb0] sm:$0xff] %v2832
        %3021 = vst [vmem:[%s164 + $0xb8] sm:$0xff] %v2835
        %3022 = vst [vmem:[%s164 + $0xc0] sm:$0xff] %v2840
        %3023 = vst [vmem:[%s164 + $0xc8] sm:$0xff] %v2843
        %3024 = vst [vmem:[%s164 + $0xd0] sm:$0xff] %v2848
        %3025 = vst [vmem:[%s164 + $0xd8] sm:$0xff] %v2851
        %3026 = vst [vmem:[%s164 + $0xe0] sm:$0xff] %v2856
        %3027 = vst [vmem:[%s164 + $0xe8] sm:$0xff] %v2859
        %3028 = vst [vmem:[%s164 + $0xf0] sm:$0xff] %v2864
        %3029 = vst [vmem:[%s164 + $0xf8] sm:$0xff] %v2867
        %3030 = vst [vmem:[%s164 + $0x100] sm:$0xff] %v2872
        %3031 = vst [vmem:[%s164 + $0x108] sm:$0xff] %v2875
        %3032 = vst [vmem:[%s164 + $0x110] sm:$0xff] %v2880
        %3033 = vst [vmem:[%s164 + $0x118] sm:$0xff] %v2883
        %3034 = vst [vmem:[%s164 + $0x120] sm:$0xff] %v2888
        %3035 = vst [vmem:[%s164 + $0x128] sm:$0xff] %v2891
        %3036 = vst [vmem:[%s164 + $0x130] sm:$0xff] %v2896
        %3037 = vst [vmem:[%s164 + $0x138] sm:$0xff] %v2899
        %3038 = vst [vmem:[%s164 + $0x140] sm:$0xff] %v2904
        %3039 = vst [vmem:[%s164 + $0x148] sm:$0xff] %v2907
        %3040 = vst [vmem:[%s164 + $0x150] sm:$0xff] %v2912
        %3041 = vst [vmem:[%s164 + $0x158] sm:$0xff] %v2915
        %3042 = vst [vmem:[%s164 + $0x160] sm:$0xff] %v2920
        %3043 = vst [vmem:[%s164 + $0x168] sm:$0xff] %v2923
        %3044 = vst [vmem:[%s164 + $0x170] sm:$0xff] %v2928
        %3045 = vst [vmem:[%s164 + $0x178] sm:$0xff] %v2931
        %3046 = vst [vmem:[%s164 + $0x180] sm:$0xff] %v2936
        %3047 = vst [vmem:[%s164 + $0x188] sm:$0xff] %v2939
        %3048 = vst [vmem:[%s164 + $0x190] sm:$0xff] %v2944
        %3049 = vst [vmem:[%s164 + $0x198] sm:$0xff] %v2947
        %3050 = vst [vmem:[%s164 + $0x1a0] sm:$0xff] %v2952
        %3051 = vst [vmem:[%s164 + $0x1a8] sm:$0xff] %v2955
        %3052 = vst [vmem:[%s164 + $0x1b0] sm:$0xff] %v2960
        %3053 = vst [vmem:[%s164 + $0x1b8] sm:$0xff] %v2963
        %3054 = vst [vmem:[%s164 + $0x1c0] sm:$0xff] %v2968
        %3055 = vst [vmem:[%s164 + $0x1c8] sm:$0xff] %v2971
        %3056 = vst [vmem:[%s164 + $0x1d0] sm:$0xff] %v2976
        %3057 = vst [vmem:[%s164 + $0x1d8] sm:$0xff] %v2979
        %3058 = vst [vmem:[%s164 + $0x1e0] sm:$0xff] %v2984
        %3059 = vst [vmem:[%s164 + $0x1e8] sm:$0xff] %v2987
        %3060 = vst [vmem:[%s164 + $0x1f0] sm:$0xff] %v2992
        %3061 = vst [vmem:[%s164 + $0x1f8] sm:$0xff] %v2995
        %s3062 = sand.u32 %s93, 1
        %s3063 = scalar_lea.sflag [#allocation3], %s3062
        %s3064 = sand.u32 %s93, 1
        %s3065 = smul.addr %s3064, 512
        %s3066 = scalar_lea.vmem [#allocation2], %s3065
        // Predicated region
        $region33: #{tpu_custom_call.1} parent=31 // pred_check
          %p3067 = pneg %p103
        $region34: #{tpu_custom_call.1} parent=31 // pred_check_branch
          %3069 = sbr.rel (%p3067) target = $region36
        $region35: #{tpu_custom_call.1} parent=31 // pred_region
          %s3070 = smul.u32 64, %s17
          %s3072 = ssub.s32 8192, 8192
          %3073 = vsyncadd %s3063, %s3072
          %s3074 = smul.addr %s3070, 128
          %s3075 = scalar_lea.hbm %s3, %s3074
          %s3076 = sshll.u32 %s3066, 4
          %s3077 = int_to_ptr.vmem [resolvable:$true] %s3076
          %3082 = dma.vmem_to_hbm [thread:$0]  %s3077, 8192, %s3075, %s3063, 128, 128, 8
        $region36: #{tpu_custom_call.1} parent=31 // pred_fallthru
          _
      $region32: #{tpu_custom_call.1} parent=5 // pred_fallthru
        _
      %p3083 = scmp.le.s32.totalorder 2, %s12
      // Predicated region
      $region37: #{tpu_custom_call.1} parent=5 // pred_check
        %p3084 = pneg %p3083
      $region38: #{tpu_custom_call.1} parent=5 // pred_check_branch
        %3086 = sbr.rel (%p3084) target = $region40
      $region39: #{tpu_custom_call.1} parent=5 // pred_region
        %s3087 = ssub.s32 %s12, 2
        // Predicated region
        $region41: #{tpu_custom_call.1} parent=39 // pred_check
          %p3088 = pneg %p109
        $region42: #{tpu_custom_call.1} parent=39 // pred_check_branch
          %3090 = sbr.rel (%p3088) target = $region44
        $region43: #{tpu_custom_call.1} parent=39 // pred_region
          %s3091 = sand.u32 %s94, 1
          %s3092 = scalar_lea.sflag [#allocation3], %s3091
          %s3093 = sand.u32 %s94, 1
          %s3094 = smul.addr %s3093, 512
          %s3095 = scalar_lea.vmem [#allocation2], %s3094
          %3096 = dma.done %s3092, 8192
        $region44: #{tpu_custom_call.1} parent=39 // pred_fallthru
          _
      $region40: #{tpu_custom_call.1} parent=5 // pred_fallthru
        _
    $region6: #{tpu_custom_call.1} parent=1 // loop_footer
      %s16 = sadd.s32 1, %s12
    $region7: #{tpu_custom_call.1} parent=1 // loop_footer_branch
      %11 = sbr.rel target = $region3
    $region8: #{tpu_custom_call.1} parent=1 // loop_exit
      _
    %3097 = vsyncpa [#allocation3], 1
    %s3098 = scalar_lea.sflag [#allocation3], 1
    %3099 = vsyncpa %s3098, 1

// kernel: tpu_custom_call.1
$region0: #{tpu_custom_call.1}
  #allocation0 [shape = 'u32[]', space=smem, size = 0x4, offset = 0x4, fixed_abs, tag = 'smem constant byte address 0x4 - core index']
  #allocation1 [shape = 'u32[144,128]{1,0:T(1,128)}', space=vmem, size = 0x12000, scoped, tag = 'internal scratch']
  %s0 = inlined_call_operand.vmem [shape: s32[1024,1], index: 0, kind: input, shape index: {}]
  %s1 = inlined_call_operand.vmem [shape: bf16[512,128], index: 1, kind: input, shape index: {}]
  %s2 = inlined_call_operand.vmem [shape: bf16[512,128], index: 2, kind: input, shape index: {}]
  %s3 = inlined_call_operand.hbm [shape: f32[1024,128], index: 3, kind: output, shape index: {}]
  %s4 = sld [smem:[#allocation0]]
  $region45: #{tpu_custom_call.1} parent=0
    _
  %s6 = ssub.s32 1, %s4
  %s7 = scalar_select 0, %s6, %s4
  $region1: #{tpu_custom_call.1} parent=0
    #allocation2 [shape = 'u8[524288]{0}', space=vmem, size = 0x80000, scoped, tag = 'output window, operand 0']
    #allocation3 [shape = 's32[2]{0}', space=sflag, size = 0x8, scoped, tag = 'scoped memory for tpu_custom_call.1']
    %8 = vsyncpa [#allocation3], 0
    %s9 = scalar_lea.sflag [#allocation3], 1
    %10 = vsyncpa %s9, 0
    loop: start=0, step=1, limit=4
    $region2: #{tpu_custom_call.1} parent=1 // loop_pre_header
      _
    $region3: #{tpu_custom_call.1} parent=1 // loop_header
      %s12 = sphi 0, %s16
      %p13 = scmp.ge.s32.totalorder %s12, 4
      %s22 = sphi 0, %s24
      %s25 = sphi 0, %s22
      %s26 = sphi 0, %s25
      %s42 = sphi 0, %s26
      %s46 = sphi 0, %s46
      %s48 = sphi 0, %s46
      %s49 = sphi 0, %s48
      %s63 = sphi 0, %s49
      %s67 = sphi 0, %s67
      %s69 = sphi 0, %s67
      %s70 = sphi 0, %s69
      %s84 = sphi 0, %s70
      %s90 = sphi 0, %s92
      %s93 = sphi 0, %s90
      %s94 = sphi 0, %s93
      %s110 = sphi 0, %s94
    $region4: #{tpu_custom_call.1} parent=1 // loop_header_branch
      %15 = sbr.rel (%p13) target = $region8
    $region5: #{tpu_custom_call.1} parent=1 // loop_body
      %s17 = ssub.s32 %s12, 1
      %s18 = ssub.s32 %s12, 2
      %s19 = sadd.s32 %s12, 1
      %s20 = ssub.s32 %s12, %s19
      %p21 = scmp.eq.s32.totalorder %s20, 0
      %s23 = sadd.s32 %s22, 1
      %s24 = scalar_select %p21, %s22, %s23
      %p27 = pneg %p21
      %p28 = scmp.eq.s32.totalorder %s12, 1
      %p29 = por %p27, %p28
      %p30 = scmp.ne.s32.totalorder %s22, %s25
      %p31 = scmp.eq.s32.totalorder %s12, 0
      %p32 = por %p30, %p31
      %p33 = scmp.ne.s32.totalorder %s22, %s25
      %p34 = scmp.eq.s32.totalorder %s17, 1
      %p35 = por %p33, %p34
      %p36 = scmp.ne.s32.totalorder %s25, %s26
      %p37 = scmp.eq.s32.totalorder %s17, 0
      %p38 = por %p36, %p37
      %p39 = scmp.ne.s32.totalorder %s25, %s26
      %p40 = scmp.eq.s32.totalorder %s18, 1
      %p41 = por %p39, %p40
      %p43 = scmp.ne.s32.totalorder %s26, %s42
      %p44 = scmp.eq.s32.totalorder %s18, 0
      %p45 = por %p43, %p44
      %s47 = sadd.s32 %s46, 1
      %p50 = scmp.eq.s32.totalorder %s12, 1
      %p51 = scmp.ne.s32.totalorder %s46, %s48
      %p52 = scmp.eq.s32.totalorder %s12, 0
      %p53 = por %p51, %p52
      %p54 = scmp.ne.s32.totalorder %s46, %s48
      %p55 = scmp.eq.s32.totalorder %s17, 1
      %p56 = por %p54, %p55
      %p57 = scmp.ne.s32.totalorder %s48, %s49
      %p58 = scmp.eq.s32.totalorder %s17, 0
      %p59 = por %p57, %p58
      %p60 = scmp.ne.s32.totalorder %s48, %s49
      %p61 = scmp.eq.s32.totalorder %s18, 1
      %p62 = por %p60, %p61
      %p64 = scmp.ne.s32.totalorder %s49, %s63
      %p65 = scmp.eq.s32.totalorder %s18, 0
      %p66 = por %p64, %p65
      %s68 = sadd.s32 %s67, 1
      %p71 = scmp.eq.s32.totalorder %s12, 1
      %p72 = scmp.ne.s32.totalorder %s67, %s69
      %p73 = scmp.eq.s32.totalorder %s12, 0
      %p74 = por %p72, %p73
      %p75 = scmp.ne.s32.totalorder %s67, %s69
      %p76 = scmp.eq.s32.totalorder %s17, 1
      %p77 = por %p75, %p76
      %p78 = scmp.ne.s32.totalorder %s69, %s70
      %p79 = scmp.eq.s32.totalorder %s17, 0
      %p80 = por %p78, %p79
      %p81 = scmp.ne.s32.totalorder %s69, %s70
      %p82 = scmp.eq.s32.totalorder %s18, 1
      %p83 = por %p81, %p82
      %p85 = scmp.ne.s32.totalorder %s70, %s84
      %p86 = scmp.eq.s32.totalorder %s18, 0
      %p87 = por %p85, %p86
      %s88 = ssub.s32 %s12, %s19
      %p89 = scmp.eq.s32.totalorder %s88, 0
      %s91 = sadd.s32 %s90, 1
      %s92 = scalar_select %p89, %s90, %s91
      %p95 = pneg %p89
      %p96 = scmp.eq.s32.totalorder %s12, 1
      %p97 = por %p95, %p96
      %p98 = scmp.ne.s32.totalorder %s90, %s93
      %p99 = scmp.eq.s32.totalorder %s12, 0
      %p100 = por %p98, %p99
      %p101 = scmp.ne.s32.totalorder %s90, %s93
      %p102 = scmp.eq.s32.totalorder %s17, 1
      %p103 = por %p101, %p102
      %p104 = scmp.ne.s32.totalorder %s93, %s94
      %p105 = scmp.eq.s32.totalorder %s17, 0
      %p106 = por %p104, %p105
      %p107 = scmp.ne.s32.totalorder %s93, %s94
      %p108 = scmp.eq.s32.totalorder %s18, 1
      %p109 = por %p107, %p108
      %p111 = scmp.ne.s32.totalorder %s94, %s110
      %p112 = scmp.eq.s32.totalorder %s18, 0
      %p113 = por %p111, %p112
      %p114 = scmp.le.s32.totalorder 1, %s12
      %p115 = scmp.lt.s32.totalorder %s12, 3
      %p116 = pnand %p114, %p115
      %p117 = pneg %p116
      // Predicated region
      $region9: #{tpu_custom_call.1} parent=5 // pred_check
        _
      $region10: #{tpu_custom_call.1} parent=5 // pred_check_branch
        %119 = sbr.rel (%p116) target = $region12
      $region11: #{tpu_custom_call.1} parent=5 // pred_region
        %s120 = ssub.s32 %s12, 1
        // Predicated region
        $region13: #{tpu_custom_call.1} parent=11 // pred_check
          %p121 = pneg %p59
        $region14: #{tpu_custom_call.1} parent=11 // pred_check_branch
          %123 = sbr.rel (%p121) target = $region16
        $region15: #{tpu_custom_call.1} parent=11 // pred_region
          _
        $region16: #{tpu_custom_call.1} parent=11 // pred_fallthru
          _
        // Predicated region
        $region17: #{tpu_custom_call.1} parent=11 // pred_check
          %p124 = pneg %p80
        $region18: #{tpu_custom_call.1} parent=11 // pred_check_branch
          %126 = sbr.rel (%p124) target = $region20
        $region19: #{tpu_custom_call.1} parent=11 // pred_region
          _
        $region20: #{tpu_custom_call.1} parent=11 // pred_fallthru
          _
      $region12: #{tpu_custom_call.1} parent=5 // pred_fallthru
        _
      %p127 = scmp.lt.s32.totalorder %s12, 2
      // Predicated region
      $region21: #{tpu_custom_call.1} parent=5 // pred_check
        %p128 = pneg %p127
      $region22: #{tpu_custom_call.1} parent=5 // pred_check_branch
        %130 = sbr.rel (%p128) target = $region24
      $region23: #{tpu_custom_call.1} parent=5 // pred_region
        // Predicated region
        $region25: #{tpu_custom_call.1} parent=23 // pred_check
          %p131 = pneg %p32
        $region26: #{tpu_custom_call.1} parent=23 // pred_check_branch
          %133 = sbr.rel (%p131) target = $region28
        $region27: #{tpu_custom_call.1} parent=23 // pred_region
          %s134 = smul.u32 64, %s12
          %p135 = scmp.lt.s32.totalorder %s134, 127
          %s136 = scalar_select %p135, %s134, 127
          %s137 = smul.addr %s136, 8
          %s138 = scalar_lea.vmem %s0, %s137
          %s139 = smul.u32 64, %s12
        $region28: #{tpu_custom_call.1} parent=23 // pred_fallthru
          _
      $region24: #{tpu_custom_call.1} parent=5 // pred_fallthru
        _
      %p140 = scmp.le.s32.totalorder 1, %s12
      %p141 = scmp.lt.s32.totalorder %s12, 3
      %p142 = pnand %p140, %p141
      %p143 = pneg %p142
      // Predicated region
      $region29: #{tpu_custom_call.1} parent=5 // pred_check
        _
      $region30: #{tpu_custom_call.1} parent=5 // pred_check_branch
        %145 = sbr.rel (%p142) target = $region32
      $region31: #{tpu_custom_call.1} parent=5 // pred_region
        %s146 = ssub.s32 %s12, 1
        %s147 = smul.u32 64, %s17
        %p148 = scmp.lt.s32.totalorder %s147, 127
        %s149 = scalar_select %p148, %s147, 127
        %s150 = smul.addr %s149, 8
        %s151 = scalar_lea.vmem %s0, %s150
        %p152 = pneg %p38
        %p153 = pneg %p35
        %p154 = pneg %p59
        %p155 = pneg %p56
        %p156 = pneg %p80
        %p157 = pneg %p77
        %p158 = pneg %p106
        %p159 = pneg %p103
        %s160 = sand.u32 %s93, 1
        %s161 = scalar_lea.sflag [#allocation3], %s160
        %s162 = sand.u32 %s93, 1
        %s163 = smul.addr %s162, 512
        %s164 = scalar_lea.vmem [#allocation2], %s163
        %s165 = smul.u32 64, %s17
        %p166 = scmp.lt.s32.totalorder %s165, 127
        %s167 = scalar_select %p166, %s165, 127
        %s168 = smul.addr %s167, 8
        %s169 = scalar_lea.vmem %s0, %s168
        %s170 = smul.u32 64, %s17
        %s171 = smul.u32 64, %s17
        %v173 = vld [vmem:[%s169] sm:$0xff]
        %v174 = vld [vmem:[%s169 + $0x8] sm:$0xff]
        %v175 = vld [vmem:[%s169 + $0x10] sm:$0xff]
        %v176 = vld [vmem:[%s169 + $0x18] sm:$0xff]
        %v177 = vld [vmem:[%s169 + $0x20] sm:$0xff]
        %v178 = vld [vmem:[%s169 + $0x28] sm:$0xff]
        %v179 = vld [vmem:[%s169 + $0x30] sm:$0xff]
        %v180 = vld [vmem:[%s169 + $0x38] sm:$0xff]
        %v181 = vld [vmem:[%s169 + $0x40] sm:$0xff]
        %v182 = vld [vmem:[%s169 + $0x48] sm:$0xff]
        %v183 = vld [vmem:[%s169 + $0x50] sm:$0xff]
        %v184 = vld [vmem:[%s169 + $0x58] sm:$0xff]
        %v185 = vld [vmem:[%s169 + $0x60] sm:$0xff]
        %v186 = vld [vmem:[%s169 + $0x68] sm:$0xff]
        %v187 = vld [vmem:[%s169 + $0x70] sm:$0xff]
        %v188 = vld [vmem:[%s169 + $0x78] sm:$0xff]
        %v189 = vld [vmem:[%s169 + $0x80] sm:$0xff]
        %v190 = vld [vmem:[%s169 + $0x88] sm:$0xff]
        %v191 = vld [vmem:[%s169 + $0x90] sm:$0xff]
        %v192 = vld [vmem:[%s169 + $0x98] sm:$0xff]
        %v193 = vld [vmem:[%s169 + $0xa0] sm:$0xff]
        %v194 = vld [vmem:[%s169 + $0xa8] sm:$0xff]
        %v195 = vld [vmem:[%s169 + $0xb0] sm:$0xff]
        %v196 = vld [vmem:[%s169 + $0xb8] sm:$0xff]
        %v197 = vld [vmem:[%s169 + $0xc0] sm:$0xff]
        %v198 = vld [vmem:[%s169 + $0xc8] sm:$0xff]
        %v199 = vld [vmem:[%s169 + $0xd0] sm:$0xff]
        %v200 = vld [vmem:[%s169 + $0xd8] sm:$0xff]
        %v201 = vld [vmem:[%s169 + $0xe0] sm:$0xff]
        %v202 = vld [vmem:[%s169 + $0xe8] sm:$0xff]
        %v203 = vld [vmem:[%s169 + $0xf0] sm:$0xff]
        %v204 = vld [vmem:[%s169 + $0xf8] sm:$0xff]
        %v205 = vld [vmem:[%s169 + $0x100] sm:$0xff]
        %v206 = vld [vmem:[%s169 + $0x108] sm:$0xff]
        %v207 = vld [vmem:[%s169 + $0x110] sm:$0xff]
        %v208 = vld [vmem:[%s169 + $0x118] sm:$0xff]
        %v209 = vld [vmem:[%s169 + $0x120] sm:$0xff]
        %v210 = vld [vmem:[%s169 + $0x128] sm:$0xff]
        %v211 = vld [vmem:[%s169 + $0x130] sm:$0xff]
        %v212 = vld [vmem:[%s169 + $0x138] sm:$0xff]
        %v213 = vld [vmem:[%s169 + $0x140] sm:$0xff]
        %v214 = vld [vmem:[%s169 + $0x148] sm:$0xff]
        %v215 = vld [vmem:[%s169 + $0x150] sm:$0xff]
        %v216 = vld [vmem:[%s169 + $0x158] sm:$0xff]
        %v217 = vld [vmem:[%s169 + $0x160] sm:$0xff]
        %v218 = vld [vmem:[%s169 + $0x168] sm:$0xff]
        %v219 = vld [vmem:[%s169 + $0x170] sm:$0xff]
        %v220 = vld [vmem:[%s169 + $0x178] sm:$0xff]
        %v221 = vld [vmem:[%s169 + $0x180] sm:$0xff]
        %v222 = vld [vmem:[%s169 + $0x188] sm:$0xff]
        %v223 = vld [vmem:[%s169 + $0x190] sm:$0xff]
        %v224 = vld [vmem:[%s169 + $0x198] sm:$0xff]
        %v225 = vld [vmem:[%s169 + $0x1a0] sm:$0xff]
        %v226 = vld [vmem:[%s169 + $0x1a8] sm:$0xff]
        %v227 = vld [vmem:[%s169 + $0x1b0] sm:$0xff]
        %v228 = vld [vmem:[%s169 + $0x1b8] sm:$0xff]
        %v229 = vld [vmem:[%s169 + $0x1c0] sm:$0xff]
        %v230 = vld [vmem:[%s169 + $0x1c8] sm:$0xff]
        %v231 = vld [vmem:[%s169 + $0x1d0] sm:$0xff]
        %v232 = vld [vmem:[%s169 + $0x1d8] sm:$0xff]
        %v233 = vld [vmem:[%s169 + $0x1e0] sm:$0xff]
        %v234 = vld [vmem:[%s169 + $0x1e8] sm:$0xff]
        %v235 = vld [vmem:[%s169 + $0x1f0] sm:$0xff]
        %v236 = vld [vmem:[%s169 + $0x1f8] sm:$0xff]
        %v237 = vlaneseq
        %v238 = vand.u32 %v237, 127
        %v239 = vadd.s32 %v238, 128
        %v240 = vadd.s32 %v238, 256
        %v241 = vadd.s32 %v238, 384
        %242 = vset.pattern.permute.xlu0 0
        %243 = vperm.xlu0 %242, %v173
        %v244 = vpop.permute.xlu0 %243
        %245 = vset.pattern.permute.xlu0 0
        %246 = vperm.xlu0 %245, %v174
        %v247 = vpop.permute.xlu0 %246
        %248 = vset.pattern.permute.xlu0 0
        %249 = vperm.xlu0 %248, %v175
        %v250 = vpop.permute.xlu0 %249
        %251 = vset.pattern.permute.xlu0 0
        %252 = vperm.xlu0 %251, %v176
        %v253 = vpop.permute.xlu0 %252
        %254 = vset.pattern.permute.xlu0 0
        %255 = vperm.xlu0 %254, %v177
        %v256 = vpop.permute.xlu0 %255
        %257 = vset.pattern.permute.xlu0 0
        %258 = vperm.xlu0 %257, %v178
        %v259 = vpop.permute.xlu0 %258
        %260 = vset.pattern.permute.xlu0 0
        %261 = vperm.xlu0 %260, %v179
        %v262 = vpop.permute.xlu0 %261
        %263 = vset.pattern.permute.xlu0 0
        %264 = vperm.xlu0 %263, %v180
        %v265 = vpop.permute.xlu0 %264
        %266 = vset.pattern.permute.xlu0 0
        %267 = vperm.xlu0 %266, %v181
        %v268 = vpop.permute.xlu0 %267
        %269 = vset.pattern.permute.xlu0 0
        %270 = vperm.xlu0 %269, %v182
        %v271 = vpop.permute.xlu0 %270
        %272 = vset.pattern.permute.xlu0 0
        %273 = vperm.xlu0 %272, %v183
        %v274 = vpop.permute.xlu0 %273
        %275 = vset.pattern.permute.xlu0 0
        %276 = vperm.xlu0 %275, %v184
        %v277 = vpop.permute.xlu0 %276
        %278 = vset.pattern.permute.xlu0 0
        %279 = vperm.xlu0 %278, %v185
        %v280 = vpop.permute.xlu0 %279
        %281 = vset.pattern.permute.xlu0 0
        %282 = vperm.xlu0 %281, %v186
        %v283 = vpop.permute.xlu0 %282
        %284 = vset.pattern.permute.xlu0 0
        %285 = vperm.xlu0 %284, %v187
        %v286 = vpop.permute.xlu0 %285
        %287 = vset.pattern.permute.xlu0 0
        %288 = vperm.xlu0 %287, %v188
        %v289 = vpop.permute.xlu0 %288
        %290 = vset.pattern.permute.xlu0 0
        %291 = vperm.xlu0 %290, %v189
        %v292 = vpop.permute.xlu0 %291
        %293 = vset.pattern.permute.xlu0 0
        %294 = vperm.xlu0 %293, %v190
        %v295 = vpop.permute.xlu0 %294
        %296 = vset.pattern.permute.xlu0 0
        %297 = vperm.xlu0 %296, %v191
        %v298 = vpop.permute.xlu0 %297
        %299 = vset.pattern.permute.xlu0 0
        %300 = vperm.xlu0 %299, %v192
        %v301 = vpop.permute.xlu0 %300
        %302 = vset.pattern.permute.xlu0 0
        %303 = vperm.xlu0 %302, %v193
        %v304 = vpop.permute.xlu0 %303
        %305 = vset.pattern.permute.xlu0 0
        %306 = vperm.xlu0 %305, %v194
        %v307 = vpop.permute.xlu0 %306
        %308 = vset.pattern.permute.xlu0 0
        %309 = vperm.xlu0 %308, %v195
        %v310 = vpop.permute.xlu0 %309
        %311 = vset.pattern.permute.xlu0 0
        %312 = vperm.xlu0 %311, %v196
        %v313 = vpop.permute.xlu0 %312
        %314 = vset.pattern.permute.xlu0 0
        %315 = vperm.xlu0 %314, %v197
        %v316 = vpop.permute.xlu0 %315
        %317 = vset.pattern.permute.xlu0 0
        %318 = vperm.xlu0 %317, %v198
        %v319 = vpop.permute.xlu0 %318
        %320 = vset.pattern.permute.xlu0 0
        %321 = vperm.xlu0 %320, %v199
        %v322 = vpop.permute.xlu0 %321
        %323 = vset.pattern.permute.xlu0 0
        %324 = vperm.xlu0 %323, %v200
        %v325 = vpop.permute.xlu0 %324
        %326 = vset.pattern.permute.xlu0 0
        %327 = vperm.xlu0 %326, %v201
        %v328 = vpop.permute.xlu0 %327
        %329 = vset.pattern.permute.xlu0 0
        %330 = vperm.xlu0 %329, %v202
        %v331 = vpop.permute.xlu0 %330
        %332 = vset.pattern.permute.xlu0 0
        %333 = vperm.xlu0 %332, %v203
        %v334 = vpop.permute.xlu0 %333
        %335 = vset.pattern.permute.xlu0 0
        %336 = vperm.xlu0 %335, %v204
        %v337 = vpop.permute.xlu0 %336
        %338 = vset.pattern.permute.xlu0 0
        %339 = vperm.xlu0 %338, %v205
        %v340 = vpop.permute.xlu0 %339
        %341 = vset.pattern.permute.xlu0 0
        %342 = vperm.xlu0 %341, %v206
        %v343 = vpop.permute.xlu0 %342
        %344 = vset.pattern.permute.xlu0 0
        %345 = vperm.xlu0 %344, %v207
        %v346 = vpop.permute.xlu0 %345
        %347 = vset.pattern.permute.xlu0 0
        %348 = vperm.xlu0 %347, %v208
        %v349 = vpop.permute.xlu0 %348
        %350 = vset.pattern.permute.xlu0 0
        %351 = vperm.xlu0 %350, %v209
        %v352 = vpop.permute.xlu0 %351
        %353 = vset.pattern.permute.xlu0 0
        %354 = vperm.xlu0 %353, %v210
        %v355 = vpop.permute.xlu0 %354
        %356 = vset.pattern.permute.xlu0 0
        %357 = vperm.xlu0 %356, %v211
        %v358 = vpop.permute.xlu0 %357
        %359 = vset.pattern.permute.xlu0 0
        %360 = vperm.xlu0 %359, %v212
        %v361 = vpop.permute.xlu0 %360
        %362 = vset.pattern.permute.xlu0 0
        %363 = vperm.xlu0 %362, %v213
        %v364 = vpop.permute.xlu0 %363
        %365 = vset.pattern.permute.xlu0 0
        %366 = vperm.xlu0 %365, %v214
        %v367 = vpop.permute.xlu0 %366
        %368 = vset.pattern.permute.xlu0 0
        %369 = vperm.xlu0 %368, %v215
        %v370 = vpop.permute.xlu0 %369
        %371 = vset.pattern.permute.xlu0 0
        %372 = vperm.xlu0 %371, %v216
        %v373 = vpop.permute.xlu0 %372
        %374 = vset.pattern.permute.xlu0 0
        %375 = vperm.xlu0 %374, %v217
        %v376 = vpop.permute.xlu0 %375
        %377 = vset.pattern.permute.xlu0 0
        %378 = vperm.xlu0 %377, %v218
        %v379 = vpop.permute.xlu0 %378
        %380 = vset.pattern.permute.xlu0 0
        %381 = vperm.xlu0 %380, %v219
        %v382 = vpop.permute.xlu0 %381
        %383 = vset.pattern.permute.xlu0 0
        %384 = vperm.xlu0 %383, %v220
        %v385 = vpop.permute.xlu0 %384
        %386 = vset.pattern.permute.xlu0 0
        %387 = vperm.xlu0 %386, %v221
        %v388 = vpop.permute.xlu0 %387
        %389 = vset.pattern.permute.xlu0 0
        %390 = vperm.xlu0 %389, %v222
        %v391 = vpop.permute.xlu0 %390
        %392 = vset.pattern.permute.xlu0 0
        %393 = vperm.xlu0 %392, %v223
        %v394 = vpop.permute.xlu0 %393
        %395 = vset.pattern.permute.xlu0 0
        %396 = vperm.xlu0 %395, %v224
        %v397 = vpop.permute.xlu0 %396
        %398 = vset.pattern.permute.xlu0 0
        %399 = vperm.xlu0 %398, %v225
        %v400 = vpop.permute.xlu0 %399
        %401 = vset.pattern.permute.xlu0 0
        %402 = vperm.xlu0 %401, %v226
        %v403 = vpop.permute.xlu0 %402
        %404 = vset.pattern.permute.xlu0 0
        %405 = vperm.xlu0 %404, %v227
        %v406 = vpop.permute.xlu0 %405
        %407 = vset.pattern.permute.xlu0 0
        %408 = vperm.xlu0 %407, %v228
        %v409 = vpop.permute.xlu0 %408
        %410 = vset.pattern.permute.xlu0 0
        %411 = vperm.xlu0 %410, %v229
        %v412 = vpop.permute.xlu0 %411
        %413 = vset.pattern.permute.xlu0 0
        %414 = vperm.xlu0 %413, %v230
        %v415 = vpop.permute.xlu0 %414
        %416 = vset.pattern.permute.xlu0 0
        %417 = vperm.xlu0 %416, %v231
        %v418 = vpop.permute.xlu0 %417
        %419 = vset.pattern.permute.xlu0 0
        %420 = vperm.xlu0 %419, %v232
        %v421 = vpop.permute.xlu0 %420
        %422 = vset.pattern.permute.xlu0 0
        %423 = vperm.xlu0 %422, %v233
        %v424 = vpop.permute.xlu0 %423
        %425 = vset.pattern.permute.xlu0 0
        %426 = vperm.xlu0 %425, %v234
        %v427 = vpop.permute.xlu0 %426
        %428 = vset.pattern.permute.xlu0 0
        %429 = vperm.xlu0 %428, %v235
        %v430 = vpop.permute.xlu0 %429
        %431 = vset.pattern.permute.xlu0 0
        %432 = vperm.xlu0 %431, %v236
        %v433 = vpop.permute.xlu0 %432
        %vm434 = vcmp.eq.s32.totalorder %v238, %v244
        %vm435 = vcmp.eq.s32.totalorder %v239, %v244
        %vm436 = vcmp.eq.s32.totalorder %v240, %v244
        %vm437 = vcmp.eq.s32.totalorder %v241, %v244
        %vm438 = vcmp.eq.s32.totalorder %v238, %v247
        %vm439 = vcmp.eq.s32.totalorder %v239, %v247
        %vm440 = vcmp.eq.s32.totalorder %v240, %v247
        %vm441 = vcmp.eq.s32.totalorder %v241, %v247
        %vm442 = vcmp.eq.s32.totalorder %v238, %v250
        %vm443 = vcmp.eq.s32.totalorder %v239, %v250
        %vm444 = vcmp.eq.s32.totalorder %v240, %v250
        %vm445 = vcmp.eq.s32.totalorder %v241, %v250
        %vm446 = vcmp.eq.s32.totalorder %v238, %v253
        %vm447 = vcmp.eq.s32.totalorder %v239, %v253
        %vm448 = vcmp.eq.s32.totalorder %v240, %v253
        %vm449 = vcmp.eq.s32.totalorder %v241, %v253
        %vm450 = vcmp.eq.s32.totalorder %v238, %v256
        %vm451 = vcmp.eq.s32.totalorder %v239, %v256
        %vm452 = vcmp.eq.s32.totalorder %v240, %v256
        %vm453 = vcmp.eq.s32.totalorder %v241, %v256
        %vm454 = vcmp.eq.s32.totalorder %v238, %v259
        %vm455 = vcmp.eq.s32.totalorder %v239, %v259
        %vm456 = vcmp.eq.s32.totalorder %v240, %v259
        %vm457 = vcmp.eq.s32.totalorder %v241, %v259
        %vm458 = vcmp.eq.s32.totalorder %v238, %v262
        %vm459 = vcmp.eq.s32.totalorder %v239, %v262
        %vm460 = vcmp.eq.s32.totalorder %v240, %v262
        %vm461 = vcmp.eq.s32.totalorder %v241, %v262
        %vm462 = vcmp.eq.s32.totalorder %v238, %v265
        %vm463 = vcmp.eq.s32.totalorder %v239, %v265
        %vm464 = vcmp.eq.s32.totalorder %v240, %v265
        %vm465 = vcmp.eq.s32.totalorder %v241, %v265
        %vm466 = vcmp.eq.s32.totalorder %v238, %v268
        %vm467 = vcmp.eq.s32.totalorder %v239, %v268
        %vm468 = vcmp.eq.s32.totalorder %v240, %v268
        %vm469 = vcmp.eq.s32.totalorder %v241, %v268
        %vm470 = vcmp.eq.s32.totalorder %v238, %v271
        %vm471 = vcmp.eq.s32.totalorder %v239, %v271
        %vm472 = vcmp.eq.s32.totalorder %v240, %v271
        %vm473 = vcmp.eq.s32.totalorder %v241, %v271
        %vm474 = vcmp.eq.s32.totalorder %v238, %v274
        %vm475 = vcmp.eq.s32.totalorder %v239, %v274
        %vm476 = vcmp.eq.s32.totalorder %v240, %v274
        %vm477 = vcmp.eq.s32.totalorder %v241, %v274
        %vm478 = vcmp.eq.s32.totalorder %v238, %v277
        %vm479 = vcmp.eq.s32.totalorder %v239, %v277
        %vm480 = vcmp.eq.s32.totalorder %v240, %v277
        %vm481 = vcmp.eq.s32.totalorder %v241, %v277
        %vm482 = vcmp.eq.s32.totalorder %v238, %v280
        %vm483 = vcmp.eq.s32.totalorder %v239, %v280
        %vm484 = vcmp.eq.s32.totalorder %v240, %v280
        %vm485 = vcmp.eq.s32.totalorder %v241, %v280
        %vm486 = vcmp.eq.s32.totalorder %v238, %v283
        %vm487 = vcmp.eq.s32.totalorder %v239, %v283
        %vm488 = vcmp.eq.s32.totalorder %v240, %v283
        %vm489 = vcmp.eq.s32.totalorder %v241, %v283
        %vm490 = vcmp.eq.s32.totalorder %v238, %v286
        %vm491 = vcmp.eq.s32.totalorder %v239, %v286
        %vm492 = vcmp.eq.s32.totalorder %v240, %v286
        %vm493 = vcmp.eq.s32.totalorder %v241, %v286
        %vm494 = vcmp.eq.s32.totalorder %v238, %v289
        %vm495 = vcmp.eq.s32.totalorder %v239, %v289
        %vm496 = vcmp.eq.s32.totalorder %v240, %v289
        %vm497 = vcmp.eq.s32.totalorder %v241, %v289
        %vm498 = vcmp.eq.s32.totalorder %v238, %v292
        %vm499 = vcmp.eq.s32.totalorder %v239, %v292
        %vm500 = vcmp.eq.s32.totalorder %v240, %v292
        %vm501 = vcmp.eq.s32.totalorder %v241, %v292
        %vm502 = vcmp.eq.s32.totalorder %v238, %v295
        %vm503 = vcmp.eq.s32.totalorder %v239, %v295
        %vm504 = vcmp.eq.s32.totalorder %v240, %v295
        %vm505 = vcmp.eq.s32.totalorder %v241, %v295
        %vm506 = vcmp.eq.s32.totalorder %v238, %v298
        %vm507 = vcmp.eq.s32.totalorder %v239, %v298
        %vm508 = vcmp.eq.s32.totalorder %v240, %v298
        %vm509 = vcmp.eq.s32.totalorder %v241, %v298
        %vm510 = vcmp.eq.s32.totalorder %v238, %v301
        %vm511 = vcmp.eq.s32.totalorder %v239, %v301
        %vm512 = vcmp.eq.s32.totalorder %v240, %v301
        %vm513 = vcmp.eq.s32.totalorder %v241, %v301
        %vm514 = vcmp.eq.s32.totalorder %v238, %v304
        %vm515 = vcmp.eq.s32.totalorder %v239, %v304
        %vm516 = vcmp.eq.s32.totalorder %v240, %v304
        %vm517 = vcmp.eq.s32.totalorder %v241, %v304
        %vm518 = vcmp.eq.s32.totalorder %v238, %v307
        %vm519 = vcmp.eq.s32.totalorder %v239, %v307
        %vm520 = vcmp.eq.s32.totalorder %v240, %v307
        %vm521 = vcmp.eq.s32.totalorder %v241, %v307
        %vm522 = vcmp.eq.s32.totalorder %v238, %v310
        %vm523 = vcmp.eq.s32.totalorder %v239, %v310
        %vm524 = vcmp.eq.s32.totalorder %v240, %v310
        %vm525 = vcmp.eq.s32.totalorder %v241, %v310
        %vm526 = vcmp.eq.s32.totalorder %v238, %v313
        %vm527 = vcmp.eq.s32.totalorder %v239, %v313
        %vm528 = vcmp.eq.s32.totalorder %v240, %v313
        %vm529 = vcmp.eq.s32.totalorder %v241, %v313
        %vm530 = vcmp.eq.s32.totalorder %v238, %v316
        %vm531 = vcmp.eq.s32.totalorder %v239, %v316
        %vm532 = vcmp.eq.s32.totalorder %v240, %v316
        %vm533 = vcmp.eq.s32.totalorder %v241, %v316
        %vm534 = vcmp.eq.s32.totalorder %v238, %v319
        %vm535 = vcmp.eq.s32.totalorder %v239, %v319
        %vm536 = vcmp.eq.s32.totalorder %v240, %v319
        %vm537 = vcmp.eq.s32.totalorder %v241, %v319
        %vm538 = vcmp.eq.s32.totalorder %v238, %v322
        %vm539 = vcmp.eq.s32.totalorder %v239, %v322
        %vm540 = vcmp.eq.s32.totalorder %v240, %v322
        %vm541 = vcmp.eq.s32.totalorder %v241, %v322
        %vm542 = vcmp.eq.s32.totalorder %v238, %v325
        %vm543 = vcmp.eq.s32.totalorder %v239, %v325
        %vm544 = vcmp.eq.s32.totalorder %v240, %v325
        %vm545 = vcmp.eq.s32.totalorder %v241, %v325
        %vm546 = vcmp.eq.s32.totalorder %v238, %v328
        %vm547 = vcmp.eq.s32.totalorder %v239, %v328
        %vm548 = vcmp.eq.s32.totalorder %v240, %v328
        %vm549 = vcmp.eq.s32.totalorder %v241, %v328
        %vm550 = vcmp.eq.s32.totalorder %v238, %v331
        %vm551 = vcmp.eq.s32.totalorder %v239, %v331
        %vm552 = vcmp.eq.s32.totalorder %v240, %v331
        %vm553 = vcmp.eq.s32.totalorder %v241, %v331
        %vm554 = vcmp.eq.s32.totalorder %v238, %v334
        %vm555 = vcmp.eq.s32.totalorder %v239, %v334
        %vm556 = vcmp.eq.s32.totalorder %v240, %v334
        %vm557 = vcmp.eq.s32.totalorder %v241, %v334
        %vm558 = vcmp.eq.s32.totalorder %v238, %v337
        %vm559 = vcmp.eq.s32.totalorder %v239, %v337
        %vm560 = vcmp.eq.s32.totalorder %v240, %v337
        %vm561 = vcmp.eq.s32.totalorder %v241, %v337
        %vm562 = vcmp.eq.s32.totalorder %v238, %v340
        %vm563 = vcmp.eq.s32.totalorder %v239, %v340
        %vm564 = vcmp.eq.s32.totalorder %v240, %v340
        %vm565 = vcmp.eq.s32.totalorder %v241, %v340
        %vm566 = vcmp.eq.s32.totalorder %v238, %v343
        %vm567 = vcmp.eq.s32.totalorder %v239, %v343
        %vm568 = vcmp.eq.s32.totalorder %v240, %v343
        %vm569 = vcmp.eq.s32.totalorder %v241, %v343
        %vm570 = vcmp.eq.s32.totalorder %v238, %v346
        %vm571 = vcmp.eq.s32.totalorder %v239, %v346
        %vm572 = vcmp.eq.s32.totalorder %v240, %v346
        %vm573 = vcmp.eq.s32.totalorder %v241, %v346
        %vm574 = vcmp.eq.s32.totalorder %v238, %v349
        %vm575 = vcmp.eq.s32.totalorder %v239, %v349
        %vm576 = vcmp.eq.s32.totalorder %v240, %v349
        %vm577 = vcmp.eq.s32.totalorder %v241, %v349
        %vm578 = vcmp.eq.s32.totalorder %v238, %v352
        %vm579 = vcmp.eq.s32.totalorder %v239, %v352
        %vm580 = vcmp.eq.s32.totalorder %v240, %v352
        %vm581 = vcmp.eq.s32.totalorder %v241, %v352
        %vm582 = vcmp.eq.s32.totalorder %v238, %v355
        %vm583 = vcmp.eq.s32.totalorder %v239, %v355
        %vm584 = vcmp.eq.s32.totalorder %v240, %v355
        %vm585 = vcmp.eq.s32.totalorder %v241, %v355
        %vm586 = vcmp.eq.s32.totalorder %v238, %v358
        %vm587 = vcmp.eq.s32.totalorder %v239, %v358
        %vm588 = vcmp.eq.s32.totalorder %v240, %v358
        %vm589 = vcmp.eq.s32.totalorder %v241, %v358
        %vm590 = vcmp.eq.s32.totalorder %v238, %v361
        %vm591 = vcmp.eq.s32.totalorder %v239, %v361
        %vm592 = vcmp.eq.s32.totalorder %v240, %v361
        %vm593 = vcmp.eq.s32.totalorder %v241, %v361
        %vm594 = vcmp.eq.s32.totalorder %v238, %v364
        %vm595 = vcmp.eq.s32.totalorder %v239, %v364
        %vm596 = vcmp.eq.s32.totalorder %v240, %v364
        %vm597 = vcmp.eq.s32.totalorder %v241, %v364
        %vm598 = vcmp.eq.s32.totalorder %v238, %v367
        %vm599 = vcmp.eq.s32.totalorder %v239, %v367
        %vm600 = vcmp.eq.s32.totalorder %v240, %v367
        %vm601 = vcmp.eq.s32.totalorder %v241, %v367
        %vm602 = vcmp.eq.s32.totalorder %v238, %v370
        %vm603 = vcmp.eq.s32.totalorder %v239, %v370
        %vm604 = vcmp.eq.s32.totalorder %v240, %v370
        %vm605 = vcmp.eq.s32.totalorder %v241, %v370
        %vm606 = vcmp.eq.s32.totalorder %v238, %v373
        %vm607 = vcmp.eq.s32.totalorder %v239, %v373
        %vm608 = vcmp.eq.s32.totalorder %v240, %v373
        %vm609 = vcmp.eq.s32.totalorder %v241, %v373
        %vm610 = vcmp.eq.s32.totalorder %v238, %v376
        %vm611 = vcmp.eq.s32.totalorder %v239, %v376
        %vm612 = vcmp.eq.s32.totalorder %v240, %v376
        %vm613 = vcmp.eq.s32.totalorder %v241, %v376
        %vm614 = vcmp.eq.s32.totalorder %v238, %v379
        %vm615 = vcmp.eq.s32.totalorder %v239, %v379
        %vm616 = vcmp.eq.s32.totalorder %v240, %v379
        %vm617 = vcmp.eq.s32.totalorder %v241, %v379
        %vm618 = vcmp.eq.s32.totalorder %v238, %v382
        %vm619 = vcmp.eq.s32.totalorder %v239, %v382
        %vm620 = vcmp.eq.s32.totalorder %v240, %v382
        %vm621 = vcmp.eq.s32.totalorder %v241, %v382
        %vm622 = vcmp.eq.s32.totalorder %v238, %v385
        %vm623 = vcmp.eq.s32.totalorder %v239, %v385
        %vm624 = vcmp.eq.s32.totalorder %v240, %v385
        %vm625 = vcmp.eq.s32.totalorder %v241, %v385
        %vm626 = vcmp.eq.s32.totalorder %v238, %v388
        %vm627 = vcmp.eq.s32.totalorder %v239, %v388
        %vm628 = vcmp.eq.s32.totalorder %v240, %v388
        %vm629 = vcmp.eq.s32.totalorder %v241, %v388
        %vm630 = vcmp.eq.s32.totalorder %v238, %v391
        %vm631 = vcmp.eq.s32.totalorder %v239, %v391
        %vm632 = vcmp.eq.s32.totalorder %v240, %v391
        %vm633 = vcmp.eq.s32.totalorder %v241, %v391
        %vm634 = vcmp.eq.s32.totalorder %v238, %v394
        %vm635 = vcmp.eq.s32.totalorder %v239, %v394
        %vm636 = vcmp.eq.s32.totalorder %v240, %v394
        %vm637 = vcmp.eq.s32.totalorder %v241, %v394
        %vm638 = vcmp.eq.s32.totalorder %v238, %v397
        %vm639 = vcmp.eq.s32.totalorder %v239, %v397
        %vm640 = vcmp.eq.s32.totalorder %v240, %v397
        %vm641 = vcmp.eq.s32.totalorder %v241, %v397
        %vm642 = vcmp.eq.s32.totalorder %v238, %v400
        %vm643 = vcmp.eq.s32.totalorder %v239, %v400
        %vm644 = vcmp.eq.s32.totalorder %v240, %v400
        %vm645 = vcmp.eq.s32.totalorder %v241, %v400
        %vm646 = vcmp.eq.s32.totalorder %v238, %v403
        %vm647 = vcmp.eq.s32.totalorder %v239, %v403
        %vm648 = vcmp.eq.s32.totalorder %v240, %v403
        %vm649 = vcmp.eq.s32.totalorder %v241, %v403
        %vm650 = vcmp.eq.s32.totalorder %v238, %v406
        %vm651 = vcmp.eq.s32.totalorder %v239, %v406
        %vm652 = vcmp.eq.s32.totalorder %v240, %v406
        %vm653 = vcmp.eq.s32.totalorder %v241, %v406
        %vm654 = vcmp.eq.s32.totalorder %v238, %v409
        %vm655 = vcmp.eq.s32.totalorder %v239, %v409
        %vm656 = vcmp.eq.s32.totalorder %v240, %v409
        %vm657 = vcmp.eq.s32.totalorder %v241, %v409
        %vm658 = vcmp.eq.s32.totalorder %v238, %v412
        %vm659 = vcmp.eq.s32.totalorder %v239, %v412
        %vm660 = vcmp.eq.s32.totalorder %v240, %v412
        %vm661 = vcmp.eq.s32.totalorder %v241, %v412
        %vm662 = vcmp.eq.s32.totalorder %v238, %v415
        %vm663 = vcmp.eq.s32.totalorder %v239, %v415
        %vm664 = vcmp.eq.s32.totalorder %v240, %v415
        %vm665 = vcmp.eq.s32.totalorder %v241, %v415
        %vm666 = vcmp.eq.s32.totalorder %v238, %v418
        %vm667 = vcmp.eq.s32.totalorder %v239, %v418
        %vm668 = vcmp.eq.s32.totalorder %v240, %v418
        %vm669 = vcmp.eq.s32.totalorder %v241, %v418
        %vm670 = vcmp.eq.s32.totalorder %v238, %v421
        %vm671 = vcmp.eq.s32.totalorder %v239, %v421
        %vm672 = vcmp.eq.s32.totalorder %v240, %v421
        %vm673 = vcmp.eq.s32.totalorder %v241, %v421
        %vm674 = vcmp.eq.s32.totalorder %v238, %v424
        %vm675 = vcmp.eq.s32.totalorder %v239, %v424
        %vm676 = vcmp.eq.s32.totalorder %v240, %v424
        %vm677 = vcmp.eq.s32.totalorder %v241, %v424
        %vm678 = vcmp.eq.s32.totalorder %v238, %v427
        %vm679 = vcmp.eq.s32.totalorder %v239, %v427
        %vm680 = vcmp.eq.s32.totalorder %v240, %v427
        %vm681 = vcmp.eq.s32.totalorder %v241, %v427
        %vm682 = vcmp.eq.s32.totalorder %v238, %v430
        %vm683 = vcmp.eq.s32.totalorder %v239, %v430
        %vm684 = vcmp.eq.s32.totalorder %v240, %v430
        %vm685 = vcmp.eq.s32.totalorder %v241, %v430
        %vm686 = vcmp.eq.s32.totalorder %v238, %v433
        %vm687 = vcmp.eq.s32.totalorder %v239, %v433
        %vm688 = vcmp.eq.s32.totalorder %v240, %v433
        %vm689 = vcmp.eq.s32.totalorder %v241, %v433
        %v690 = vsel %vm434, 1, 0
        %v691 = vsel %vm435, 1, 0
        %v692 = vsel %vm436, 1, 0
        %v693 = vsel %vm437, 1, 0
        %v694 = vsel %vm438, 1, 0
        %v695 = vsel %vm439, 1, 0
        %v696 = vsel %vm440, 1, 0
        %v697 = vsel %vm441, 1, 0
        %v698 = vsel %vm442, 1, 0
        %v699 = vsel %vm443, 1, 0
        %v700 = vsel %vm444, 1, 0
        %v701 = vsel %vm445, 1, 0
        %v702 = vsel %vm446, 1, 0
        %v703 = vsel %vm447, 1, 0
        %v704 = vsel %vm448, 1, 0
        %v705 = vsel %vm449, 1, 0
        %v706 = vsel %vm450, 1, 0
        %v707 = vsel %vm451, 1, 0
        %v708 = vsel %vm452, 1, 0
        %v709 = vsel %vm453, 1, 0
        %v710 = vsel %vm454, 1, 0
        %v711 = vsel %vm455, 1, 0
        %v712 = vsel %vm456, 1, 0
        %v713 = vsel %vm457, 1, 0
        %v714 = vsel %vm458, 1, 0
        %v715 = vsel %vm459, 1, 0
        %v716 = vsel %vm460, 1, 0
        %v717 = vsel %vm461, 1, 0
        %v718 = vsel %vm462, 1, 0
        %v719 = vsel %vm463, 1, 0
        %v720 = vsel %vm464, 1, 0
        %v721 = vsel %vm465, 1, 0
        %v722 = vsel %vm466, 1, 0
        %v723 = vsel %vm467, 1, 0
        %v724 = vsel %vm468, 1, 0
        %v725 = vsel %vm469, 1, 0
        %v726 = vsel %vm470, 1, 0
        %v727 = vsel %vm471, 1, 0
        %v728 = vsel %vm472, 1, 0
        %v729 = vsel %vm473, 1, 0
        %v730 = vsel %vm474, 1, 0
        %v731 = vsel %vm475, 1, 0
        %v732 = vsel %vm476, 1, 0
        %v733 = vsel %vm477, 1, 0
        %v734 = vsel %vm478, 1, 0
        %v735 = vsel %vm479, 1, 0
        %v736 = vsel %vm480, 1, 0
        %v737 = vsel %vm481, 1, 0
        %v738 = vsel %vm482, 1, 0
        %v739 = vsel %vm483, 1, 0
        %v740 = vsel %vm484, 1, 0
        %v741 = vsel %vm485, 1, 0
        %v742 = vsel %vm486, 1, 0
        %v743 = vsel %vm487, 1, 0
        %v744 = vsel %vm488, 1, 0
        %v745 = vsel %vm489, 1, 0
        %v746 = vsel %vm490, 1, 0
        %v747 = vsel %vm491, 1, 0
        %v748 = vsel %vm492, 1, 0
        %v749 = vsel %vm493, 1, 0
        %v750 = vsel %vm494, 1, 0
        %v751 = vsel %vm495, 1, 0
        %v752 = vsel %vm496, 1, 0
        %v753 = vsel %vm497, 1, 0
        %v754 = vsel %vm498, 1, 0
        %v755 = vsel %vm499, 1, 0
        %v756 = vsel %vm500, 1, 0
        %v757 = vsel %vm501, 1, 0
        %v758 = vsel %vm502, 1, 0
        %v759 = vsel %vm503, 1, 0
        %v760 = vsel %vm504, 1, 0
        %v761 = vsel %vm505, 1, 0
        %v762 = vsel %vm506, 1, 0
        %v763 = vsel %vm507, 1, 0
        %v764 = vsel %vm508, 1, 0
        %v765 = vsel %vm509, 1, 0
        %v766 = vsel %vm510, 1, 0
        %v767 = vsel %vm511, 1, 0
        %v768 = vsel %vm512, 1, 0
        %v769 = vsel %vm513, 1, 0
        %v770 = vsel %vm514, 1, 0
        %v771 = vsel %vm515, 1, 0
        %v772 = vsel %vm516, 1, 0
        %v773 = vsel %vm517, 1, 0
        %v774 = vsel %vm518, 1, 0
        %v775 = vsel %vm519, 1, 0
        %v776 = vsel %vm520, 1, 0
        %v777 = vsel %vm521, 1, 0
        %v778 = vsel %vm522, 1, 0
        %v779 = vsel %vm523, 1, 0
        %v780 = vsel %vm524, 1, 0
        %v781 = vsel %vm525, 1, 0
        %v782 = vsel %vm526, 1, 0
        %v783 = vsel %vm527, 1, 0
        %v784 = vsel %vm528, 1, 0
        %v785 = vsel %vm529, 1, 0
        %v786 = vsel %vm530, 1, 0
        %v787 = vsel %vm531, 1, 0
        %v788 = vsel %vm532, 1, 0
        %v789 = vsel %vm533, 1, 0
        %v790 = vsel %vm534, 1, 0
        %v791 = vsel %vm535, 1, 0
        %v792 = vsel %vm536, 1, 0
        %v793 = vsel %vm537, 1, 0
        %v794 = vsel %vm538, 1, 0
        %v795 = vsel %vm539, 1, 0
        %v796 = vsel %vm540, 1, 0
        %v797 = vsel %vm541, 1, 0
        %v798 = vsel %vm542, 1, 0
        %v799 = vsel %vm543, 1, 0
        %v800 = vsel %vm544, 1, 0
        %v801 = vsel %vm545, 1, 0
        %v802 = vsel %vm546, 1, 0
        %v803 = vsel %vm547, 1, 0
        %v804 = vsel %vm548, 1, 0
        %v805 = vsel %vm549, 1, 0
        %v806 = vsel %vm550, 1, 0
        %v807 = vsel %vm551, 1, 0
        %v808 = vsel %vm552, 1, 0
        %v809 = vsel %vm553, 1, 0
        %v810 = vsel %vm554, 1, 0
        %v811 = vsel %vm555, 1, 0
        %v812 = vsel %vm556, 1, 0
        %v813 = vsel %vm557, 1, 0
        %v814 = vsel %vm558, 1, 0
        %v815 = vsel %vm559, 1, 0
        %v816 = vsel %vm560, 1, 0
        %v817 = vsel %vm561, 1, 0
        %v818 = vsel %vm562, 1, 0
        %v819 = vsel %vm563, 1, 0
        %v820 = vsel %vm564, 1, 0
        %v821 = vsel %vm565, 1, 0
        %v822 = vsel %vm566, 1, 0
        %v823 = vsel %vm567, 1, 0
        %v824 = vsel %vm568, 1, 0
        %v825 = vsel %vm569, 1, 0
        %v826 = vsel %vm570, 1, 0
        %v827 = vsel %vm571, 1, 0
        %v828 = vsel %vm572, 1, 0
        %v829 = vsel %vm573, 1, 0
        %v830 = vsel %vm574, 1, 0
        %v831 = vsel %vm575, 1, 0
        %v832 = vsel %vm576, 1, 0
        %v833 = vsel %vm577, 1, 0
        %v834 = vsel %vm578, 1, 0
        %v835 = vsel %vm579, 1, 0
        %v836 = vsel %vm580, 1, 0
        %v837 = vsel %vm581, 1, 0
        %v838 = vsel %vm582, 1, 0
        %v839 = vsel %vm583, 1, 0
        %v840 = vsel %vm584, 1, 0
        %v841 = vsel %vm585, 1, 0
        %v842 = vsel %vm586, 1, 0
        %v843 = vsel %vm587, 1, 0
        %v844 = vsel %vm588, 1, 0
        %v845 = vsel %vm589, 1, 0
        %v846 = vsel %vm590, 1, 0
        %v847 = vsel %vm591, 1, 0
        %v848 = vsel %vm592, 1, 0
        %v849 = vsel %vm593, 1, 0
        %v850 = vsel %vm594, 1, 0
        %v851 = vsel %vm595, 1, 0
        %v852 = vsel %vm596, 1, 0
        %v853 = vsel %vm597, 1, 0
        %v854 = vsel %vm598, 1, 0
        %v855 = vsel %vm599, 1, 0
        %v856 = vsel %vm600, 1, 0
        %v857 = vsel %vm601, 1, 0
        %v858 = vsel %vm602, 1, 0
        %v859 = vsel %vm603, 1, 0
        %v860 = vsel %vm604, 1, 0
        %v861 = vsel %vm605, 1, 0
        %v862 = vsel %vm606, 1, 0
        %v863 = vsel %vm607, 1, 0
        %v864 = vsel %vm608, 1, 0
        %v865 = vsel %vm609, 1, 0
        %v866 = vsel %vm610, 1, 0
        %v867 = vsel %vm611, 1, 0
        %v868 = vsel %vm612, 1, 0
        %v869 = vsel %vm613, 1, 0
        %v870 = vsel %vm614, 1, 0
        %v871 = vsel %vm615, 1, 0
        %v872 = vsel %vm616, 1, 0
        %v873 = vsel %vm617, 1, 0
        %v874 = vsel %vm618, 1, 0
        %v875 = vsel %vm619, 1, 0
        %v876 = vsel %vm620, 1, 0
        %v877 = vsel %vm621, 1, 0
        %v878 = vsel %vm622, 1, 0
        %v879 = vsel %vm623, 1, 0
        %v880 = vsel %vm624, 1, 0
        %v881 = vsel %vm625, 1, 0
        %v882 = vsel %vm626, 1, 0
        %v883 = vsel %vm627, 1, 0
        %v884 = vsel %vm628, 1, 0
        %v885 = vsel %vm629, 1, 0
        %v886 = vsel %vm630, 1, 0
        %v887 = vsel %vm631, 1, 0
        %v888 = vsel %vm632, 1, 0
        %v889 = vsel %vm633, 1, 0
        %v890 = vsel %vm634, 1, 0
        %v891 = vsel %vm635, 1, 0
        %v892 = vsel %vm636, 1, 0
        %v893 = vsel %vm637, 1, 0
        %v894 = vsel %vm638, 1, 0
        %v895 = vsel %vm639, 1, 0
        %v896 = vsel %vm640, 1, 0
        %v897 = vsel %vm641, 1, 0
        %v898 = vsel %vm642, 1, 0
        %v899 = vsel %vm643, 1, 0
        %v900 = vsel %vm644, 1, 0
        %v901 = vsel %vm645, 1, 0
        %v902 = vsel %vm646, 1, 0
        %v903 = vsel %vm647, 1, 0
        %v904 = vsel %vm648, 1, 0
        %v905 = vsel %vm649, 1, 0
        %v906 = vsel %vm650, 1, 0
        %v907 = vsel %vm651, 1, 0
        %v908 = vsel %vm652, 1, 0
        %v909 = vsel %vm653, 1, 0
        %v910 = vsel %vm654, 1, 0
        %v911 = vsel %vm655, 1, 0
        %v912 = vsel %vm656, 1, 0
        %v913 = vsel %vm657, 1, 0
        %v914 = vsel %vm658, 1, 0
        %v915 = vsel %vm659, 1, 0
        %v916 = vsel %vm660, 1, 0
        %v917 = vsel %vm661, 1, 0
        %v918 = vsel %vm662, 1, 0
        %v919 = vsel %vm663, 1, 0
        %v920 = vsel %vm664, 1, 0
        %v921 = vsel %vm665, 1, 0
        %v922 = vsel %vm666, 1, 0
        %v923 = vsel %vm667, 1, 0
        %v924 = vsel %vm668, 1, 0
        %v925 = vsel %vm669, 1, 0
        %v926 = vsel %vm670, 1, 0
        %v927 = vsel %vm671, 1, 0
        %v928 = vsel %vm672, 1, 0
        %v929 = vsel %vm673, 1, 0
        %v930 = vsel %vm674, 1, 0
        %v931 = vsel %vm675, 1, 0
        %v932 = vsel %vm676, 1, 0
        %v933 = vsel %vm677, 1, 0
        %v934 = vsel %vm678, 1, 0
        %v935 = vsel %vm679, 1, 0
        %v936 = vsel %vm680, 1, 0
        %v937 = vsel %vm681, 1, 0
        %v938 = vsel %vm682, 1, 0
        %v939 = vsel %vm683, 1, 0
        %v940 = vsel %vm684, 1, 0
        %v941 = vsel %vm685, 1, 0
        %v942 = vsel %vm686, 1, 0
        %v943 = vsel %vm687, 1, 0
        %v944 = vsel %vm688, 1, 0
        %v945 = vsel %vm689, 1, 0
        %v946 = vcvt.s32.f32 %v690
        %v947 = vcvt.s32.f32 %v691
        %v948 = vcvt.s32.f32 %v692
        %v949 = vcvt.s32.f32 %v693
        %v950 = vcvt.s32.f32 %v694
        %v951 = vcvt.s32.f32 %v695
        %v952 = vcvt.s32.f32 %v696
        %v953 = vcvt.s32.f32 %v697
        %v954 = vcvt.s32.f32 %v698
        %v955 = vcvt.s32.f32 %v699
        %v956 = vcvt.s32.f32 %v700
        %v957 = vcvt.s32.f32 %v701
        %v958 = vcvt.s32.f32 %v702
        %v959 = vcvt.s32.f32 %v703
        %v960 = vcvt.s32.f32 %v704
        %v961 = vcvt.s32.f32 %v705
        %v962 = vcvt.s32.f32 %v706
        %v963 = vcvt.s32.f32 %v707
        %v964 = vcvt.s32.f32 %v708
        %v965 = vcvt.s32.f32 %v709
        %v966 = vcvt.s32.f32 %v710
        %v967 = vcvt.s32.f32 %v711
        %v968 = vcvt.s32.f32 %v712
        %v969 = vcvt.s32.f32 %v713
        %v970 = vcvt.s32.f32 %v714
        %v971 = vcvt.s32.f32 %v715
        %v972 = vcvt.s32.f32 %v716
        %v973 = vcvt.s32.f32 %v717
        %v974 = vcvt.s32.f32 %v718
        %v975 = vcvt.s32.f32 %v719
        %v976 = vcvt.s32.f32 %v720
        %v977 = vcvt.s32.f32 %v721
        %v978 = vcvt.s32.f32 %v722
        %v979 = vcvt.s32.f32 %v723
        %v980 = vcvt.s32.f32 %v724
        %v981 = vcvt.s32.f32 %v725
        %v982 = vcvt.s32.f32 %v726
        %v983 = vcvt.s32.f32 %v727
        %v984 = vcvt.s32.f32 %v728
        %v985 = vcvt.s32.f32 %v729
        %v986 = vcvt.s32.f32 %v730
        %v987 = vcvt.s32.f32 %v731
        %v988 = vcvt.s32.f32 %v732
        %v989 = vcvt.s32.f32 %v733
        %v990 = vcvt.s32.f32 %v734
        %v991 = vcvt.s32.f32 %v735
        %v992 = vcvt.s32.f32 %v736
        %v993 = vcvt.s32.f32 %v737
        %v994 = vcvt.s32.f32 %v738
        %v995 = vcvt.s32.f32 %v739
        %v996 = vcvt.s32.f32 %v740
        %v997 = vcvt.s32.f32 %v741
        %v998 = vcvt.s32.f32 %v742
        %v999 = vcvt.s32.f32 %v743
        %v1000 = vcvt.s32.f32 %v744
        %v1001 = vcvt.s32.f32 %v745
        %v1002 = vcvt.s32.f32 %v746
        %v1003 = vcvt.s32.f32 %v747
        %v1004 = vcvt.s32.f32 %v748
        %v1005 = vcvt.s32.f32 %v749
        %v1006 = vcvt.s32.f32 %v750
        %v1007 = vcvt.s32.f32 %v751
        %v1008 = vcvt.s32.f32 %v752
        %v1009 = vcvt.s32.f32 %v753
        %v1010 = vcvt.s32.f32 %v754
        %v1011 = vcvt.s32.f32 %v755
        %v1012 = vcvt.s32.f32 %v756
        %v1013 = vcvt.s32.f32 %v757
        %v1014 = vcvt.s32.f32 %v758
        %v1015 = vcvt.s32.f32 %v759
        %v1016 = vcvt.s32.f32 %v760
        %v1017 = vcvt.s32.f32 %v761
        %v1018 = vcvt.s32.f32 %v762
        %v1019 = vcvt.s32.f32 %v763
        %v1020 = vcvt.s32.f32 %v764
        %v1021 = vcvt.s32.f32 %v765
        %v1022 = vcvt.s32.f32 %v766
        %v1023 = vcvt.s32.f32 %v767
        %v1024 = vcvt.s32.f32 %v768
        %v1025 = vcvt.s32.f32 %v769
        %v1026 = vcvt.s32.f32 %v770
        %v1027 = vcvt.s32.f32 %v771
        %v1028 = vcvt.s32.f32 %v772
        %v1029 = vcvt.s32.f32 %v773
        %v1030 = vcvt.s32.f32 %v774
        %v1031 = vcvt.s32.f32 %v775
        %v1032 = vcvt.s32.f32 %v776
        %v1033 = vcvt.s32.f32 %v777
        %v1034 = vcvt.s32.f32 %v778
        %v1035 = vcvt.s32.f32 %v779
        %v1036 = vcvt.s32.f32 %v780
        %v1037 = vcvt.s32.f32 %v781
        %v1038 = vcvt.s32.f32 %v782
        %v1039 = vcvt.s32.f32 %v783
        %v1040 = vcvt.s32.f32 %v784
        %v1041 = vcvt.s32.f32 %v785
        %v1042 = vcvt.s32.f32 %v786
        %v1043 = vcvt.s32.f32 %v787
        %v1044 = vcvt.s32.f32 %v788
        %v1045 = vcvt.s32.f32 %v789
        %v1046 = vcvt.s32.f32 %v790
        %v1047 = vcvt.s32.f32 %v791
        %v1048 = vcvt.s32.f32 %v792
        %v1049 = vcvt.s32.f32 %v793
        %v1050 = vcvt.s32.f32 %v794
        %v1051 = vcvt.s32.f32 %v795
        %v1052 = vcvt.s32.f32 %v796
        %v1053 = vcvt.s32.f32 %v797
        %v1054 = vcvt.s32.f32 %v798
        %v1055 = vcvt.s32.f32 %v799
        %v1056 = vcvt.s32.f32 %v800
        %v1057 = vcvt.s32.f32 %v801
        %v1058 = vcvt.s32.f32 %v802
        %v1059 = vcvt.s32.f32 %v803
        %v1060 = vcvt.s32.f32 %v804
        %v1061 = vcvt.s32.f32 %v805
        %v1062 = vcvt.s32.f32 %v806
        %v1063 = vcvt.s32.f32 %v807
        %v1064 = vcvt.s32.f32 %v808
        %v1065 = vcvt.s32.f32 %v809
        %v1066 = vcvt.s32.f32 %v810
        %v1067 = vcvt.s32.f32 %v811
        %v1068 = vcvt.s32.f32 %v812
        %v1069 = vcvt.s32.f32 %v813
        %v1070 = vcvt.s32.f32 %v814
        %v1071 = vcvt.s32.f32 %v815
        %v1072 = vcvt.s32.f32 %v816
        %v1073 = vcvt.s32.f32 %v817
        %v1074 = vcvt.s32.f32 %v818
        %v1075 = vcvt.s32.f32 %v819
        %v1076 = vcvt.s32.f32 %v820
        %v1077 = vcvt.s32.f32 %v821
        %v1078 = vcvt.s32.f32 %v822
        %v1079 = vcvt.s32.f32 %v823
        %v1080 = vcvt.s32.f32 %v824
        %v1081 = vcvt.s32.f32 %v825
        %v1082 = vcvt.s32.f32 %v826
        %v1083 = vcvt.s32.f32 %v827
        %v1084 = vcvt.s32.f32 %v828
        %v1085 = vcvt.s32.f32 %v829
        %v1086 = vcvt.s32.f32 %v830
        %v1087 = vcvt.s32.f32 %v831
        %v1088 = vcvt.s32.f32 %v832
        %v1089 = vcvt.s32.f32 %v833
        %v1090 = vcvt.s32.f32 %v834
        %v1091 = vcvt.s32.f32 %v835
        %v1092 = vcvt.s32.f32 %v836
        %v1093 = vcvt.s32.f32 %v837
        %v1094 = vcvt.s32.f32 %v838
        %v1095 = vcvt.s32.f32 %v839
        %v1096 = vcvt.s32.f32 %v840
        %v1097 = vcvt.s32.f32 %v841
        %v1098 = vcvt.s32.f32 %v842
        %v1099 = vcvt.s32.f32 %v843
        %v1100 = vcvt.s32.f32 %v844
        %v1101 = vcvt.s32.f32 %v845
        %v1102 = vcvt.s32.f32 %v846
        %v1103 = vcvt.s32.f32 %v847
        %v1104 = vcvt.s32.f32 %v848
        %v1105 = vcvt.s32.f32 %v849
        %v1106 = vcvt.s32.f32 %v850
        %v1107 = vcvt.s32.f32 %v851
        %v1108 = vcvt.s32.f32 %v852
        %v1109 = vcvt.s32.f32 %v853
        %v1110 = vcvt.s32.f32 %v854
        %v1111 = vcvt.s32.f32 %v855
        %v1112 = vcvt.s32.f32 %v856
        %v1113 = vcvt.s32.f32 %v857
        %v1114 = vcvt.s32.f32 %v858
        %v1115 = vcvt.s32.f32 %v859
        %v1116 = vcvt.s32.f32 %v860
        %v1117 = vcvt.s32.f32 %v861
        %v1118 = vcvt.s32.f32 %v862
        %v1119 = vcvt.s32.f32 %v863
        %v1120 = vcvt.s32.f32 %v864
        %v1121 = vcvt.s32.f32 %v865
        %v1122 = vcvt.s32.f32 %v866
        %v1123 = vcvt.s32.f32 %v867
        %v1124 = vcvt.s32.f32 %v868
        %v1125 = vcvt.s32.f32 %v869
        %v1126 = vcvt.s32.f32 %v870
        %v1127 = vcvt.s32.f32 %v871
        %v1128 = vcvt.s32.f32 %v872
        %v1129 = vcvt.s32.f32 %v873
        %v1130 = vcvt.s32.f32 %v874
        %v1131 = vcvt.s32.f32 %v875
        %v1132 = vcvt.s32.f32 %v876
        %v1133 = vcvt.s32.f32 %v877
        %v1134 = vcvt.s32.f32 %v878
        %v1135 = vcvt.s32.f32 %v879
        %v1136 = vcvt.s32.f32 %v880
        %v1137 = vcvt.s32.f32 %v881
        %v1138 = vcvt.s32.f32 %v882
        %v1139 = vcvt.s32.f32 %v883
        %v1140 = vcvt.s32.f32 %v884
        %v1141 = vcvt.s32.f32 %v885
        %v1142 = vcvt.s32.f32 %v886
        %v1143 = vcvt.s32.f32 %v887
        %v1144 = vcvt.s32.f32 %v888
        %v1145 = vcvt.s32.f32 %v889
        %v1146 = vcvt.s32.f32 %v890
        %v1147 = vcvt.s32.f32 %v891
        %v1148 = vcvt.s32.f32 %v892
        %v1149 = vcvt.s32.f32 %v893
        %v1150 = vcvt.s32.f32 %v894
        %v1151 = vcvt.s32.f32 %v895
        %v1152 = vcvt.s32.f32 %v896
        %v1153 = vcvt.s32.f32 %v897
        %v1154 = vcvt.s32.f32 %v898
        %v1155 = vcvt.s32.f32 %v899
        %v1156 = vcvt.s32.f32 %v900
        %v1157 = vcvt.s32.f32 %v901
        %v1158 = vcvt.s32.f32 %v902
        %v1159 = vcvt.s32.f32 %v903
        %v1160 = vcvt.s32.f32 %v904
        %v1161 = vcvt.s32.f32 %v905
        %v1162 = vcvt.s32.f32 %v906
        %v1163 = vcvt.s32.f32 %v907
        %v1164 = vcvt.s32.f32 %v908
        %v1165 = vcvt.s32.f32 %v909
        %v1166 = vcvt.s32.f32 %v910
        %v1167 = vcvt.s32.f32 %v911
        %v1168 = vcvt.s32.f32 %v912
        %v1169 = vcvt.s32.f32 %v913
        %v1170 = vcvt.s32.f32 %v914
        %v1171 = vcvt.s32.f32 %v915
        %v1172 = vcvt.s32.f32 %v916
        %v1173 = vcvt.s32.f32 %v917
        %v1174 = vcvt.s32.f32 %v918
        %v1175 = vcvt.s32.f32 %v919
        %v1176 = vcvt.s32.f32 %v920
        %v1177 = vcvt.s32.f32 %v921
        %v1178 = vcvt.s32.f32 %v922
        %v1179 = vcvt.s32.f32 %v923
        %v1180 = vcvt.s32.f32 %v924
        %v1181 = vcvt.s32.f32 %v925
        %v1182 = vcvt.s32.f32 %v926
        %v1183 = vcvt.s32.f32 %v927
        %v1184 = vcvt.s32.f32 %v928
        %v1185 = vcvt.s32.f32 %v929
        %v1186 = vcvt.s32.f32 %v930
        %v1187 = vcvt.s32.f32 %v931
        %v1188 = vcvt.s32.f32 %v932
        %v1189 = vcvt.s32.f32 %v933
        %v1190 = vcvt.s32.f32 %v934
        %v1191 = vcvt.s32.f32 %v935
        %v1192 = vcvt.s32.f32 %v936
        %v1193 = vcvt.s32.f32 %v937
        %v1194 = vcvt.s32.f32 %v938
        %v1195 = vcvt.s32.f32 %v939
        %v1196 = vcvt.s32.f32 %v940
        %v1197 = vcvt.s32.f32 %v941
        %v1198 = vcvt.s32.f32 %v942
        %v1199 = vcvt.s32.f32 %v943
        %v1200 = vcvt.s32.f32 %v944
        %v1201 = vcvt.s32.f32 %v945
        %v1202 = vpack.c.bf16 %v950, %v946
        %v1203 = vpack.c.bf16 %v951, %v947
        %v1204 = vpack.c.bf16 %v952, %v948
        %v1205 = vpack.c.bf16 %v953, %v949
        %v1206 = vpack.c.bf16 %v958, %v954
        %v1207 = vpack.c.bf16 %v959, %v955
        %v1208 = vpack.c.bf16 %v960, %v956
        %v1209 = vpack.c.bf16 %v961, %v957
        %v1210 = vpack.c.bf16 %v966, %v962
        %v1211 = vpack.c.bf16 %v967, %v963
        %v1212 = vpack.c.bf16 %v968, %v964
        %v1213 = vpack.c.bf16 %v969, %v965
        %v1214 = vpack.c.bf16 %v974, %v970
        %v1215 = vpack.c.bf16 %v975, %v971
        %v1216 = vpack.c.bf16 %v976, %v972
        %v1217 = vpack.c.bf16 %v977, %v973
        %v1218 = vpack.c.bf16 %v982, %v978
        %v1219 = vpack.c.bf16 %v983, %v979
        %v1220 = vpack.c.bf16 %v984, %v980
        %v1221 = vpack.c.bf16 %v985, %v981
        %v1222 = vpack.c.bf16 %v990, %v986
        %v1223 = vpack.c.bf16 %v991, %v987
        %v1224 = vpack.c.bf16 %v992, %v988
        %v1225 = vpack.c.bf16 %v993, %v989
        %v1226 = vpack.c.bf16 %v998, %v994
        %v1227 = vpack.c.bf16 %v999, %v995
        %v1228 = vpack.c.bf16 %v1000, %v996
        %v1229 = vpack.c.bf16 %v1001, %v997
        %v1230 = vpack.c.bf16 %v1006, %v1002
        %v1231 = vpack.c.bf16 %v1007, %v1003
        %v1232 = vpack.c.bf16 %v1008, %v1004
        %v1233 = vpack.c.bf16 %v1009, %v1005
        %v1234 = vpack.c.bf16 %v1014, %v1010
        %v1235 = vpack.c.bf16 %v1015, %v1011
        %v1236 = vpack.c.bf16 %v1016, %v1012
        %v1237 = vpack.c.bf16 %v1017, %v1013
        %v1238 = vpack.c.bf16 %v1022, %v1018
        %v1239 = vpack.c.bf16 %v1023, %v1019
        %v1240 = vpack.c.bf16 %v1024, %v1020
        %v1241 = vpack.c.bf16 %v1025, %v1021
        %v1242 = vpack.c.bf16 %v1030, %v1026
        %v1243 = vpack.c.bf16 %v1031, %v1027
        %v1244 = vpack.c.bf16 %v1032, %v1028
        %v1245 = vpack.c.bf16 %v1033, %v1029
        %v1246 = vpack.c.bf16 %v1038, %v1034
        %v1247 = vpack.c.bf16 %v1039, %v1035
        %v1248 = vpack.c.bf16 %v1040, %v1036
        %v1249 = vpack.c.bf16 %v1041, %v1037
        %v1250 = vpack.c.bf16 %v1046, %v1042
        %v1251 = vpack.c.bf16 %v1047, %v1043
        %v1252 = vpack.c.bf16 %v1048, %v1044
        %v1253 = vpack.c.bf16 %v1049, %v1045
        %v1254 = vpack.c.bf16 %v1054, %v1050
        %v1255 = vpack.c.bf16 %v1055, %v1051
        %v1256 = vpack.c.bf16 %v1056, %v1052
        %v1257 = vpack.c.bf16 %v1057, %v1053
        %v1258 = vpack.c.bf16 %v1062, %v1058
        %v1259 = vpack.c.bf16 %v1063, %v1059
        %v1260 = vpack.c.bf16 %v1064, %v1060
        %v1261 = vpack.c.bf16 %v1065, %v1061
        %v1262 = vpack.c.bf16 %v1070, %v1066
        %v1263 = vpack.c.bf16 %v1071, %v1067
        %v1264 = vpack.c.bf16 %v1072, %v1068
        %v1265 = vpack.c.bf16 %v1073, %v1069
        %v1266 = vpack.c.bf16 %v1078, %v1074
        %v1267 = vpack.c.bf16 %v1079, %v1075
        %v1268 = vpack.c.bf16 %v1080, %v1076
        %v1269 = vpack.c.bf16 %v1081, %v1077
        %v1270 = vpack.c.bf16 %v1086, %v1082
        %v1271 = vpack.c.bf16 %v1087, %v1083
        %v1272 = vpack.c.bf16 %v1088, %v1084
        %v1273 = vpack.c.bf16 %v1089, %v1085
        %v1274 = vpack.c.bf16 %v1094, %v1090
        %v1275 = vpack.c.bf16 %v1095, %v1091
        %v1276 = vpack.c.bf16 %v1096, %v1092
        %v1277 = vpack.c.bf16 %v1097, %v1093
        %v1278 = vpack.c.bf16 %v1102, %v1098
        %v1279 = vpack.c.bf16 %v1103, %v1099
        %v1280 = vpack.c.bf16 %v1104, %v1100
        %v1281 = vpack.c.bf16 %v1105, %v1101
        %v1282 = vpack.c.bf16 %v1110, %v1106
        %v1283 = vpack.c.bf16 %v1111, %v1107
        %v1284 = vpack.c.bf16 %v1112, %v1108
        %v1285 = vpack.c.bf16 %v1113, %v1109
        %v1286 = vpack.c.bf16 %v1118, %v1114
        %v1287 = vpack.c.bf16 %v1119, %v1115
        %v1288 = vpack.c.bf16 %v1120, %v1116
        %v1289 = vpack.c.bf16 %v1121, %v1117
        %v1290 = vpack.c.bf16 %v1126, %v1122
        %v1291 = vpack.c.bf16 %v1127, %v1123
        %v1292 = vpack.c.bf16 %v1128, %v1124
        %v1293 = vpack.c.bf16 %v1129, %v1125
        %v1294 = vpack.c.bf16 %v1134, %v1130
        %v1295 = vpack.c.bf16 %v1135, %v1131
        %v1296 = vpack.c.bf16 %v1136, %v1132
        %v1297 = vpack.c.bf16 %v1137, %v1133
        %v1298 = vpack.c.bf16 %v1142, %v1138
        %v1299 = vpack.c.bf16 %v1143, %v1139
        %v1300 = vpack.c.bf16 %v1144, %v1140
        %v1301 = vpack.c.bf16 %v1145, %v1141
        %v1302 = vpack.c.bf16 %v1150, %v1146
        %v1303 = vpack.c.bf16 %v1151, %v1147
        %v1304 = vpack.c.bf16 %v1152, %v1148
        %v1305 = vpack.c.bf16 %v1153, %v1149
        %v1306 = vpack.c.bf16 %v1158, %v1154
        %v1307 = vpack.c.bf16 %v1159, %v1155
        %v1308 = vpack.c.bf16 %v1160, %v1156
        %v1309 = vpack.c.bf16 %v1161, %v1157
        %v1310 = vpack.c.bf16 %v1166, %v1162
        %v1311 = vpack.c.bf16 %v1167, %v1163
        %v1312 = vpack.c.bf16 %v1168, %v1164
        %v1313 = vpack.c.bf16 %v1169, %v1165
        %v1314 = vpack.c.bf16 %v1174, %v1170
        %v1315 = vpack.c.bf16 %v1175, %v1171
        %v1316 = vpack.c.bf16 %v1176, %v1172
        %v1317 = vpack.c.bf16 %v1177, %v1173
        %v1318 = vpack.c.bf16 %v1182, %v1178
        %v1319 = vpack.c.bf16 %v1183, %v1179
        %v1320 = vpack.c.bf16 %v1184, %v1180
        %v1321 = vpack.c.bf16 %v1185, %v1181
        %v1322 = vpack.c.bf16 %v1190, %v1186
        %v1323 = vpack.c.bf16 %v1191, %v1187
        %v1324 = vpack.c.bf16 %v1192, %v1188
        %v1325 = vpack.c.bf16 %v1193, %v1189
        %v1326 = vpack.c.bf16 %v1198, %v1194
        %v1327 = vpack.c.bf16 %v1199, %v1195
        %v1328 = vpack.c.bf16 %v1200, %v1196
        %v1329 = vpack.c.bf16 %v1201, %v1197
        %v1330 = vld [vmem:[%s1] sm:$0xf]
        %v1331 = vld [vmem:[%s1 + $0x4] sm:$0xf]
        %v1332 = vld [vmem:[%s1 + $0x8] sm:$0xf]
        %v1333 = vld [vmem:[%s1 + $0xc] sm:$0xf]
        %v1334 = vld [vmem:[%s1 + $0x10] sm:$0xf]
        %v1335 = vld [vmem:[%s1 + $0x14] sm:$0xf]
        %v1336 = vld [vmem:[%s1 + $0x18] sm:$0xf]
        %v1337 = vld [vmem:[%s1 + $0x1c] sm:$0xf]
        %v1338 = vld [vmem:[%s1 + $0x20] sm:$0xf]
        %v1339 = vld [vmem:[%s1 + $0x24] sm:$0xf]
        %v1340 = vld [vmem:[%s1 + $0x28] sm:$0xf]
        %v1341 = vld [vmem:[%s1 + $0x2c] sm:$0xf]
        %v1342 = vld [vmem:[%s1 + $0x30] sm:$0xf]
        %v1343 = vld [vmem:[%s1 + $0x34] sm:$0xf]
        %v1344 = vld [vmem:[%s1 + $0x38] sm:$0xf]
        %v1345 = vld [vmem:[%s1 + $0x3c] sm:$0xf]
        %v1346 = vld [vmem:[%s1 + $0x40] sm:$0xf]
        %v1347 = vld [vmem:[%s1 + $0x44] sm:$0xf]
        %v1348 = vld [vmem:[%s1 + $0x48] sm:$0xf]
        %v1349 = vld [vmem:[%s1 + $0x4c] sm:$0xf]
        %v1350 = vld [vmem:[%s1 + $0x50] sm:$0xf]
        %v1351 = vld [vmem:[%s1 + $0x54] sm:$0xf]
        %v1352 = vld [vmem:[%s1 + $0x58] sm:$0xf]
        %v1353 = vld [vmem:[%s1 + $0x5c] sm:$0xf]
        %v1354 = vld [vmem:[%s1 + $0x60] sm:$0xf]
        %v1355 = vld [vmem:[%s1 + $0x64] sm:$0xf]
        %v1356 = vld [vmem:[%s1 + $0x68] sm:$0xf]
        %v1357 = vld [vmem:[%s1 + $0x6c] sm:$0xf]
        %v1358 = vld [vmem:[%s1 + $0x70] sm:$0xf]
        %v1359 = vld [vmem:[%s1 + $0x74] sm:$0xf]
        %v1360 = vld [vmem:[%s1 + $0x78] sm:$0xf]
        %v1361 = vld [vmem:[%s1 + $0x7c] sm:$0xf]
        %v1362 = vld [vmem:[%s1 + $0x80] sm:$0xf]
        %v1363 = vld [vmem:[%s1 + $0x84] sm:$0xf]
        %v1364 = vld [vmem:[%s1 + $0x88] sm:$0xf]
        %v1365 = vld [vmem:[%s1 + $0x8c] sm:$0xf]
        %v1366 = vld [vmem:[%s1 + $0x90] sm:$0xf]
        %v1367 = vld [vmem:[%s1 + $0x94] sm:$0xf]
        %v1368 = vld [vmem:[%s1 + $0x98] sm:$0xf]
        %v1369 = vld [vmem:[%s1 + $0x9c] sm:$0xf]
        %v1370 = vld [vmem:[%s1 + $0xa0] sm:$0xf]
        %v1371 = vld [vmem:[%s1 + $0xa4] sm:$0xf]
        %v1372 = vld [vmem:[%s1 + $0xa8] sm:$0xf]
        %v1373 = vld [vmem:[%s1 + $0xac] sm:$0xf]
        %v1374 = vld [vmem:[%s1 + $0xb0] sm:$0xf]
        %v1375 = vld [vmem:[%s1 + $0xb4] sm:$0xf]
        %v1376 = vld [vmem:[%s1 + $0xb8] sm:$0xf]
        %v1377 = vld [vmem:[%s1 + $0xbc] sm:$0xf]
        %v1378 = vld [vmem:[%s1 + $0xc0] sm:$0xf]
        %v1379 = vld [vmem:[%s1 + $0xc4] sm:$0xf]
        %v1380 = vld [vmem:[%s1 + $0xc8] sm:$0xf]
        %v1381 = vld [vmem:[%s1 + $0xcc] sm:$0xf]
        %v1382 = vld [vmem:[%s1 + $0xd0] sm:$0xf]
        %v1383 = vld [vmem:[%s1 + $0xd4] sm:$0xf]
        %v1384 = vld [vmem:[%s1 + $0xd8] sm:$0xf]
        %v1385 = vld [vmem:[%s1 + $0xdc] sm:$0xf]
        %v1386 = vld [vmem:[%s1 + $0xe0] sm:$0xf]
        %v1387 = vld [vmem:[%s1 + $0xe4] sm:$0xf]
        %v1388 = vld [vmem:[%s1 + $0xe8] sm:$0xf]
        %v1389 = vld [vmem:[%s1 + $0xec] sm:$0xf]
        %v1390 = vld [vmem:[%s1 + $0xf0] sm:$0xf]
        %v1391 = vld [vmem:[%s1 + $0xf4] sm:$0xf]
        %v1392 = vld [vmem:[%s1 + $0xf8] sm:$0xf]
        %v1393 = vld [vmem:[%s1 + $0xfc] sm:$0xf]
        %v1394 = vld [vmem:[%s2] sm:$0xf]
        %v1395 = vld [vmem:[%s2 + $0x4] sm:$0xf]
        %v1396 = vld [vmem:[%s2 + $0x8] sm:$0xf]
        %v1397 = vld [vmem:[%s2 + $0xc] sm:$0xf]
        %v1398 = vld [vmem:[%s2 + $0x10] sm:$0xf]
        %v1399 = vld [vmem:[%s2 + $0x14] sm:$0xf]
        %v1400 = vld [vmem:[%s2 + $0x18] sm:$0xf]
        %v1401 = vld [vmem:[%s2 + $0x1c] sm:$0xf]
        %v1402 = vld [vmem:[%s2 + $0x20] sm:$0xf]
        %v1403 = vld [vmem:[%s2 + $0x24] sm:$0xf]
        %v1404 = vld [vmem:[%s2 + $0x28] sm:$0xf]
        %v1405 = vld [vmem:[%s2 + $0x2c] sm:$0xf]
        %v1406 = vld [vmem:[%s2 + $0x30] sm:$0xf]
        %v1407 = vld [vmem:[%s2 + $0x34] sm:$0xf]
        %v1408 = vld [vmem:[%s2 + $0x38] sm:$0xf]
        %v1409 = vld [vmem:[%s2 + $0x3c] sm:$0xf]
        %v1410 = vld [vmem:[%s2 + $0x40] sm:$0xf]
        %v1411 = vld [vmem:[%s2 + $0x44] sm:$0xf]
        %v1412 = vld [vmem:[%s2 + $0x48] sm:$0xf]
        %v1413 = vld [vmem:[%s2 + $0x4c] sm:$0xf]
        %v1414 = vld [vmem:[%s2 + $0x50] sm:$0xf]
        %v1415 = vld [vmem:[%s2 + $0x54] sm:$0xf]
        %v1416 = vld [vmem:[%s2 + $0x58] sm:$0xf]
        %v1417 = vld [vmem:[%s2 + $0x5c] sm:$0xf]
        %v1418 = vld [vmem:[%s2 + $0x60] sm:$0xf]
        %v1419 = vld [vmem:[%s2 + $0x64] sm:$0xf]
        %v1420 = vld [vmem:[%s2 + $0x68] sm:$0xf]
        %v1421 = vld [vmem:[%s2 + $0x6c] sm:$0xf]
        %v1422 = vld [vmem:[%s2 + $0x70] sm:$0xf]
        %v1423 = vld [vmem:[%s2 + $0x74] sm:$0xf]
        %v1424 = vld [vmem:[%s2 + $0x78] sm:$0xf]
        %v1425 = vld [vmem:[%s2 + $0x7c] sm:$0xf]
        %v1426 = vld [vmem:[%s2 + $0x80] sm:$0xf]
        %v1427 = vld [vmem:[%s2 + $0x84] sm:$0xf]
        %v1428 = vld [vmem:[%s2 + $0x88] sm:$0xf]
        %v1429 = vld [vmem:[%s2 + $0x8c] sm:$0xf]
        %v1430 = vld [vmem:[%s2 + $0x90] sm:$0xf]
        %v1431 = vld [vmem:[%s2 + $0x94] sm:$0xf]
        %v1432 = vld [vmem:[%s2 + $0x98] sm:$0xf]
        %v1433 = vld [vmem:[%s2 + $0x9c] sm:$0xf]
        %v1434 = vld [vmem:[%s2 + $0xa0] sm:$0xf]
        %v1435 = vld [vmem:[%s2 + $0xa4] sm:$0xf]
        %v1436 = vld [vmem:[%s2 + $0xa8] sm:$0xf]
        %v1437 = vld [vmem:[%s2 + $0xac] sm:$0xf]
        %v1438 = vld [vmem:[%s2 + $0xb0] sm:$0xf]
        %v1439 = vld [vmem:[%s2 + $0xb4] sm:$0xf]
        %v1440 = vld [vmem:[%s2 + $0xb8] sm:$0xf]
        %v1441 = vld [vmem:[%s2 + $0xbc] sm:$0xf]
        %v1442 = vld [vmem:[%s2 + $0xc0] sm:$0xf]
        %v1443 = vld [vmem:[%s2 + $0xc4] sm:$0xf]
        %v1444 = vld [vmem:[%s2 + $0xc8] sm:$0xf]
        %v1445 = vld [vmem:[%s2 + $0xcc] sm:$0xf]
        %v1446 = vld [vmem:[%s2 + $0xd0] sm:$0xf]
        %v1447 = vld [vmem:[%s2 + $0xd4] sm:$0xf]
        %v1448 = vld [vmem:[%s2 + $0xd8] sm:$0xf]
        %v1449 = vld [vmem:[%s2 + $0xdc] sm:$0xf]
        %v1450 = vld [vmem:[%s2 + $0xe0] sm:$0xf]
        %v1451 = vld [vmem:[%s2 + $0xe4] sm:$0xf]
        %v1452 = vld [vmem:[%s2 + $0xe8] sm:$0xf]
        %v1453 = vld [vmem:[%s2 + $0xec] sm:$0xf]
        %v1454 = vld [vmem:[%s2 + $0xf0] sm:$0xf]
        %v1455 = vld [vmem:[%s2 + $0xf4] sm:$0xf]
        %v1456 = vld [vmem:[%s2 + $0xf8] sm:$0xf]
        %v1457 = vld [vmem:[%s2 + $0xfc] sm:$0xf]
        %v1522 = vunpack.c.l.b16 %v1394
        %v1523 = vunpack.c.l.b16 %v1395
        %v1524 = vunpack.c.l.b16 %v1396
        %v1525 = vunpack.c.l.b16 %v1397
        %v1526 = vunpack.c.l.b16 %v1398
        %v1527 = vunpack.c.l.b16 %v1399
        %v1528 = vunpack.c.l.b16 %v1400
        %v1529 = vunpack.c.l.b16 %v1401
        %v1530 = vunpack.c.l.b16 %v1402
        %v1531 = vunpack.c.l.b16 %v1403
        %v1532 = vunpack.c.l.b16 %v1404
        %v1533 = vunpack.c.l.b16 %v1405
        %v1534 = vunpack.c.l.b16 %v1406
        %v1535 = vunpack.c.l.b16 %v1407
        %v1536 = vunpack.c.l.b16 %v1408
        %v1537 = vunpack.c.l.b16 %v1409
        %v1538 = vunpack.c.l.b16 %v1410
        %v1539 = vunpack.c.l.b16 %v1411
        %v1540 = vunpack.c.l.b16 %v1412
        %v1541 = vunpack.c.l.b16 %v1413
        %v1542 = vunpack.c.l.b16 %v1414
        %v1543 = vunpack.c.l.b16 %v1415
        %v1544 = vunpack.c.l.b16 %v1416
        %v1545 = vunpack.c.l.b16 %v1417
        %v1546 = vunpack.c.l.b16 %v1418
        %v1547 = vunpack.c.l.b16 %v1419
        %v1548 = vunpack.c.l.b16 %v1420
        %v1549 = vunpack.c.l.b16 %v1421
        %v1550 = vunpack.c.l.b16 %v1422
        %v1551 = vunpack.c.l.b16 %v1423
        %v1552 = vunpack.c.l.b16 %v1424
        %v1553 = vunpack.c.l.b16 %v1425
        %v1554 = vunpack.c.l.b16 %v1426
        %v1555 = vunpack.c.l.b16 %v1427
        %v1556 = vunpack.c.l.b16 %v1428
        %v1557 = vunpack.c.l.b16 %v1429
        %v1558 = vunpack.c.l.b16 %v1430
        %v1559 = vunpack.c.l.b16 %v1431
        %v1560 = vunpack.c.l.b16 %v1432
        %v1561 = vunpack.c.l.b16 %v1433
        %v1562 = vunpack.c.l.b16 %v1434
        %v1563 = vunpack.c.l.b16 %v1435
        %v1564 = vunpack.c.l.b16 %v1436
        %v1565 = vunpack.c.l.b16 %v1437
        %v1566 = vunpack.c.l.b16 %v1438
        %v1567 = vunpack.c.l.b16 %v1439
        %v1568 = vunpack.c.l.b16 %v1440
        %v1569 = vunpack.c.l.b16 %v1441
        %v1570 = vunpack.c.l.b16 %v1442
        %v1571 = vunpack.c.l.b16 %v1443
        %v1572 = vunpack.c.l.b16 %v1444
        %v1573 = vunpack.c.l.b16 %v1445
        %v1574 = vunpack.c.l.b16 %v1446
        %v1575 = vunpack.c.l.b16 %v1447
        %v1576 = vunpack.c.l.b16 %v1448
        %v1577 = vunpack.c.l.b16 %v1449
        %v1578 = vunpack.c.l.b16 %v1450
        %v1579 = vunpack.c.l.b16 %v1451
        %v1580 = vunpack.c.l.b16 %v1452
        %v1581 = vunpack.c.l.b16 %v1453
        %v1582 = vunpack.c.l.b16 %v1454
        %v1583 = vunpack.c.l.b16 %v1455
        %v1584 = vunpack.c.l.b16 %v1456
        %v1585 = vunpack.c.l.b16 %v1457
        %v1586 = vpack.c.b16 %v1523, %v1522
        %v1587 = vpack.c.b16 %v1525, %v1524
        %v1588 = vpack.c.b16 %v1527, %v1526
        %v1589 = vpack.c.b16 %v1529, %v1528
        %v1590 = vpack.c.b16 %v1531, %v1530
        %v1591 = vpack.c.b16 %v1533, %v1532
        %v1592 = vpack.c.b16 %v1535, %v1534
        %v1593 = vpack.c.b16 %v1537, %v1536
        %v1594 = vpack.c.b16 %v1539, %v1538
        %v1595 = vpack.c.b16 %v1541, %v1540
        %v1596 = vpack.c.b16 %v1543, %v1542
        %v1597 = vpack.c.b16 %v1545, %v1544
        %v1598 = vpack.c.b16 %v1547, %v1546
        %v1599 = vpack.c.b16 %v1549, %v1548
        %v1600 = vpack.c.b16 %v1551, %v1550
        %v1601 = vpack.c.b16 %v1553, %v1552
        %v1602 = vpack.c.b16 %v1555, %v1554
        %v1603 = vpack.c.b16 %v1557, %v1556
        %v1604 = vpack.c.b16 %v1559, %v1558
        %v1605 = vpack.c.b16 %v1561, %v1560
        %v1606 = vpack.c.b16 %v1563, %v1562
        %v1607 = vpack.c.b16 %v1565, %v1564
        %v1608 = vpack.c.b16 %v1567, %v1566
        %v1609 = vpack.c.b16 %v1569, %v1568
        %v1610 = vpack.c.b16 %v1571, %v1570
        %v1611 = vpack.c.b16 %v1573, %v1572
        %v1612 = vpack.c.b16 %v1575, %v1574
        %v1613 = vpack.c.b16 %v1577, %v1576
        %v1614 = vpack.c.b16 %v1579, %v1578
        %v1615 = vpack.c.b16 %v1581, %v1580
        %v1616 = vpack.c.b16 %v1583, %v1582
        %v1617 = vpack.c.b16 %v1585, %v1584
        %1650 = vmatprep.subr.bf16.mxu0 0
        %1651 = vmatpush1.bf16.msra.mxu0 %v1586
        %1652 = vmatprep.subr.bf16.mxu0 0
        %1653 = vmatpush1.bf16.msra.mxu0 %v1587
        %1654 = vmatprep.subr.bf16.mxu0 0
        %1655 = vmatpush1.bf16.msra.mxu0 %v1588
        %1656 = vmatprep.subr.bf16.mxu0 0
        %1657 = vmatpush1.bf16.msra.mxu0 %v1589
        %1658 = vmatprep.subr.bf16.mxu0 0
        %1659 = vmatpush1.bf16.msra.mxu0 %v1590
        %1660 = vmatprep.subr.bf16.mxu0 0
        %1661 = vmatpush1.bf16.msra.mxu0 %v1591
        %1662 = vmatprep.subr.bf16.mxu0 0
        %1663 = vmatpush1.bf16.msra.mxu0 %v1592
        %1664 = vmatprep.subr.bf16.mxu0 0
        %1665 = vmatpush1.bf16.msra.mxu0 %v1593
        %1666 = vmatprep.subr.bf16.mxu0 0
        %1667 = vmatpush1.bf16.msra.mxu0 %v1594
        %1668 = vmatprep.subr.bf16.mxu0 0
        %1669 = vmatpush1.bf16.msra.mxu0 %v1595
        %1670 = vmatprep.subr.bf16.mxu0 0
        %1671 = vmatpush1.bf16.msra.mxu0 %v1596
        %1672 = vmatprep.subr.bf16.mxu0 0
        %1673 = vmatpush1.bf16.msra.mxu0 %v1597
        %1674 = vmatprep.subr.bf16.mxu0 0
        %1675 = vmatpush1.bf16.msra.mxu0 %v1598
        %1676 = vmatprep.subr.bf16.mxu0 0
        %1677 = vmatpush1.bf16.msra.mxu0 %v1599
        %1678 = vmatprep.subr.bf16.mxu0 0
        %1679 = vmatpush1.bf16.msra.mxu0 %v1600
        %1680 = vmatprep.subr.bf16.mxu0 0
        %1681 = vmatpush1.bf16.msra.mxu0 %v1601
        %1682 = vmatprep.mubr.bf16.mxu0 %v1203
        %1683 = vmatmul.mubr.bf16.gmra.mrb[0].mxu0 %v1202
        %v1684 = vpop.f32.mrb[0].mxu0
        %v1685 = vadd.f32 0.0, %v1684
        %v1686 = vpop.f32.mrb[0].mxu0
        %v1687 = vpop.f32.mrb[0].mxu0
        %v1688 = vadd.f32 0.0, %v1687
        %v1689 = vpop.f32.mrb[0].mxu0
        %1690 = vmatprep.mubr.bf16.mxu0 %v1207
        %1691 = vmatmul.mubr.bf16.gmra.mrb[0].mxu0 %v1206
        %v1692 = vpop.f32.mrb[0].mxu0
        %v1693 = vadd.f32 0.0, %v1692
        %v1694 = vpop.f32.mrb[0].mxu0
        %v1695 = vpop.f32.mrb[0].mxu0
        %v1696 = vadd.f32 0.0, %v1695
        %v1697 = vpop.f32.mrb[0].mxu0
        %1698 = vmatprep.mubr.bf16.mxu0 %v1211
        %1699 = vmatmul.mubr.bf16.gmra.mrb[0].mxu0 %v1210
        %v1700 = vpop.f32.mrb[0].mxu0
        %v1701 = vadd.f32 0.0, %v1700
        %v1702 = vpop.f32.mrb[0].mxu0
        %v1703 = vpop.f32.mrb[0].mxu0
        %v1704 = vadd.f32 0.0, %v1703
        %v1705 = vpop.f32.mrb[0].mxu0
        %1706 = vmatprep.mubr.bf16.mxu0 %v1215
        %1707 = vmatmul.mubr.bf16.gmra.mrb[0].mxu0 %v1214
        %v1708 = vpop.f32.mrb[0].mxu0
        %v1709 = vadd.f32 0.0, %v1708
        %v1710 = vpop.f32.mrb[0].mxu0
        %v1711 = vpop.f32.mrb[0].mxu0
        %v1712 = vadd.f32 0.0, %v1711
        %v1713 = vpop.f32.mrb[0].mxu0
        %1714 = vmatprep.mubr.bf16.mxu0 %v1219
        %1715 = vmatmul.mubr.bf16.gmra.mrb[0].mxu0 %v1218
        %v1716 = vpop.f32.mrb[0].mxu0
        %v1717 = vadd.f32 0.0, %v1716
        %v1718 = vpop.f32.mrb[0].mxu0
        %v1719 = vpop.f32.mrb[0].mxu0
        %v1720 = vadd.f32 0.0, %v1719
        %v1721 = vpop.f32.mrb[0].mxu0
        %1722 = vmatprep.mubr.bf16.mxu0 %v1223
        %1723 = vmatmul.mubr.bf16.gmra.mrb[0].mxu0 %v1222
        %v1724 = vpop.f32.mrb[0].mxu0
        %v1725 = vadd.f32 0.0, %v1724
        %v1726 = vpop.f32.mrb[0].mxu0
        %v1727 = vpop.f32.mrb[0].mxu0
        %v1728 = vadd.f32 0.0, %v1727
        %v1729 = vpop.f32.mrb[0].mxu0
        %1730 = vmatprep.mubr.bf16.mxu0 %v1227
        %1731 = vmatmul.mubr.bf16.gmra.mrb[0].mxu0 %v1226
        %v1732 = vpop.f32.mrb[0].mxu0
        %v1733 = vadd.f32 0.0, %v1732
        %v1734 = vpop.f32.mrb[0].mxu0
        %v1735 = vpop.f32.mrb[0].mxu0
        %v1736 = vadd.f32 0.0, %v1735
        %v1737 = vpop.f32.mrb[0].mxu0
        %1738 = vmatprep.mubr.bf16.mxu0 %v1231
        %1739 = vmatmul.mubr.bf16.gmra.mrb[0].mxu0 %v1230
        %v1740 = vpop.f32.mrb[0].mxu0
        %v1741 = vadd.f32 0.0, %v1740
        %v1742 = vpop.f32.mrb[0].mxu0
        %v1743 = vpop.f32.mrb[0].mxu0
        %v1744 = vadd.f32 0.0, %v1743
        %v1745 = vpop.f32.mrb[0].mxu0
        %1746 = vmatprep.mubr.bf16.mxu0 %v1235
        %1747 = vmatmul.mubr.bf16.gmra.mrb[0].mxu0 %v1234
        %v1748 = vpop.f32.mrb[0].mxu0
        %v1749 = vadd.f32 0.0, %v1748
        %v1750 = vpop.f32.mrb[0].mxu0
        %v1751 = vpop.f32.mrb[0].mxu0
        %v1752 = vadd.f32 0.0, %v1751
        %v1753 = vpop.f32.mrb[0].mxu0
        %1754 = vmatprep.mubr.bf16.mxu0 %v1239
        %1755 = vmatmul.mubr.bf16.gmra.mrb[0].mxu0 %v1238
        %v1756 = vpop.f32.mrb[0].mxu0
        %v1757 = vadd.f32 0.0, %v1756
        %v1758 = vpop.f32.mrb[0].mxu0
        %v1759 = vpop.f32.mrb[0].mxu0
        %v1760 = vadd.f32 0.0, %v1759
        %v1761 = vpop.f32.mrb[0].mxu0
        %1762 = vmatprep.mubr.bf16.mxu0 %v1243
        %1763 = vmatmul.mubr.bf16.gmra.mrb[0].mxu0 %v1242
        %v1764 = vpop.f32.mrb[0].mxu0
        %v1765 = vadd.f32 0.0, %v1764
        %v1766 = vpop.f32.mrb[0].mxu0
        %v1767 = vpop.f32.mrb[0].mxu0
        %v1768 = vadd.f32 0.0, %v1767
        %v1769 = vpop.f32.mrb[0].mxu0
        %1770 = vmatprep.mubr.bf16.mxu0 %v1247
        %1771 = vmatmul.mubr.bf16.gmra.mrb[0].mxu0 %v1246
        %v1772 = vpop.f32.mrb[0].mxu0
        %v1773 = vadd.f32 0.0, %v1772
        %v1774 = vpop.f32.mrb[0].mxu0
        %v1775 = vpop.f32.mrb[0].mxu0
        %v1776 = vadd.f32 0.0, %v1775
        %v1777 = vpop.f32.mrb[0].mxu0
        %1778 = vmatprep.mubr.bf16.mxu0 %v1251
        %1779 = vmatmul.mubr.bf16.gmra.mrb[0].mxu0 %v1250
        %v1780 = vpop.f32.mrb[0].mxu0
        %v1781 = vadd.f32 0.0, %v1780
        %v1782 = vpop.f32.mrb[0].mxu0
        %v1783 = vpop.f32.mrb[0].mxu0
        %v1784 = vadd.f32 0.0, %v1783
        %v1785 = vpop.f32.mrb[0].mxu0
        %1786 = vmatprep.mubr.bf16.mxu0 %v1255
        %1787 = vmatmul.mubr.bf16.gmra.mrb[0].mxu0 %v1254
        %v1788 = vpop.f32.mrb[0].mxu0
        %v1789 = vadd.f32 0.0, %v1788
        %v1790 = vpop.f32.mrb[0].mxu0
        %v1791 = vpop.f32.mrb[0].mxu0
        %v1792 = vadd.f32 0.0, %v1791
        %v1793 = vpop.f32.mrb[0].mxu0
        %1794 = vmatprep.mubr.bf16.mxu0 %v1259
        %1795 = vmatmul.mubr.bf16.gmra.mrb[0].mxu0 %v1258
        %v1796 = vpop.f32.mrb[0].mxu0
        %v1797 = vadd.f32 0.0, %v1796
        %v1798 = vpop.f32.mrb[0].mxu0
        %v1799 = vpop.f32.mrb[0].mxu0
        %v1800 = vadd.f32 0.0, %v1799
        %v1801 = vpop.f32.mrb[0].mxu0
        %1802 = vmatprep.mubr.bf16.mxu0 %v1263
        %1803 = vmatmul.mubr.bf16.gmra.mrb[0].mxu0 %v1262
        %v1804 = vpop.f32.mrb[0].mxu0
        %v1805 = vadd.f32 0.0, %v1804
        %v1806 = vpop.f32.mrb[0].mxu0
        %v1807 = vpop.f32.mrb[0].mxu0
        %v1808 = vadd.f32 0.0, %v1807
        %v1809 = vpop.f32.mrb[0].mxu0
        %1810 = vmatprep.mubr.bf16.mxu0 %v1267
        %1811 = vmatmul.mubr.bf16.gmra.mrb[0].mxu0 %v1266
        %v1812 = vpop.f32.mrb[0].mxu0
        %v1813 = vadd.f32 0.0, %v1812
        %v1814 = vpop.f32.mrb[0].mxu0
        %v1815 = vpop.f32.mrb[0].mxu0
        %v1816 = vadd.f32 0.0, %v1815
        %v1817 = vpop.f32.mrb[0].mxu0
        %1818 = vmatprep.mubr.bf16.mxu0 %v1271
        %1819 = vmatmul.mubr.bf16.gmra.mrb[0].mxu0 %v1270
        %v1820 = vpop.f32.mrb[0].mxu0
        %v1821 = vadd.f32 0.0, %v1820
        %v1822 = vpop.f32.mrb[0].mxu0
        %v1823 = vpop.f32.mrb[0].mxu0
        %v1824 = vadd.f32 0.0, %v1823
        %v1825 = vpop.f32.mrb[0].mxu0
        %1826 = vmatprep.mubr.bf16.mxu0 %v1275
        %1827 = vmatmul.mubr.bf16.gmra.mrb[0].mxu0 %v1274
        %v1828 = vpop.f32.mrb[0].mxu0
        %v1829 = vadd.f32 0.0, %v1828
        %v1830 = vpop.f32.mrb[0].mxu0
        %v1831 = vpop.f32.mrb[0].mxu0
        %v1832 = vadd.f32 0.0, %v1831
        %v1833 = vpop.f32.mrb[0].mxu0
        %1834 = vmatprep.mubr.bf16.mxu0 %v1279
        %1835 = vmatmul.mubr.bf16.gmra.mrb[0].mxu0 %v1278
        %v1836 = vpop.f32.mrb[0].mxu0
        %v1837 = vadd.f32 0.0, %v1836
        %v1838 = vpop.f32.mrb[0].mxu0
        %v1839 = vpop.f32.mrb[0].mxu0
        %v1840 = vadd.f32 0.0, %v1839
        %v1841 = vpop.f32.mrb[0].mxu0
        %1842 = vmatprep.mubr.bf16.mxu0 %v1283
        %1843 = vmatmul.mubr.bf16.gmra.mrb[0].mxu0 %v1282
        %v1844 = vpop.f32.mrb[0].mxu0
        %v1845 = vadd.f32 0.0, %v1844
        %v1846 = vpop.f32.mrb[0].mxu0
        %v1847 = vpop.f32.mrb[0].mxu0
        %v1848 = vadd.f32 0.0, %v1847
        %v1849 = vpop.f32.mrb[0].mxu0
        %1850 = vmatprep.mubr.bf16.mxu0 %v1287
        %1851 = vmatmul.mubr.bf16.gmra.mrb[0].mxu0 %v1286
        %v1852 = vpop.f32.mrb[0].mxu0
        %v1853 = vadd.f32 0.0, %v1852
        %v1854 = vpop.f32.mrb[0].mxu0
        %v1855 = vpop.f32.mrb[0].mxu0
        %v1856 = vadd.f32 0.0, %v1855
        %v1857 = vpop.f32.mrb[0].mxu0
        %1858 = vmatprep.mubr.bf16.mxu0 %v1291
        %1859 = vmatmul.mubr.bf16.gmra.mrb[0].mxu0 %v1290
        %v1860 = vpop.f32.mrb[0].mxu0
        %v1861 = vadd.f32 0.0, %v1860
        %v1862 = vpop.f32.mrb[0].mxu0
        %v1863 = vpop.f32.mrb[0].mxu0
        %v1864 = vadd.f32 0.0, %v1863
        %v1865 = vpop.f32.mrb[0].mxu0
        %1866 = vmatprep.mubr.bf16.mxu0 %v1295
        %1867 = vmatmul.mubr.bf16.gmra.mrb[0].mxu0 %v1294
        %v1868 = vpop.f32.mrb[0].mxu0
        %v1869 = vadd.f32 0.0, %v1868
        %v1870 = vpop.f32.mrb[0].mxu0
        %v1871 = vpop.f32.mrb[0].mxu0
        %v1872 = vadd.f32 0.0, %v1871
        %v1873 = vpop.f32.mrb[0].mxu0
        %1874 = vmatprep.mubr.bf16.mxu0 %v1299
        %1875 = vmatmul.mubr.bf16.gmra.mrb[0].mxu0 %v1298
        %v1876 = vpop.f32.mrb[0].mxu0
        %v1877 = vadd.f32 0.0, %v1876
        %v1878 = vpop.f32.mrb[0].mxu0
        %v1879 = vpop.f32.mrb[0].mxu0
        %v1880 = vadd.f32 0.0, %v1879
        %v1881 = vpop.f32.mrb[0].mxu0
        %1882 = vmatprep.mubr.bf16.mxu0 %v1303
        %1883 = vmatmul.mubr.bf16.gmra.mrb[0].mxu0 %v1302
        %v1884 = vpop.f32.mrb[0].mxu0
        %v1885 = vadd.f32 0.0, %v1884
        %v1886 = vpop.f32.mrb[0].mxu0
        %v1887 = vpop.f32.mrb[0].mxu0
        %v1888 = vadd.f32 0.0, %v1887
        %v1889 = vpop.f32.mrb[0].mxu0
        %1890 = vmatprep.mubr.bf16.mxu0 %v1307
        %1891 = vmatmul.mubr.bf16.gmra.mrb[0].mxu0 %v1306
        %v1892 = vpop.f32.mrb[0].mxu0
        %v1893 = vadd.f32 0.0, %v1892
        %v1894 = vpop.f32.mrb[0].mxu0
        %v1895 = vpop.f32.mrb[0].mxu0
        %v1896 = vadd.f32 0.0, %v1895
        %v1897 = vpop.f32.mrb[0].mxu0
        %1898 = vmatprep.mubr.bf16.mxu0 %v1311
        %1899 = vmatmul.mubr.bf16.gmra.mrb[0].mxu0 %v1310
        %v1900 = vpop.f32.mrb[0].mxu0
        %v1901 = vadd.f32 0.0, %v1900
        %v1902 = vpop.f32.mrb[0].mxu0
        %v1903 = vpop.f32.mrb[0].mxu0
        %v1904 = vadd.f32 0.0, %v1903
        %v1905 = vpop.f32.mrb[0].mxu0
        %1906 = vmatprep.mubr.bf16.mxu0 %v1315
        %1907 = vmatmul.mubr.bf16.gmra.mrb[0].mxu0 %v1314
        %v1908 = vpop.f32.mrb[0].mxu0
        %v1909 = vadd.f32 0.0, %v1908
        %v1910 = vpop.f32.mrb[0].mxu0
        %v1911 = vpop.f32.mrb[0].mxu0
        %v1912 = vadd.f32 0.0, %v1911
        %v1913 = vpop.f32.mrb[0].mxu0
        %1914 = vmatprep.mubr.bf16.mxu0 %v1319
        %1915 = vmatmul.mubr.bf16.gmra.mrb[0].mxu0 %v1318
        %v1916 = vpop.f32.mrb[0].mxu0
        %v1917 = vadd.f32 0.0, %v1916
        %v1918 = vpop.f32.mrb[0].mxu0
        %v1919 = vpop.f32.mrb[0].mxu0
        %v1920 = vadd.f32 0.0, %v1919
        %v1921 = vpop.f32.mrb[0].mxu0
        %1922 = vmatprep.mubr.bf16.mxu0 %v1323
        %1923 = vmatmul.mubr.bf16.gmra.mrb[0].mxu0 %v1322
        %v1924 = vpop.f32.mrb[0].mxu0
        %v1925 = vadd.f32 0.0, %v1924
        %v1926 = vpop.f32.mrb[0].mxu0
        %v1927 = vpop.f32.mrb[0].mxu0
        %v1928 = vadd.f32 0.0, %v1927
        %v1929 = vpop.f32.mrb[0].mxu0
        %1930 = vmatprep.mubr.bf16.mxu0 %v1327
        %1931 = vmatmul.mubr.bf16.gmra.mrb[0].mxu0 %v1326
        %v1932 = vpop.f32.mrb[0].mxu0
        %v1933 = vadd.f32 0.0, %v1932
        %v1934 = vpop.f32.mrb[0].mxu0
        %v1935 = vpop.f32.mrb[0].mxu0
        %v1936 = vadd.f32 0.0, %v1935
        %v1937 = vpop.f32.mrb[0].mxu0
        %1938 = vdwg.mxu0
        %1939 = vmatprep.subr.bf16.mxu0 0
        %1940 = vmatpush1.bf16.msra.mxu0 %v1602
        %1941 = vmatprep.subr.bf16.mxu0 0
        %1942 = vmatpush1.bf16.msra.mxu0 %v1603
        %1943 = vmatprep.subr.bf16.mxu0 0
        %1944 = vmatpush1.bf16.msra.mxu0 %v1604
        %1945 = vmatprep.subr.bf16.mxu0 0
        %1946 = vmatpush1.bf16.msra.mxu0 %v1605
        %1947 = vmatprep.subr.bf16.mxu0 0
        %1948 = vmatpush1.bf16.msra.mxu0 %v1606
        %1949 = vmatprep.subr.bf16.mxu0 0
        %1950 = vmatpush1.bf16.msra.mxu0 %v1607
        %1951 = vmatprep.subr.bf16.mxu0 0
        %1952 = vmatpush1.bf16.msra.mxu0 %v1608
        %1953 = vmatprep.subr.bf16.mxu0 0
        %1954 = vmatpush1.bf16.msra.mxu0 %v1609
        %1955 = vmatprep.subr.bf16.mxu0 0
        %1956 = vmatpush1.bf16.msra.mxu0 %v1610
        %1957 = vmatprep.subr.bf16.mxu0 0
        %1958 = vmatpush1.bf16.msra.mxu0 %v1611
        %1959 = vmatprep.subr.bf16.mxu0 0
        %1960 = vmatpush1.bf16.msra.mxu0 %v1612
        %1961 = vmatprep.subr.bf16.mxu0 0
        %1962 = vmatpush1.bf16.msra.mxu0 %v1613
        %1963 = vmatprep.subr.bf16.mxu0 0
        %1964 = vmatpush1.bf16.msra.mxu0 %v1614
        %1965 = vmatprep.subr.bf16.mxu0 0
        %1966 = vmatpush1.bf16.msra.mxu0 %v1615
        %1967 = vmatprep.subr.bf16.mxu0 0
        %1968 = vmatpush1.bf16.msra.mxu0 %v1616
        %1969 = vmatprep.subr.bf16.mxu0 0
        %1970 = vmatpush1.bf16.msra.mxu0 %v1617
        %1971 = vmatprep.mubr.bf16.mxu0 %v1205
        %1972 = vmatmul.mubr.bf16.gmra.mrb[0].mxu0 %v1204
        %v1973 = vpop.f32.mrb[0].mxu0
        %v1974 = vadd.f32 %v1685, %v1973
        %v1975 = vpop.f32.mrb[0].mxu0
        %v1976 = vpop.f32.mrb[0].mxu0
        %v1977 = vadd.f32 %v1688, %v1976
        %v1978 = vpop.f32.mrb[0].mxu0
        %1979 = vmatprep.mubr.bf16.mxu0 %v1209
        %1980 = vmatmul.mubr.bf16.gmra.mrb[0].mxu0 %v1208
        %v1981 = vpop.f32.mrb[0].mxu0
        %v1982 = vadd.f32 %v1693, %v1981
        %v1983 = vpop.f32.mrb[0].mxu0
        %v1984 = vpop.f32.mrb[0].mxu0
        %v1985 = vadd.f32 %v1696, %v1984
        %v1986 = vpop.f32.mrb[0].mxu0
        %1987 = vmatprep.mubr.bf16.mxu0 %v1213
        %1988 = vmatmul.mubr.bf16.gmra.mrb[0].mxu0 %v1212
        %v1989 = vpop.f32.mrb[0].mxu0
        %v1990 = vadd.f32 %v1701, %v1989
        %v1991 = vpop.f32.mrb[0].mxu0
        %v1992 = vpop.f32.mrb[0].mxu0
        %v1993 = vadd.f32 %v1704, %v1992
        %v1994 = vpop.f32.mrb[0].mxu0
        %1995 = vmatprep.mubr.bf16.mxu0 %v1217
        %1996 = vmatmul.mubr.bf16.gmra.mrb[0].mxu0 %v1216
        %v1997 = vpop.f32.mrb[0].mxu0
        %v1998 = vadd.f32 %v1709, %v1997
        %v1999 = vpop.f32.mrb[0].mxu0
        %v2000 = vpop.f32.mrb[0].mxu0
        %v2001 = vadd.f32 %v1712, %v2000
        %v2002 = vpop.f32.mrb[0].mxu0
        %2003 = vmatprep.mubr.bf16.mxu0 %v1221
        %2004 = vmatmul.mubr.bf16.gmra.mrb[0].mxu0 %v1220
        %v2005 = vpop.f32.mrb[0].mxu0
        %v2006 = vadd.f32 %v1717, %v2005
        %v2007 = vpop.f32.mrb[0].mxu0
        %v2008 = vpop.f32.mrb[0].mxu0
        %v2009 = vadd.f32 %v1720, %v2008
        %v2010 = vpop.f32.mrb[0].mxu0
        %2011 = vmatprep.mubr.bf16.mxu0 %v1225
        %2012 = vmatmul.mubr.bf16.gmra.mrb[0].mxu0 %v1224
        %v2013 = vpop.f32.mrb[0].mxu0
        %v2014 = vadd.f32 %v1725, %v2013
        %v2015 = vpop.f32.mrb[0].mxu0
        %v2016 = vpop.f32.mrb[0].mxu0
        %v2017 = vadd.f32 %v1728, %v2016
        %v2018 = vpop.f32.mrb[0].mxu0
        %2019 = vmatprep.mubr.bf16.mxu0 %v1229
        %2020 = vmatmul.mubr.bf16.gmra.mrb[0].mxu0 %v1228
        %v2021 = vpop.f32.mrb[0].mxu0
        %v2022 = vadd.f32 %v1733, %v2021
        %v2023 = vpop.f32.mrb[0].mxu0
        %v2024 = vpop.f32.mrb[0].mxu0
        %v2025 = vadd.f32 %v1736, %v2024
        %v2026 = vpop.f32.mrb[0].mxu0
        %2027 = vmatprep.mubr.bf16.mxu0 %v1233
        %2028 = vmatmul.mubr.bf16.gmra.mrb[0].mxu0 %v1232
        %v2029 = vpop.f32.mrb[0].mxu0
        %v2030 = vadd.f32 %v1741, %v2029
        %v2031 = vpop.f32.mrb[0].mxu0
        %v2032 = vpop.f32.mrb[0].mxu0
        %v2033 = vadd.f32 %v1744, %v2032
        %v2034 = vpop.f32.mrb[0].mxu0
        %2035 = vmatprep.mubr.bf16.mxu0 %v1237
        %2036 = vmatmul.mubr.bf16.gmra.mrb[0].mxu0 %v1236
        %v2037 = vpop.f32.mrb[0].mxu0
        %v2038 = vadd.f32 %v1749, %v2037
        %v2039 = vpop.f32.mrb[0].mxu0
        %v2040 = vpop.f32.mrb[0].mxu0
        %v2041 = vadd.f32 %v1752, %v2040
        %v2042 = vpop.f32.mrb[0].mxu0
        %2043 = vmatprep.mubr.bf16.mxu0 %v1241
        %2044 = vmatmul.mubr.bf16.gmra.mrb[0].mxu0 %v1240
        %v2045 = vpop.f32.mrb[0].mxu0
        %v2046 = vadd.f32 %v1757, %v2045
        %v2047 = vpop.f32.mrb[0].mxu0
        %v2048 = vpop.f32.mrb[0].mxu0
        %v2049 = vadd.f32 %v1760, %v2048
        %v2050 = vpop.f32.mrb[0].mxu0
        %2051 = vmatprep.mubr.bf16.mxu0 %v1245
        %2052 = vmatmul.mubr.bf16.gmra.mrb[0].mxu0 %v1244
        %v2053 = vpop.f32.mrb[0].mxu0
        %v2054 = vadd.f32 %v1765, %v2053
        %v2055 = vpop.f32.mrb[0].mxu0
        %v2056 = vpop.f32.mrb[0].mxu0
        %v2057 = vadd.f32 %v1768, %v2056
        %v2058 = vpop.f32.mrb[0].mxu0
        %2059 = vmatprep.mubr.bf16.mxu0 %v1249
        %2060 = vmatmul.mubr.bf16.gmra.mrb[0].mxu0 %v1248
        %v2061 = vpop.f32.mrb[0].mxu0
        %v2062 = vadd.f32 %v1773, %v2061
        %v2063 = vpop.f32.mrb[0].mxu0
        %v2064 = vpop.f32.mrb[0].mxu0
        %v2065 = vadd.f32 %v1776, %v2064
        %v2066 = vpop.f32.mrb[0].mxu0
        %2067 = vmatprep.mubr.bf16.mxu0 %v1253
        %2068 = vmatmul.mubr.bf16.gmra.mrb[0].mxu0 %v1252
        %v2069 = vpop.f32.mrb[0].mxu0
        %v2070 = vadd.f32 %v1781, %v2069
        %v2071 = vpop.f32.mrb[0].mxu0
        %v2072 = vpop.f32.mrb[0].mxu0
        %v2073 = vadd.f32 %v1784, %v2072
        %v2074 = vpop.f32.mrb[0].mxu0
        %2075 = vmatprep.mubr.bf16.mxu0 %v1257
        %2076 = vmatmul.mubr.bf16.gmra.mrb[0].mxu0 %v1256
        %v2077 = vpop.f32.mrb[0].mxu0
        %v2078 = vadd.f32 %v1789, %v2077
        %v2079 = vpop.f32.mrb[0].mxu0
        %v2080 = vpop.f32.mrb[0].mxu0
        %v2081 = vadd.f32 %v1792, %v2080
        %v2082 = vpop.f32.mrb[0].mxu0
        %2083 = vmatprep.mubr.bf16.mxu0 %v1261
        %2084 = vmatmul.mubr.bf16.gmra.mrb[0].mxu0 %v1260
        %v2085 = vpop.f32.mrb[0].mxu0
        %v2086 = vadd.f32 %v1797, %v2085
        %v2087 = vpop.f32.mrb[0].mxu0
        %v2088 = vpop.f32.mrb[0].mxu0
        %v2089 = vadd.f32 %v1800, %v2088
        %v2090 = vpop.f32.mrb[0].mxu0
        %2091 = vmatprep.mubr.bf16.mxu0 %v1265
        %2092 = vmatmul.mubr.bf16.gmra.mrb[0].mxu0 %v1264
        %v2093 = vpop.f32.mrb[0].mxu0
        %v2094 = vadd.f32 %v1805, %v2093
        %v2095 = vpop.f32.mrb[0].mxu0
        %v2096 = vpop.f32.mrb[0].mxu0
        %v2097 = vadd.f32 %v1808, %v2096
        %v2098 = vpop.f32.mrb[0].mxu0
        %2099 = vmatprep.mubr.bf16.mxu0 %v1269
        %2100 = vmatmul.mubr.bf16.gmra.mrb[0].mxu0 %v1268
        %v2101 = vpop.f32.mrb[0].mxu0
        %v2102 = vadd.f32 %v1813, %v2101
        %v2103 = vpop.f32.mrb[0].mxu0
        %v2104 = vpop.f32.mrb[0].mxu0
        %v2105 = vadd.f32 %v1816, %v2104
        %v2106 = vpop.f32.mrb[0].mxu0
        %2107 = vmatprep.mubr.bf16.mxu0 %v1273
        %2108 = vmatmul.mubr.bf16.gmra.mrb[0].mxu0 %v1272
        %v2109 = vpop.f32.mrb[0].mxu0
        %v2110 = vadd.f32 %v1821, %v2109
        %v2111 = vpop.f32.mrb[0].mxu0
        %v2112 = vpop.f32.mrb[0].mxu0
        %v2113 = vadd.f32 %v1824, %v2112
        %v2114 = vpop.f32.mrb[0].mxu0
        %2115 = vmatprep.mubr.bf16.mxu0 %v1277
        %2116 = vmatmul.mubr.bf16.gmra.mrb[0].mxu0 %v1276
        %v2117 = vpop.f32.mrb[0].mxu0
        %v2118 = vadd.f32 %v1829, %v2117
        %v2119 = vpop.f32.mrb[0].mxu0
        %v2120 = vpop.f32.mrb[0].mxu0
        %v2121 = vadd.f32 %v1832, %v2120
        %v2122 = vpop.f32.mrb[0].mxu0
        %2123 = vmatprep.mubr.bf16.mxu0 %v1281
        %2124 = vmatmul.mubr.bf16.gmra.mrb[0].mxu0 %v1280
        %v2125 = vpop.f32.mrb[0].mxu0
        %v2126 = vadd.f32 %v1837, %v2125
        %v2127 = vpop.f32.mrb[0].mxu0
        %v2128 = vpop.f32.mrb[0].mxu0
        %v2129 = vadd.f32 %v1840, %v2128
        %v2130 = vpop.f32.mrb[0].mxu0
        %2131 = vmatprep.mubr.bf16.mxu0 %v1285
        %2132 = vmatmul.mubr.bf16.gmra.mrb[0].mxu0 %v1284
        %v2133 = vpop.f32.mrb[0].mxu0
        %v2134 = vadd.f32 %v1845, %v2133
        %v2135 = vpop.f32.mrb[0].mxu0
        %v2136 = vpop.f32.mrb[0].mxu0
        %v2137 = vadd.f32 %v1848, %v2136
        %v2138 = vpop.f32.mrb[0].mxu0
        %2139 = vmatprep.mubr.bf16.mxu0 %v1289
        %2140 = vmatmul.mubr.bf16.gmra.mrb[0].mxu0 %v1288
        %v2141 = vpop.f32.mrb[0].mxu0
        %v2142 = vadd.f32 %v1853, %v2141
        %v2143 = vpop.f32.mrb[0].mxu0
        %v2144 = vpop.f32.mrb[0].mxu0
        %v2145 = vadd.f32 %v1856, %v2144
        %v2146 = vpop.f32.mrb[0].mxu0
        %2147 = vmatprep.mubr.bf16.mxu0 %v1293
        %2148 = vmatmul.mubr.bf16.gmra.mrb[0].mxu0 %v1292
        %v2149 = vpop.f32.mrb[0].mxu0
        %v2150 = vadd.f32 %v1861, %v2149
        %v2151 = vpop.f32.mrb[0].mxu0
        %v2152 = vpop.f32.mrb[0].mxu0
        %v2153 = vadd.f32 %v1864, %v2152
        %v2154 = vpop.f32.mrb[0].mxu0
        %2155 = vmatprep.mubr.bf16.mxu0 %v1297
        %2156 = vmatmul.mubr.bf16.gmra.mrb[0].mxu0 %v1296
        %v2157 = vpop.f32.mrb[0].mxu0
        %v2158 = vadd.f32 %v1869, %v2157
        %v2159 = vpop.f32.mrb[0].mxu0
        %v2160 = vpop.f32.mrb[0].mxu0
        %v2161 = vadd.f32 %v1872, %v2160
        %v2162 = vpop.f32.mrb[0].mxu0
        %2163 = vmatprep.mubr.bf16.mxu0 %v1301
        %2164 = vmatmul.mubr.bf16.gmra.mrb[0].mxu0 %v1300
        %v2165 = vpop.f32.mrb[0].mxu0
        %v2166 = vadd.f32 %v1877, %v2165
        %v2167 = vpop.f32.mrb[0].mxu0
        %v2168 = vpop.f32.mrb[0].mxu0
        %v2169 = vadd.f32 %v1880, %v2168
        %v2170 = vpop.f32.mrb[0].mxu0
        %2171 = vmatprep.mubr.bf16.mxu0 %v1305
        %2172 = vmatmul.mubr.bf16.gmra.mrb[0].mxu0 %v1304
        %v2173 = vpop.f32.mrb[0].mxu0
        %v2174 = vadd.f32 %v1885, %v2173
        %v2175 = vpop.f32.mrb[0].mxu0
        %v2176 = vpop.f32.mrb[0].mxu0
        %v2177 = vadd.f32 %v1888, %v2176
        %v2178 = vpop.f32.mrb[0].mxu0
        %2179 = vmatprep.mubr.bf16.mxu0 %v1309
        %2180 = vmatmul.mubr.bf16.gmra.mrb[0].mxu0 %v1308
        %v2181 = vpop.f32.mrb[0].mxu0
        %v2182 = vadd.f32 %v1893, %v2181
        %v2183 = vpop.f32.mrb[0].mxu0
        %v2184 = vpop.f32.mrb[0].mxu0
        %v2185 = vadd.f32 %v1896, %v2184
        %v2186 = vpop.f32.mrb[0].mxu0
        %2187 = vmatprep.mubr.bf16.mxu0 %v1313
        %2188 = vmatmul.mubr.bf16.gmra.mrb[0].mxu0 %v1312
        %v2189 = vpop.f32.mrb[0].mxu0
        %v2190 = vadd.f32 %v1901, %v2189
        %v2191 = vpop.f32.mrb[0].mxu0
        %v2192 = vpop.f32.mrb[0].mxu0
        %v2193 = vadd.f32 %v1904, %v2192
        %v2194 = vpop.f32.mrb[0].mxu0
        %2195 = vmatprep.mubr.bf16.mxu0 %v1317
        %2196 = vmatmul.mubr.bf16.gmra.mrb[0].mxu0 %v1316
        %v2197 = vpop.f32.mrb[0].mxu0
        %v2198 = vadd.f32 %v1909, %v2197
        %v2199 = vpop.f32.mrb[0].mxu0
        %v2200 = vpop.f32.mrb[0].mxu0
        %v2201 = vadd.f32 %v1912, %v2200
        %v2202 = vpop.f32.mrb[0].mxu0
        %2203 = vmatprep.mubr.bf16.mxu0 %v1321
        %2204 = vmatmul.mubr.bf16.gmra.mrb[0].mxu0 %v1320
        %v2205 = vpop.f32.mrb[0].mxu0
        %v2206 = vadd.f32 %v1917, %v2205
        %v2207 = vpop.f32.mrb[0].mxu0
        %v2208 = vpop.f32.mrb[0].mxu0
        %v2209 = vadd.f32 %v1920, %v2208
        %v2210 = vpop.f32.mrb[0].mxu0
        %2211 = vmatprep.mubr.bf16.mxu0 %v1325
        %2212 = vmatmul.mubr.bf16.gmra.mrb[0].mxu0 %v1324
        %v2213 = vpop.f32.mrb[0].mxu0
        %v2214 = vadd.f32 %v1925, %v2213
        %v2215 = vpop.f32.mrb[0].mxu0
        %v2216 = vpop.f32.mrb[0].mxu0
        %v2217 = vadd.f32 %v1928, %v2216
        %v2218 = vpop.f32.mrb[0].mxu0
        %2219 = vmatprep.mubr.bf16.mxu0 %v1329
        %2220 = vmatmul.mubr.bf16.gmra.mrb[0].mxu0 %v1328
        %v2221 = vpop.f32.mrb[0].mxu0
        %v2222 = vadd.f32 %v1933, %v2221
        %v2223 = vpop.f32.mrb[0].mxu0
        %v2224 = vpop.f32.mrb[0].mxu0
        %v2225 = vadd.f32 %v1936, %v2224
        %v2226 = vpop.f32.mrb[0].mxu0
        %2227 = vdwg.mxu0
        %v2292 = vunpack.c.l.b16 %v1330
        %v2293 = vunpack.c.l.b16 %v1331
        %v2294 = vunpack.c.l.b16 %v1332
        %v2295 = vunpack.c.l.b16 %v1333
        %v2296 = vunpack.c.l.b16 %v1334
        %v2297 = vunpack.c.l.b16 %v1335
        %v2298 = vunpack.c.l.b16 %v1336
        %v2299 = vunpack.c.l.b16 %v1337
        %v2300 = vunpack.c.l.b16 %v1338
        %v2301 = vunpack.c.l.b16 %v1339
        %v2302 = vunpack.c.l.b16 %v1340
        %v2303 = vunpack.c.l.b16 %v1341
        %v2304 = vunpack.c.l.b16 %v1342
        %v2305 = vunpack.c.l.b16 %v1343
        %v2306 = vunpack.c.l.b16 %v1344
        %v2307 = vunpack.c.l.b16 %v1345
        %v2308 = vunpack.c.l.b16 %v1346
        %v2309 = vunpack.c.l.b16 %v1347
        %v2310 = vunpack.c.l.b16 %v1348
        %v2311 = vunpack.c.l.b16 %v1349
        %v2312 = vunpack.c.l.b16 %v1350
        %v2313 = vunpack.c.l.b16 %v1351
        %v2314 = vunpack.c.l.b16 %v1352
        %v2315 = vunpack.c.l.b16 %v1353
        %v2316 = vunpack.c.l.b16 %v1354
        %v2317 = vunpack.c.l.b16 %v1355
        %v2318 = vunpack.c.l.b16 %v1356
        %v2319 = vunpack.c.l.b16 %v1357
        %v2320 = vunpack.c.l.b16 %v1358
        %v2321 = vunpack.c.l.b16 %v1359
        %v2322 = vunpack.c.l.b16 %v1360
        %v2323 = vunpack.c.l.b16 %v1361
        %v2324 = vunpack.c.l.b16 %v1362
        %v2325 = vunpack.c.l.b16 %v1363
        %v2326 = vunpack.c.l.b16 %v1364
        %v2327 = vunpack.c.l.b16 %v1365
        %v2328 = vunpack.c.l.b16 %v1366
        %v2329 = vunpack.c.l.b16 %v1367
        %v2330 = vunpack.c.l.b16 %v1368
        %v2331 = vunpack.c.l.b16 %v1369
        %v2332 = vunpack.c.l.b16 %v1370
        %v2333 = vunpack.c.l.b16 %v1371
        %v2334 = vunpack.c.l.b16 %v1372
        %v2335 = vunpack.c.l.b16 %v1373
        %v2336 = vunpack.c.l.b16 %v1374
        %v2337 = vunpack.c.l.b16 %v1375
        %v2338 = vunpack.c.l.b16 %v1376
        %v2339 = vunpack.c.l.b16 %v1377
        %v2340 = vunpack.c.l.b16 %v1378
        %v2341 = vunpack.c.l.b16 %v1379
        %v2342 = vunpack.c.l.b16 %v1380
        %v2343 = vunpack.c.l.b16 %v1381
        %v2344 = vunpack.c.l.b16 %v1382
        %v2345 = vunpack.c.l.b16 %v1383
        %v2346 = vunpack.c.l.b16 %v1384
        %v2347 = vunpack.c.l.b16 %v1385
        %v2348 = vunpack.c.l.b16 %v1386
        %v2349 = vunpack.c.l.b16 %v1387
        %v2350 = vunpack.c.l.b16 %v1388
        %v2351 = vunpack.c.l.b16 %v1389
        %v2352 = vunpack.c.l.b16 %v1390
        %v2353 = vunpack.c.l.b16 %v1391
        %v2354 = vunpack.c.l.b16 %v1392
        %v2355 = vunpack.c.l.b16 %v1393
        %v2356 = vpack.c.b16 %v2293, %v2292
        %v2357 = vpack.c.b16 %v2295, %v2294
        %v2358 = vpack.c.b16 %v2297, %v2296
        %v2359 = vpack.c.b16 %v2299, %v2298
        %v2360 = vpack.c.b16 %v2301, %v2300
        %v2361 = vpack.c.b16 %v2303, %v2302
        %v2362 = vpack.c.b16 %v2305, %v2304
        %v2363 = vpack.c.b16 %v2307, %v2306
        %v2364 = vpack.c.b16 %v2309, %v2308
        %v2365 = vpack.c.b16 %v2311, %v2310
        %v2366 = vpack.c.b16 %v2313, %v2312
        %v2367 = vpack.c.b16 %v2315, %v2314
        %v2368 = vpack.c.b16 %v2317, %v2316
        %v2369 = vpack.c.b16 %v2319, %v2318
        %v2370 = vpack.c.b16 %v2321, %v2320
        %v2371 = vpack.c.b16 %v2323, %v2322
        %v2372 = vpack.c.b16 %v2325, %v2324
        %v2373 = vpack.c.b16 %v2327, %v2326
        %v2374 = vpack.c.b16 %v2329, %v2328
        %v2375 = vpack.c.b16 %v2331, %v2330
        %v2376 = vpack.c.b16 %v2333, %v2332
        %v2377 = vpack.c.b16 %v2335, %v2334
        %v2378 = vpack.c.b16 %v2337, %v2336
        %v2379 = vpack.c.b16 %v2339, %v2338
        %v2380 = vpack.c.b16 %v2341, %v2340
        %v2381 = vpack.c.b16 %v2343, %v2342
        %v2382 = vpack.c.b16 %v2345, %v2344
        %v2383 = vpack.c.b16 %v2347, %v2346
        %v2384 = vpack.c.b16 %v2349, %v2348
        %v2385 = vpack.c.b16 %v2351, %v2350
        %v2386 = vpack.c.b16 %v2353, %v2352
        %v2387 = vpack.c.b16 %v2355, %v2354
        %2420 = vmatprep.subr.bf16.mxu0 0
        %2421 = vmatpush1.bf16.msra.mxu0 %v2356
        %2422 = vmatprep.subr.bf16.mxu0 0
        %2423 = vmatpush1.bf16.msra.mxu0 %v2357
        %2424 = vmatprep.subr.bf16.mxu0 0
        %2425 = vmatpush1.bf16.msra.mxu0 %v2358
        %2426 = vmatprep.subr.bf16.mxu0 0
        %2427 = vmatpush1.bf16.msra.mxu0 %v2359
        %2428 = vmatprep.subr.bf16.mxu0 0
        %2429 = vmatpush1.bf16.msra.mxu0 %v2360
        %2430 = vmatprep.subr.bf16.mxu0 0
        %2431 = vmatpush1.bf16.msra.mxu0 %v2361
        %2432 = vmatprep.subr.bf16.mxu0 0
        %2433 = vmatpush1.bf16.msra.mxu0 %v2362
        %2434 = vmatprep.subr.bf16.mxu0 0
        %2435 = vmatpush1.bf16.msra.mxu0 %v2363
        %2436 = vmatprep.subr.bf16.mxu0 0
        %2437 = vmatpush1.bf16.msra.mxu0 %v2364
        %2438 = vmatprep.subr.bf16.mxu0 0
        %2439 = vmatpush1.bf16.msra.mxu0 %v2365
        %2440 = vmatprep.subr.bf16.mxu0 0
        %2441 = vmatpush1.bf16.msra.mxu0 %v2366
        %2442 = vmatprep.subr.bf16.mxu0 0
        %2443 = vmatpush1.bf16.msra.mxu0 %v2367
        %2444 = vmatprep.subr.bf16.mxu0 0
        %2445 = vmatpush1.bf16.msra.mxu0 %v2368
        %2446 = vmatprep.subr.bf16.mxu0 0
        %2447 = vmatpush1.bf16.msra.mxu0 %v2369
        %2448 = vmatprep.subr.bf16.mxu0 0
        %2449 = vmatpush1.bf16.msra.mxu0 %v2370
        %2450 = vmatprep.subr.bf16.mxu0 0
        %2451 = vmatpush1.bf16.msra.mxu0 %v2371
        %2452 = vmatprep.mubr.bf16.mxu0 %v1203
        %2453 = vmatmul.mubr.bf16.gmra.mrb[0].mxu0 %v1202
        %v2454 = vpop.f32.mrb[0].mxu0
        %v2455 = vadd.f32 %v1974, %v2454
        %v2456 = vpop.f32.mrb[0].mxu0
        %v2457 = vpop.f32.mrb[0].mxu0
        %v2458 = vadd.f32 %v1977, %v2457
        %v2459 = vpop.f32.mrb[0].mxu0
        %2460 = vmatprep.mubr.bf16.mxu0 %v1207
        %2461 = vmatmul.mubr.bf16.gmra.mrb[0].mxu0 %v1206
        %v2462 = vpop.f32.mrb[0].mxu0
        %v2463 = vadd.f32 %v1982, %v2462
        %v2464 = vpop.f32.mrb[0].mxu0
        %v2465 = vpop.f32.mrb[0].mxu0
        %v2466 = vadd.f32 %v1985, %v2465
        %v2467 = vpop.f32.mrb[0].mxu0
        %2468 = vmatprep.mubr.bf16.mxu0 %v1211
        %2469 = vmatmul.mubr.bf16.gmra.mrb[0].mxu0 %v1210
        %v2470 = vpop.f32.mrb[0].mxu0
        %v2471 = vadd.f32 %v1990, %v2470
        %v2472 = vpop.f32.mrb[0].mxu0
        %v2473 = vpop.f32.mrb[0].mxu0
        %v2474 = vadd.f32 %v1993, %v2473
        %v2475 = vpop.f32.mrb[0].mxu0
        %2476 = vmatprep.mubr.bf16.mxu0 %v1215
        %2477 = vmatmul.mubr.bf16.gmra.mrb[0].mxu0 %v1214
        %v2478 = vpop.f32.mrb[0].mxu0
        %v2479 = vadd.f32 %v1998, %v2478
        %v2480 = vpop.f32.mrb[0].mxu0
        %v2481 = vpop.f32.mrb[0].mxu0
        %v2482 = vadd.f32 %v2001, %v2481
        %v2483 = vpop.f32.mrb[0].mxu0
        %2484 = vmatprep.mubr.bf16.mxu0 %v1219
        %2485 = vmatmul.mubr.bf16.gmra.mrb[0].mxu0 %v1218
        %v2486 = vpop.f32.mrb[0].mxu0
        %v2487 = vadd.f32 %v2006, %v2486
        %v2488 = vpop.f32.mrb[0].mxu0
        %v2489 = vpop.f32.mrb[0].mxu0
        %v2490 = vadd.f32 %v2009, %v2489
        %v2491 = vpop.f32.mrb[0].mxu0
        %2492 = vmatprep.mubr.bf16.mxu0 %v1223
        %2493 = vmatmul.mubr.bf16.gmra.mrb[0].mxu0 %v1222
        %v2494 = vpop.f32.mrb[0].mxu0
        %v2495 = vadd.f32 %v2014, %v2494
        %v2496 = vpop.f32.mrb[0].mxu0
        %v2497 = vpop.f32.mrb[0].mxu0
        %v2498 = vadd.f32 %v2017, %v2497
        %v2499 = vpop.f32.mrb[0].mxu0
        %2500 = vmatprep.mubr.bf16.mxu0 %v1227
        %2501 = vmatmul.mubr.bf16.gmra.mrb[0].mxu0 %v1226
        %v2502 = vpop.f32.mrb[0].mxu0
        %v2503 = vadd.f32 %v2022, %v2502
        %v2504 = vpop.f32.mrb[0].mxu0
        %v2505 = vpop.f32.mrb[0].mxu0
        %v2506 = vadd.f32 %v2025, %v2505
        %v2507 = vpop.f32.mrb[0].mxu0
        %2508 = vmatprep.mubr.bf16.mxu0 %v1231
        %2509 = vmatmul.mubr.bf16.gmra.mrb[0].mxu0 %v1230
        %v2510 = vpop.f32.mrb[0].mxu0
        %v2511 = vadd.f32 %v2030, %v2510
        %v2512 = vpop.f32.mrb[0].mxu0
        %v2513 = vpop.f32.mrb[0].mxu0
        %v2514 = vadd.f32 %v2033, %v2513
        %v2515 = vpop.f32.mrb[0].mxu0
        %2516 = vmatprep.mubr.bf16.mxu0 %v1235
        %2517 = vmatmul.mubr.bf16.gmra.mrb[0].mxu0 %v1234
        %v2518 = vpop.f32.mrb[0].mxu0
        %v2519 = vadd.f32 %v2038, %v2518
        %v2520 = vpop.f32.mrb[0].mxu0
        %v2521 = vpop.f32.mrb[0].mxu0
        %v2522 = vadd.f32 %v2041, %v2521
        %v2523 = vpop.f32.mrb[0].mxu0
        %2524 = vmatprep.mubr.bf16.mxu0 %v1239
        %2525 = vmatmul.mubr.bf16.gmra.mrb[0].mxu0 %v1238
        %v2526 = vpop.f32.mrb[0].mxu0
        %v2527 = vadd.f32 %v2046, %v2526
        %v2528 = vpop.f32.mrb[0].mxu0
        %v2529 = vpop.f32.mrb[0].mxu0
        %v2530 = vadd.f32 %v2049, %v2529
        %v2531 = vpop.f32.mrb[0].mxu0
        %2532 = vmatprep.mubr.bf16.mxu0 %v1243
        %2533 = vmatmul.mubr.bf16.gmra.mrb[0].mxu0 %v1242
        %v2534 = vpop.f32.mrb[0].mxu0
        %v2535 = vadd.f32 %v2054, %v2534
        %v2536 = vpop.f32.mrb[0].mxu0
        %v2537 = vpop.f32.mrb[0].mxu0
        %v2538 = vadd.f32 %v2057, %v2537
        %v2539 = vpop.f32.mrb[0].mxu0
        %2540 = vmatprep.mubr.bf16.mxu0 %v1247
        %2541 = vmatmul.mubr.bf16.gmra.mrb[0].mxu0 %v1246
        %v2542 = vpop.f32.mrb[0].mxu0
        %v2543 = vadd.f32 %v2062, %v2542
        %v2544 = vpop.f32.mrb[0].mxu0
        %v2545 = vpop.f32.mrb[0].mxu0
        %v2546 = vadd.f32 %v2065, %v2545
        %v2547 = vpop.f32.mrb[0].mxu0
        %2548 = vmatprep.mubr.bf16.mxu0 %v1251
        %2549 = vmatmul.mubr.bf16.gmra.mrb[0].mxu0 %v1250
        %v2550 = vpop.f32.mrb[0].mxu0
        %v2551 = vadd.f32 %v2070, %v2550
        %v2552 = vpop.f32.mrb[0].mxu0
        %v2553 = vpop.f32.mrb[0].mxu0
        %v2554 = vadd.f32 %v2073, %v2553
        %v2555 = vpop.f32.mrb[0].mxu0
        %2556 = vmatprep.mubr.bf16.mxu0 %v1255
        %2557 = vmatmul.mubr.bf16.gmra.mrb[0].mxu0 %v1254
        %v2558 = vpop.f32.mrb[0].mxu0
        %v2559 = vadd.f32 %v2078, %v2558
        %v2560 = vpop.f32.mrb[0].mxu0
        %v2561 = vpop.f32.mrb[0].mxu0
        %v2562 = vadd.f32 %v2081, %v2561
        %v2563 = vpop.f32.mrb[0].mxu0
        %2564 = vmatprep.mubr.bf16.mxu0 %v1259
        %2565 = vmatmul.mubr.bf16.gmra.mrb[0].mxu0 %v1258
        %v2566 = vpop.f32.mrb[0].mxu0
        %v2567 = vadd.f32 %v2086, %v2566
        %v2568 = vpop.f32.mrb[0].mxu0
        %v2569 = vpop.f32.mrb[0].mxu0
        %v2570 = vadd.f32 %v2089, %v2569
        %v2571 = vpop.f32.mrb[0].mxu0
        %2572 = vmatprep.mubr.bf16.mxu0 %v1263
        %2573 = vmatmul.mubr.bf16.gmra.mrb[0].mxu0 %v1262
        %v2574 = vpop.f32.mrb[0].mxu0
        %v2575 = vadd.f32 %v2094, %v2574
        %v2576 = vpop.f32.mrb[0].mxu0
        %v2577 = vpop.f32.mrb[0].mxu0
        %v2578 = vadd.f32 %v2097, %v2577
        %v2579 = vpop.f32.mrb[0].mxu0
        %2580 = vmatprep.mubr.bf16.mxu0 %v1267
        %2581 = vmatmul.mubr.bf16.gmra.mrb[0].mxu0 %v1266
        %v2582 = vpop.f32.mrb[0].mxu0
        %v2583 = vadd.f32 %v2102, %v2582
        %v2584 = vpop.f32.mrb[0].mxu0
        %v2585 = vpop.f32.mrb[0].mxu0
        %v2586 = vadd.f32 %v2105, %v2585
        %v2587 = vpop.f32.mrb[0].mxu0
        %2588 = vmatprep.mubr.bf16.mxu0 %v1271
        %2589 = vmatmul.mubr.bf16.gmra.mrb[0].mxu0 %v1270
        %v2590 = vpop.f32.mrb[0].mxu0
        %v2591 = vadd.f32 %v2110, %v2590
        %v2592 = vpop.f32.mrb[0].mxu0
        %v2593 = vpop.f32.mrb[0].mxu0
        %v2594 = vadd.f32 %v2113, %v2593
        %v2595 = vpop.f32.mrb[0].mxu0
        %2596 = vmatprep.mubr.bf16.mxu0 %v1275
        %2597 = vmatmul.mubr.bf16.gmra.mrb[0].mxu0 %v1274
        %v2598 = vpop.f32.mrb[0].mxu0
        %v2599 = vadd.f32 %v2118, %v2598
        %v2600 = vpop.f32.mrb[0].mxu0
        %v2601 = vpop.f32.mrb[0].mxu0
        %v2602 = vadd.f32 %v2121, %v2601
        %v2603 = vpop.f32.mrb[0].mxu0
        %2604 = vmatprep.mubr.bf16.mxu0 %v1279
        %2605 = vmatmul.mubr.bf16.gmra.mrb[0].mxu0 %v1278
        %v2606 = vpop.f32.mrb[0].mxu0
        %v2607 = vadd.f32 %v2126, %v2606
        %v2608 = vpop.f32.mrb[0].mxu0
        %v2609 = vpop.f32.mrb[0].mxu0
        %v2610 = vadd.f32 %v2129, %v2609
        %v2611 = vpop.f32.mrb[0].mxu0
        %2612 = vmatprep.mubr.bf16.mxu0 %v1283
        %2613 = vmatmul.mubr.bf16.gmra.mrb[0].mxu0 %v1282
        %v2614 = vpop.f32.mrb[0].mxu0
        %v2615 = vadd.f32 %v2134, %v2614
        %v2616 = vpop.f32.mrb[0].mxu0
        %v2617 = vpop.f32.mrb[0].mxu0
        %v2618 = vadd.f32 %v2137, %v2617
        %v2619 = vpop.f32.mrb[0].mxu0
        %2620 = vmatprep.mubr.bf16.mxu0 %v1287
        %2621 = vmatmul.mubr.bf16.gmra.mrb[0].mxu0 %v1286
        %v2622 = vpop.f32.mrb[0].mxu0
        %v2623 = vadd.f32 %v2142, %v2622
        %v2624 = vpop.f32.mrb[0].mxu0
        %v2625 = vpop.f32.mrb[0].mxu0
        %v2626 = vadd.f32 %v2145, %v2625
        %v2627 = vpop.f32.mrb[0].mxu0
        %2628 = vmatprep.mubr.bf16.mxu0 %v1291
        %2629 = vmatmul.mubr.bf16.gmra.mrb[0].mxu0 %v1290
        %v2630 = vpop.f32.mrb[0].mxu0
        %v2631 = vadd.f32 %v2150, %v2630
        %v2632 = vpop.f32.mrb[0].mxu0
        %v2633 = vpop.f32.mrb[0].mxu0
        %v2634 = vadd.f32 %v2153, %v2633
        %v2635 = vpop.f32.mrb[0].mxu0
        %2636 = vmatprep.mubr.bf16.mxu0 %v1295
        %2637 = vmatmul.mubr.bf16.gmra.mrb[0].mxu0 %v1294
        %v2638 = vpop.f32.mrb[0].mxu0
        %v2639 = vadd.f32 %v2158, %v2638
        %v2640 = vpop.f32.mrb[0].mxu0
        %v2641 = vpop.f32.mrb[0].mxu0
        %v2642 = vadd.f32 %v2161, %v2641
        %v2643 = vpop.f32.mrb[0].mxu0
        %2644 = vmatprep.mubr.bf16.mxu0 %v1299
        %2645 = vmatmul.mubr.bf16.gmra.mrb[0].mxu0 %v1298
        %v2646 = vpop.f32.mrb[0].mxu0
        %v2647 = vadd.f32 %v2166, %v2646
        %v2648 = vpop.f32.mrb[0].mxu0
        %v2649 = vpop.f32.mrb[0].mxu0
        %v2650 = vadd.f32 %v2169, %v2649
        %v2651 = vpop.f32.mrb[0].mxu0
        %2652 = vmatprep.mubr.bf16.mxu0 %v1303
        %2653 = vmatmul.mubr.bf16.gmra.mrb[0].mxu0 %v1302
        %v2654 = vpop.f32.mrb[0].mxu0
        %v2655 = vadd.f32 %v2174, %v2654
        %v2656 = vpop.f32.mrb[0].mxu0
        %v2657 = vpop.f32.mrb[0].mxu0
        %v2658 = vadd.f32 %v2177, %v2657
        %v2659 = vpop.f32.mrb[0].mxu0
        %2660 = vmatprep.mubr.bf16.mxu0 %v1307
        %2661 = vmatmul.mubr.bf16.gmra.mrb[0].mxu0 %v1306
        %v2662 = vpop.f32.mrb[0].mxu0
        %v2663 = vadd.f32 %v2182, %v2662
        %v2664 = vpop.f32.mrb[0].mxu0
        %v2665 = vpop.f32.mrb[0].mxu0
        %v2666 = vadd.f32 %v2185, %v2665
        %v2667 = vpop.f32.mrb[0].mxu0
        %2668 = vmatprep.mubr.bf16.mxu0 %v1311
        %2669 = vmatmul.mubr.bf16.gmra.mrb[0].mxu0 %v1310
        %v2670 = vpop.f32.mrb[0].mxu0
        %v2671 = vadd.f32 %v2190, %v2670
        %v2672 = vpop.f32.mrb[0].mxu0
        %v2673 = vpop.f32.mrb[0].mxu0
        %v2674 = vadd.f32 %v2193, %v2673
        %v2675 = vpop.f32.mrb[0].mxu0
        %2676 = vmatprep.mubr.bf16.mxu0 %v1315
        %2677 = vmatmul.mubr.bf16.gmra.mrb[0].mxu0 %v1314
        %v2678 = vpop.f32.mrb[0].mxu0
        %v2679 = vadd.f32 %v2198, %v2678
        %v2680 = vpop.f32.mrb[0].mxu0
        %v2681 = vpop.f32.mrb[0].mxu0
        %v2682 = vadd.f32 %v2201, %v2681
        %v2683 = vpop.f32.mrb[0].mxu0
        %2684 = vmatprep.mubr.bf16.mxu0 %v1319
        %2685 = vmatmul.mubr.bf16.gmra.mrb[0].mxu0 %v1318
        %v2686 = vpop.f32.mrb[0].mxu0
        %v2687 = vadd.f32 %v2206, %v2686
        %v2688 = vpop.f32.mrb[0].mxu0
        %v2689 = vpop.f32.mrb[0].mxu0
        %v2690 = vadd.f32 %v2209, %v2689
        %v2691 = vpop.f32.mrb[0].mxu0
        %2692 = vmatprep.mubr.bf16.mxu0 %v1323
        %2693 = vmatmul.mubr.bf16.gmra.mrb[0].mxu0 %v1322
        %v2694 = vpop.f32.mrb[0].mxu0
        %v2695 = vadd.f32 %v2214, %v2694
        %v2696 = vpop.f32.mrb[0].mxu0
        %v2697 = vpop.f32.mrb[0].mxu0
        %v2698 = vadd.f32 %v2217, %v2697
        %v2699 = vpop.f32.mrb[0].mxu0
        %2700 = vmatprep.mubr.bf16.mxu0 %v1327
        %2701 = vmatmul.mubr.bf16.gmra.mrb[0].mxu0 %v1326
        %v2702 = vpop.f32.mrb[0].mxu0
        %v2703 = vadd.f32 %v2222, %v2702
        %v2704 = vpop.f32.mrb[0].mxu0
        %v2705 = vpop.f32.mrb[0].mxu0
        %v2706 = vadd.f32 %v2225, %v2705
        %v2707 = vpop.f32.mrb[0].mxu0
        %2708 = vdwg.mxu0
        %2709 = vmatprep.subr.bf16.mxu0 0
        %2710 = vmatpush1.bf16.msra.mxu0 %v2372
        %2711 = vmatprep.subr.bf16.mxu0 0
        %2712 = vmatpush1.bf16.msra.mxu0 %v2373
        %2713 = vmatprep.subr.bf16.mxu0 0
        %2714 = vmatpush1.bf16.msra.mxu0 %v2374
        %2715 = vmatprep.subr.bf16.mxu0 0
        %2716 = vmatpush1.bf16.msra.mxu0 %v2375
        %2717 = vmatprep.subr.bf16.mxu0 0
        %2718 = vmatpush1.bf16.msra.mxu0 %v2376
        %2719 = vmatprep.subr.bf16.mxu0 0
        %2720 = vmatpush1.bf16.msra.mxu0 %v2377
        %2721 = vmatprep.subr.bf16.mxu0 0
        %2722 = vmatpush1.bf16.msra.mxu0 %v2378
        %2723 = vmatprep.subr.bf16.mxu0 0
        %2724 = vmatpush1.bf16.msra.mxu0 %v2379
        %2725 = vmatprep.subr.bf16.mxu0 0
        %2726 = vmatpush1.bf16.msra.mxu0 %v2380
        %2727 = vmatprep.subr.bf16.mxu0 0
        %2728 = vmatpush1.bf16.msra.mxu0 %v2381
        %2729 = vmatprep.subr.bf16.mxu0 0
        %2730 = vmatpush1.bf16.msra.mxu0 %v2382
        %2731 = vmatprep.subr.bf16.mxu0 0
        %2732 = vmatpush1.bf16.msra.mxu0 %v2383
        %2733 = vmatprep.subr.bf16.mxu0 0
        %2734 = vmatpush1.bf16.msra.mxu0 %v2384
        %2735 = vmatprep.subr.bf16.mxu0 0
        %2736 = vmatpush1.bf16.msra.mxu0 %v2385
        %2737 = vmatprep.subr.bf16.mxu0 0
        %2738 = vmatpush1.bf16.msra.mxu0 %v2386
        %2739 = vmatprep.subr.bf16.mxu0 0
        %2740 = vmatpush1.bf16.msra.mxu0 %v2387
        %2741 = vmatprep.mubr.bf16.mxu0 %v1205
        %2742 = vmatmul.mubr.bf16.gmra.mrb[0].mxu0 %v1204
        %v2743 = vpop.f32.mrb[0].mxu0
        %v2744 = vadd.f32 %v2455, %v2743
        %v2745 = vpop.f32.mrb[0].mxu0
        %v2746 = vpop.f32.mrb[0].mxu0
        %v2747 = vadd.f32 %v2458, %v2746
        %v2748 = vpop.f32.mrb[0].mxu0
        %2749 = vmatprep.mubr.bf16.mxu0 %v1209
        %2750 = vmatmul.mubr.bf16.gmra.mrb[0].mxu0 %v1208
        %v2751 = vpop.f32.mrb[0].mxu0
        %v2752 = vadd.f32 %v2463, %v2751
        %v2753 = vpop.f32.mrb[0].mxu0
        %v2754 = vpop.f32.mrb[0].mxu0
        %v2755 = vadd.f32 %v2466, %v2754
        %v2756 = vpop.f32.mrb[0].mxu0
        %2757 = vmatprep.mubr.bf16.mxu0 %v1213
        %2758 = vmatmul.mubr.bf16.gmra.mrb[0].mxu0 %v1212
        %v2759 = vpop.f32.mrb[0].mxu0
        %v2760 = vadd.f32 %v2471, %v2759
        %v2761 = vpop.f32.mrb[0].mxu0
        %v2762 = vpop.f32.mrb[0].mxu0
        %v2763 = vadd.f32 %v2474, %v2762
        %v2764 = vpop.f32.mrb[0].mxu0
        %2765 = vmatprep.mubr.bf16.mxu0 %v1217
        %2766 = vmatmul.mubr.bf16.gmra.mrb[0].mxu0 %v1216
        %v2767 = vpop.f32.mrb[0].mxu0
        %v2768 = vadd.f32 %v2479, %v2767
        %v2769 = vpop.f32.mrb[0].mxu0
        %v2770 = vpop.f32.mrb[0].mxu0
        %v2771 = vadd.f32 %v2482, %v2770
        %v2772 = vpop.f32.mrb[0].mxu0
        %2773 = vmatprep.mubr.bf16.mxu0 %v1221
        %2774 = vmatmul.mubr.bf16.gmra.mrb[0].mxu0 %v1220
        %v2775 = vpop.f32.mrb[0].mxu0
        %v2776 = vadd.f32 %v2487, %v2775
        %v2777 = vpop.f32.mrb[0].mxu0
        %v2778 = vpop.f32.mrb[0].mxu0
        %v2779 = vadd.f32 %v2490, %v2778
        %v2780 = vpop.f32.mrb[0].mxu0
        %2781 = vmatprep.mubr.bf16.mxu0 %v1225
        %2782 = vmatmul.mubr.bf16.gmra.mrb[0].mxu0 %v1224
        %v2783 = vpop.f32.mrb[0].mxu0
        %v2784 = vadd.f32 %v2495, %v2783
        %v2785 = vpop.f32.mrb[0].mxu0
        %v2786 = vpop.f32.mrb[0].mxu0
        %v2787 = vadd.f32 %v2498, %v2786
        %v2788 = vpop.f32.mrb[0].mxu0
        %2789 = vmatprep.mubr.bf16.mxu0 %v1229
        %2790 = vmatmul.mubr.bf16.gmra.mrb[0].mxu0 %v1228
        %v2791 = vpop.f32.mrb[0].mxu0
        %v2792 = vadd.f32 %v2503, %v2791
        %v2793 = vpop.f32.mrb[0].mxu0
        %v2794 = vpop.f32.mrb[0].mxu0
        %v2795 = vadd.f32 %v2506, %v2794
        %v2796 = vpop.f32.mrb[0].mxu0
        %2797 = vmatprep.mubr.bf16.mxu0 %v1233
        %2798 = vmatmul.mubr.bf16.gmra.mrb[0].mxu0 %v1232
        %v2799 = vpop.f32.mrb[0].mxu0
        %v2800 = vadd.f32 %v2511, %v2799
        %v2801 = vpop.f32.mrb[0].mxu0
        %v2802 = vpop.f32.mrb[0].mxu0
        %v2803 = vadd.f32 %v2514, %v2802
        %v2804 = vpop.f32.mrb[0].mxu0
        %2805 = vmatprep.mubr.bf16.mxu0 %v1237
        %2806 = vmatmul.mubr.bf16.gmra.mrb[0].mxu0 %v1236
        %v2807 = vpop.f32.mrb[0].mxu0
        %v2808 = vadd.f32 %v2519, %v2807
        %v2809 = vpop.f32.mrb[0].mxu0
        %v2810 = vpop.f32.mrb[0].mxu0
        %v2811 = vadd.f32 %v2522, %v2810
        %v2812 = vpop.f32.mrb[0].mxu0
        %2813 = vmatprep.mubr.bf16.mxu0 %v1241
        %2814 = vmatmul.mubr.bf16.gmra.mrb[0].mxu0 %v1240
        %v2815 = vpop.f32.mrb[0].mxu0
        %v2816 = vadd.f32 %v2527, %v2815
        %v2817 = vpop.f32.mrb[0].mxu0
        %v2818 = vpop.f32.mrb[0].mxu0
        %v2819 = vadd.f32 %v2530, %v2818
        %v2820 = vpop.f32.mrb[0].mxu0
        %2821 = vmatprep.mubr.bf16.mxu0 %v1245
        %2822 = vmatmul.mubr.bf16.gmra.mrb[0].mxu0 %v1244
        %v2823 = vpop.f32.mrb[0].mxu0
        %v2824 = vadd.f32 %v2535, %v2823
        %v2825 = vpop.f32.mrb[0].mxu0
        %v2826 = vpop.f32.mrb[0].mxu0
        %v2827 = vadd.f32 %v2538, %v2826
        %v2828 = vpop.f32.mrb[0].mxu0
        %2829 = vmatprep.mubr.bf16.mxu0 %v1249
        %2830 = vmatmul.mubr.bf16.gmra.mrb[0].mxu0 %v1248
        %v2831 = vpop.f32.mrb[0].mxu0
        %v2832 = vadd.f32 %v2543, %v2831
        %v2833 = vpop.f32.mrb[0].mxu0
        %v2834 = vpop.f32.mrb[0].mxu0
        %v2835 = vadd.f32 %v2546, %v2834
        %v2836 = vpop.f32.mrb[0].mxu0
        %2837 = vmatprep.mubr.bf16.mxu0 %v1253
        %2838 = vmatmul.mubr.bf16.gmra.mrb[0].mxu0 %v1252
        %v2839 = vpop.f32.mrb[0].mxu0
        %v2840 = vadd.f32 %v2551, %v2839
        %v2841 = vpop.f32.mrb[0].mxu0
        %v2842 = vpop.f32.mrb[0].mxu0
        %v2843 = vadd.f32 %v2554, %v2842
        %v2844 = vpop.f32.mrb[0].mxu0
        %2845 = vmatprep.mubr.bf16.mxu0 %v1257
        %2846 = vmatmul.mubr.bf16.gmra.mrb[0].mxu0 %v1256
        %v2847 = vpop.f32.mrb[0].mxu0
        %v2848 = vadd.f32 %v2559, %v2847
        %v2849 = vpop.f32.mrb[0].mxu0
        %v2850 = vpop.f32.mrb[0].mxu0
        %v2851 = vadd.f32 %v2562, %v2850
        %v2852 = vpop.f32.mrb[0].mxu0
        %2853 = vmatprep.mubr.bf16.mxu0 %v1261
        %2854 = vmatmul.mubr.bf16.gmra.mrb[0].mxu0 %v1260
        %v2855 = vpop.f32.mrb[0].mxu0
        %v2856 = vadd.f32 %v2567, %v2855
        %v2857 = vpop.f32.mrb[0].mxu0
        %v2858 = vpop.f32.mrb[0].mxu0
        %v2859 = vadd.f32 %v2570, %v2858
        %v2860 = vpop.f32.mrb[0].mxu0
        %2861 = vmatprep.mubr.bf16.mxu0 %v1265
        %2862 = vmatmul.mubr.bf16.gmra.mrb[0].mxu0 %v1264
        %v2863 = vpop.f32.mrb[0].mxu0
        %v2864 = vadd.f32 %v2575, %v2863
        %v2865 = vpop.f32.mrb[0].mxu0
        %v2866 = vpop.f32.mrb[0].mxu0
        %v2867 = vadd.f32 %v2578, %v2866
        %v2868 = vpop.f32.mrb[0].mxu0
        %2869 = vmatprep.mubr.bf16.mxu0 %v1269
        %2870 = vmatmul.mubr.bf16.gmra.mrb[0].mxu0 %v1268
        %v2871 = vpop.f32.mrb[0].mxu0
        %v2872 = vadd.f32 %v2583, %v2871
        %v2873 = vpop.f32.mrb[0].mxu0
        %v2874 = vpop.f32.mrb[0].mxu0
        %v2875 = vadd.f32 %v2586, %v2874
        %v2876 = vpop.f32.mrb[0].mxu0
        %2877 = vmatprep.mubr.bf16.mxu0 %v1273
        %2878 = vmatmul.mubr.bf16.gmra.mrb[0].mxu0 %v1272
        %v2879 = vpop.f32.mrb[0].mxu0
        %v2880 = vadd.f32 %v2591, %v2879
        %v2881 = vpop.f32.mrb[0].mxu0
        %v2882 = vpop.f32.mrb[0].mxu0
        %v2883 = vadd.f32 %v2594, %v2882
        %v2884 = vpop.f32.mrb[0].mxu0
        %2885 = vmatprep.mubr.bf16.mxu0 %v1277
        %2886 = vmatmul.mubr.bf16.gmra.mrb[0].mxu0 %v1276
        %v2887 = vpop.f32.mrb[0].mxu0
        %v2888 = vadd.f32 %v2599, %v2887
        %v2889 = vpop.f32.mrb[0].mxu0
        %v2890 = vpop.f32.mrb[0].mxu0
        %v2891 = vadd.f32 %v2602, %v2890
        %v2892 = vpop.f32.mrb[0].mxu0
        %2893 = vmatprep.mubr.bf16.mxu0 %v1281
        %2894 = vmatmul.mubr.bf16.gmra.mrb[0].mxu0 %v1280
        %v2895 = vpop.f32.mrb[0].mxu0
        %v2896 = vadd.f32 %v2607, %v2895
        %v2897 = vpop.f32.mrb[0].mxu0
        %v2898 = vpop.f32.mrb[0].mxu0
        %v2899 = vadd.f32 %v2610, %v2898
        %v2900 = vpop.f32.mrb[0].mxu0
        %2901 = vmatprep.mubr.bf16.mxu0 %v1285
        %2902 = vmatmul.mubr.bf16.gmra.mrb[0].mxu0 %v1284
        %v2903 = vpop.f32.mrb[0].mxu0
        %v2904 = vadd.f32 %v2615, %v2903
        %v2905 = vpop.f32.mrb[0].mxu0
        %v2906 = vpop.f32.mrb[0].mxu0
        %v2907 = vadd.f32 %v2618, %v2906
        %v2908 = vpop.f32.mrb[0].mxu0
        %2909 = vmatprep.mubr.bf16.mxu0 %v1289
        %2910 = vmatmul.mubr.bf16.gmra.mrb[0].mxu0 %v1288
        %v2911 = vpop.f32.mrb[0].mxu0
        %v2912 = vadd.f32 %v2623, %v2911
        %v2913 = vpop.f32.mrb[0].mxu0
        %v2914 = vpop.f32.mrb[0].mxu0
        %v2915 = vadd.f32 %v2626, %v2914
        %v2916 = vpop.f32.mrb[0].mxu0
        %2917 = vmatprep.mubr.bf16.mxu0 %v1293
        %2918 = vmatmul.mubr.bf16.gmra.mrb[0].mxu0 %v1292
        %v2919 = vpop.f32.mrb[0].mxu0
        %v2920 = vadd.f32 %v2631, %v2919
        %v2921 = vpop.f32.mrb[0].mxu0
        %v2922 = vpop.f32.mrb[0].mxu0
        %v2923 = vadd.f32 %v2634, %v2922
        %v2924 = vpop.f32.mrb[0].mxu0
        %2925 = vmatprep.mubr.bf16.mxu0 %v1297
        %2926 = vmatmul.mubr.bf16.gmra.mrb[0].mxu0 %v1296
        %v2927 = vpop.f32.mrb[0].mxu0
        %v2928 = vadd.f32 %v2639, %v2927
        %v2929 = vpop.f32.mrb[0].mxu0
        %v2930 = vpop.f32.mrb[0].mxu0
        %v2931 = vadd.f32 %v2642, %v2930
        %v2932 = vpop.f32.mrb[0].mxu0
        %2933 = vmatprep.mubr.bf16.mxu0 %v1301
        %2934 = vmatmul.mubr.bf16.gmra.mrb[0].mxu0 %v1300
        %v2935 = vpop.f32.mrb[0].mxu0
        %v2936 = vadd.f32 %v2647, %v2935
        %v2937 = vpop.f32.mrb[0].mxu0
        %v2938 = vpop.f32.mrb[0].mxu0
        %v2939 = vadd.f32 %v2650, %v2938
        %v2940 = vpop.f32.mrb[0].mxu0
        %2941 = vmatprep.mubr.bf16.mxu0 %v1305
        %2942 = vmatmul.mubr.bf16.gmra.mrb[0].mxu0 %v1304
        %v2943 = vpop.f32.mrb[0].mxu0
        %v2944 = vadd.f32 %v2655, %v2943
        %v2945 = vpop.f32.mrb[0].mxu0
        %v2946 = vpop.f32.mrb[0].mxu0
        %v2947 = vadd.f32 %v2658, %v2946
        %v2948 = vpop.f32.mrb[0].mxu0
        %2949 = vmatprep.mubr.bf16.mxu0 %v1309
        %2950 = vmatmul.mubr.bf16.gmra.mrb[0].mxu0 %v1308
        %v2951 = vpop.f32.mrb[0].mxu0
        %v2952 = vadd.f32 %v2663, %v2951
        %v2953 = vpop.f32.mrb[0].mxu0
        %v2954 = vpop.f32.mrb[0].mxu0
        %v2955 = vadd.f32 %v2666, %v2954
        %v2956 = vpop.f32.mrb[0].mxu0
        %2957 = vmatprep.mubr.bf16.mxu0 %v1313
        %2958 = vmatmul.mubr.bf16.gmra.mrb[0].mxu0 %v1312
        %v2959 = vpop.f32.mrb[0].mxu0
        %v2960 = vadd.f32 %v2671, %v2959
        %v2961 = vpop.f32.mrb[0].mxu0
        %v2962 = vpop.f32.mrb[0].mxu0
        %v2963 = vadd.f32 %v2674, %v2962
        %v2964 = vpop.f32.mrb[0].mxu0
        %2965 = vmatprep.mubr.bf16.mxu0 %v1317
        %2966 = vmatmul.mubr.bf16.gmra.mrb[0].mxu0 %v1316
        %v2967 = vpop.f32.mrb[0].mxu0
        %v2968 = vadd.f32 %v2679, %v2967
        %v2969 = vpop.f32.mrb[0].mxu0
        %v2970 = vpop.f32.mrb[0].mxu0
        %v2971 = vadd.f32 %v2682, %v2970
        %v2972 = vpop.f32.mrb[0].mxu0
        %2973 = vmatprep.mubr.bf16.mxu0 %v1321
        %2974 = vmatmul.mubr.bf16.gmra.mrb[0].mxu0 %v1320
        %v2975 = vpop.f32.mrb[0].mxu0
        %v2976 = vadd.f32 %v2687, %v2975
        %v2977 = vpop.f32.mrb[0].mxu0
        %v2978 = vpop.f32.mrb[0].mxu0
        %v2979 = vadd.f32 %v2690, %v2978
        %v2980 = vpop.f32.mrb[0].mxu0
        %2981 = vmatprep.mubr.bf16.mxu0 %v1325
        %2982 = vmatmul.mubr.bf16.gmra.mrb[0].mxu0 %v1324
        %v2983 = vpop.f32.mrb[0].mxu0
        %v2984 = vadd.f32 %v2695, %v2983
        %v2985 = vpop.f32.mrb[0].mxu0
        %v2986 = vpop.f32.mrb[0].mxu0
        %v2987 = vadd.f32 %v2698, %v2986
        %v2988 = vpop.f32.mrb[0].mxu0
        %2989 = vmatprep.mubr.bf16.mxu0 %v1329
        %2990 = vmatmul.mubr.bf16.gmra.mrb[0].mxu0 %v1328
        %v2991 = vpop.f32.mrb[0].mxu0
        %v2992 = vadd.f32 %v2703, %v2991
        %v2993 = vpop.f32.mrb[0].mxu0
        %v2994 = vpop.f32.mrb[0].mxu0
        %v2995 = vadd.f32 %v2706, %v2994
        %v2996 = vpop.f32.mrb[0].mxu0
        %2997 = vdwg.mxu0
        %2998 = vst [vmem:[%s164] sm:$0xff] %v2744
        %2999 = vst [vmem:[%s164 + $0x8] sm:$0xff] %v2747
        %3000 = vst [vmem:[%s164 + $0x10] sm:$0xff] %v2752
        %3001 = vst [vmem:[%s164 + $0x18] sm:$0xff] %v2755
        %3002 = vst [vmem:[%s164 + $0x20] sm:$0xff] %v2760
        %3003 = vst [vmem:[%s164 + $0x28] sm:$0xff] %v2763
        %3004 = vst [vmem:[%s164 + $0x30] sm:$0xff] %v2768
        %3005 = vst [vmem:[%s164 + $0x38] sm:$0xff] %v2771
        %3006 = vst [vmem:[%s164 + $0x40] sm:$0xff] %v2776
        %3007 = vst [vmem:[%s164 + $0x48] sm:$0xff] %v2779
        %3008 = vst [vmem:[%s164 + $0x50] sm:$0xff] %v2784
        %3009 = vst [vmem:[%s164 + $0x58] sm:$0xff] %v2787
        %3010 = vst [vmem:[%s164 + $0x60] sm:$0xff] %v2792
        %3011 = vst [vmem:[%s164 + $0x68] sm:$0xff] %v2795
        %3012 = vst [vmem:[%s164 + $0x70] sm:$0xff] %v2800
        %3013 = vst [vmem:[%s164 + $0x78] sm:$0xff] %v2803
        %3014 = vst [vmem:[%s164 + $0x80] sm:$0xff] %v2808
        %3015 = vst [vmem:[%s164 + $0x88] sm:$0xff] %v2811
        %3016 = vst [vmem:[%s164 + $0x90] sm:$0xff] %v2816
        %3017 = vst [vmem:[%s164 + $0x98] sm:$0xff] %v2819
        %3018 = vst [vmem:[%s164 + $0xa0] sm:$0xff] %v2824
        %3019 = vst [vmem:[%s164 + $0xa8] sm:$0xff] %v2827
        %3020 = vst [vmem:[%s164 + $0xb0] sm:$0xff] %v2832
        %3021 = vst [vmem:[%s164 + $0xb8] sm:$0xff] %v2835
        %3022 = vst [vmem:[%s164 + $0xc0] sm:$0xff] %v2840
        %3023 = vst [vmem:[%s164 + $0xc8] sm:$0xff] %v2843
        %3024 = vst [vmem:[%s164 + $0xd0] sm:$0xff] %v2848
        %3025 = vst [vmem:[%s164 + $0xd8] sm:$0xff] %v2851
        %3026 = vst [vmem:[%s164 + $0xe0] sm:$0xff] %v2856
        %3027 = vst [vmem:[%s164 + $0xe8] sm:$0xff] %v2859
        %3028 = vst [vmem:[%s164 + $0xf0] sm:$0xff] %v2864
        %3029 = vst [vmem:[%s164 + $0xf8] sm:$0xff] %v2867
        %3030 = vst [vmem:[%s164 + $0x100] sm:$0xff] %v2872
        %3031 = vst [vmem:[%s164 + $0x108] sm:$0xff] %v2875
        %3032 = vst [vmem:[%s164 + $0x110] sm:$0xff] %v2880
        %3033 = vst [vmem:[%s164 + $0x118] sm:$0xff] %v2883
        %3034 = vst [vmem:[%s164 + $0x120] sm:$0xff] %v2888
        %3035 = vst [vmem:[%s164 + $0x128] sm:$0xff] %v2891
        %3036 = vst [vmem:[%s164 + $0x130] sm:$0xff] %v2896
        %3037 = vst [vmem:[%s164 + $0x138] sm:$0xff] %v2899
        %3038 = vst [vmem:[%s164 + $0x140] sm:$0xff] %v2904
        %3039 = vst [vmem:[%s164 + $0x148] sm:$0xff] %v2907
        %3040 = vst [vmem:[%s164 + $0x150] sm:$0xff] %v2912
        %3041 = vst [vmem:[%s164 + $0x158] sm:$0xff] %v2915
        %3042 = vst [vmem:[%s164 + $0x160] sm:$0xff] %v2920
        %3043 = vst [vmem:[%s164 + $0x168] sm:$0xff] %v2923
        %3044 = vst [vmem:[%s164 + $0x170] sm:$0xff] %v2928
        %3045 = vst [vmem:[%s164 + $0x178] sm:$0xff] %v2931
        %3046 = vst [vmem:[%s164 + $0x180] sm:$0xff] %v2936
        %3047 = vst [vmem:[%s164 + $0x188] sm:$0xff] %v2939
        %3048 = vst [vmem:[%s164 + $0x190] sm:$0xff] %v2944
        %3049 = vst [vmem:[%s164 + $0x198] sm:$0xff] %v2947
        %3050 = vst [vmem:[%s164 + $0x1a0] sm:$0xff] %v2952
        %3051 = vst [vmem:[%s164 + $0x1a8] sm:$0xff] %v2955
        %3052 = vst [vmem:[%s164 + $0x1b0] sm:$0xff] %v2960
        %3053 = vst [vmem:[%s164 + $0x1b8] sm:$0xff] %v2963
        %3054 = vst [vmem:[%s164 + $0x1c0] sm:$0xff] %v2968
        %3055 = vst [vmem:[%s164 + $0x1c8] sm:$0xff] %v2971
        %3056 = vst [vmem:[%s164 + $0x1d0] sm:$0xff] %v2976
        %3057 = vst [vmem:[%s164 + $0x1d8] sm:$0xff] %v2979
        %3058 = vst [vmem:[%s164 + $0x1e0] sm:$0xff] %v2984
        %3059 = vst [vmem:[%s164 + $0x1e8] sm:$0xff] %v2987
        %3060 = vst [vmem:[%s164 + $0x1f0] sm:$0xff] %v2992
        %3061 = vst [vmem:[%s164 + $0x1f8] sm:$0xff] %v2995
        %s3062 = sand.u32 %s93, 1
        %s3063 = scalar_lea.sflag [#allocation3], %s3062
        %s3064 = sand.u32 %s93, 1
        %s3065 = smul.addr %s3064, 512
        %s3066 = scalar_lea.vmem [#allocation2], %s3065
        // Predicated region
        $region33: #{tpu_custom_call.1} parent=31 // pred_check
          %p3067 = pneg %p103
        $region34: #{tpu_custom_call.1} parent=31 // pred_check_branch
          %3069 = sbr.rel (%p3067) target = $region36
        $region35: #{tpu_custom_call.1} parent=31 // pred_region
          %s3070 = smul.u32 64, %s17
          %s3072 = ssub.s32 8192, 8192
          %3073 = vsyncadd %s3063, %s3072
          %s3074 = smul.addr %s3070, 128
          %s3075 = scalar_lea.hbm %s3, %s3074
          %s3076 = sshll.u32 %s3066, 4
          %s3077 = int_to_ptr.vmem [resolvable:$true] %s3076
          %3082 = dma.vmem_to_hbm [thread:$0]  %s3077, 8192, %s3075, %s3063, 128, 128, 8
        $region36: #{tpu_custom_call.1} parent=31 // pred_fallthru
          _
      $region32: #{tpu_custom_call.1} parent=5 // pred_fallthru
        _
      %p3083 = scmp.le.s32.totalorder 2, %s12
      // Predicated region
      $region37: #{tpu_custom_call.1} parent=5 // pred_check
        %p3084 = pneg %p3083
      $region38: #{tpu_custom_call.1} parent=5 // pred_check_branch
        %3086 = sbr.rel (%p3084) target = $region40
      $region39: #{tpu_custom_call.1} parent=5 // pred_region
        %s3087 = ssub.s32 %s12, 2
        // Predicated region
        $region41: #{tpu_custom_call.1} parent=39 // pred_check
          %p3088 = pneg %p109
        $region42: #{tpu_custom_call.1} parent=39 // pred_check_branch
          %3090 = sbr.rel (%p3088) target = $region44
        $region43: #{tpu_custom_call.1} parent=39 // pred_region
          %s3091 = sand.u32 %s94, 1
          %s3092 = scalar_lea.sflag [#allocation3], %s3091
          %s3093 = sand.u32 %s94, 1
          %s3094 = smul.addr %s3093, 512
          %s3095 = scalar_lea.vmem [#allocation2], %s3094
          %3096 = dma.done %s3092, 8192
        $region44: #{tpu_custom_call.1} parent=39 // pred_fallthru
          _
      $region40: #{tpu_custom_call.1} parent=5 // pred_fallthru
        _
    $region6: #{tpu_custom_call.1} parent=1 // loop_footer
      %s16 = sadd.s32 1, %s12
    $region7: #{tpu_custom_call.1} parent=1 // loop_footer_branch
      %11 = sbr.rel target = $region3
    $region8: #{tpu_custom_call.1} parent=1 // loop_exit
      _
    %3097 = vsyncpa [#allocation3], 1
    %s3098 = scalar_lea.sflag [#allocation3], 1
    %3099 = vsyncpa %s3098, 1

</llo_original>
